<compile_context>
chip_gen: v7x
topology: tpu7x:2x2x1
jax: 0.10.0
libtpu: 0.0.40
codegen_flags: <defaults>
</compile_context>

<pallas_src>
import functools

import jax
import jax.numpy as jnp
from jax.experimental import pallas as pl
from jax.experimental.pallas import tpu as pltpu

PAD_ID = 0
EPS = 1e-5
N_HEAD = 2
NEG_BIAS = -1e9

# rows of the packed (9, D) f32 small-parameter slab
_VEC_ROWS = ['ln1_g', 'ln1_b', 'bo', 'ln2_g', 'ln2_b', 'b2', 'lnf_g', 'lnf_b', 'v_head']


def _layernorm(v, g, b):
    mu = jnp.mean(v, axis=-1, keepdims=True)
    var = jnp.mean((v - mu) ** 2, axis=-1, keepdims=True)
    return (v - mu) * jax.lax.rsqrt(var + EPS) * g + b


def _reward_kernel(x_ref,        # VMEM (BT, S, D)  bf16  embedded tokens
                   kb_ref,       # VMEM (BT, 1, S)  f32   additive key bias ((mask-1)*1e9)
                   wqkv_ref,     # (D, 3D) bf16, head-major [h0_q|h0_k|h0_v|h1_q|...]
                   bqkv_ref,     # (1, 3D) f32, same layout
                   wo_ref,       # (D, D)  bf16
                   w1_ref,       # (D, 4D) bf16
                   b1_ref,       # (1, 4D) f32
                   w2_ref,       # (4D, D) bf16
                   vecs_ref,     # (9, D)  f32 packed: ln1_g,ln1_b,bo,ln2_g,ln2_b,b2,lnf_g,lnf_b,v_head
                   rewards_ref,  # out VMEM (BT, 1, S) f32
                   attn_ref,     # scratch VMEM (BT*S, D) f32  preallocated attn-output buffer
                   *, n_head):
    BT, S, D = x_ref.shape
    hd = D // n_head
    rows = BT * S
    f32, bf16 = jnp.float32, jnp.bfloat16

    vecs = vecs_ref[...]                                   # (9, D) tiny, load once
    ln1_g, ln1_b = vecs[0:1], vecs[1:2]
    bo = vecs[2:3]
    ln2_g, ln2_b = vecs[3:4], vecs[4:5]
    b2 = vecs[5:6]
    lnf_g, lnf_b = vecs[6:7], vecs[7:8]
    vhead = vecs[8:9]

    def bdot(a, w_ref):
        # bf16 MXU operands, f32 accumulation.
        return jnp.dot(a.astype(bf16), w_ref[...], preferred_element_type=f32)

    # bf16 DMA'd activations; f32 for LN statistics and residual stream.
    x = x_ref[...].astype(f32).reshape(rows, D)

    # ---- causal multi-head self-attention (online softmax over kv chunks) ----
    xn = _layernorm(x, ln1_g, ln1_b)
    qkv = bdot(xn, wqkv_ref) + bqkv_ref[...]               # (rows, 3D), head-major layout
    kb = kb_ref[...]                                       # (BT, 1, S) additive key bias

    scale = 1.0 / (hd ** 0.5)
    kv_chunk = max(1, min(S, 512))
    chunk_starts = list(range(0, S, kv_chunk))

    # per-chunk additive causal bias (no (BT,S,S) boolean mask), shared across heads
    cbias = []
    for k0 in chunk_starts:
        ke = min(S, k0 + kv_chunk)
        ri = jax.lax.broadcasted_iota(jnp.int32, (S, ke - k0), 0)
        ci = jax.lax.broadcasted_iota(jnp.int32, (S, ke - k0), 1) + k0
        cbias.append(jnp.where(ri >= ci, 0.0, NEG_BIAS).astype(f32)[None])   # (1,S,chunk)

    for h in range(n_head):                                # static, small head count
        base = h * 3 * hd                                  # contiguous per-head block
        q = qkv[:, base:base + hd].reshape(BT, S, hd).astype(bf16)
        k = qkv[:, base + hd:base + 2 * hd].reshape(BT, S, hd)
        v = qkv[:, base + 2 * hd:base + 3 * hd].reshape(BT, S, hd)

        m_i = jnp.full((BT, S, 1), -jnp.inf, f32)
        l_i = jnp.zeros((BT, S, 1), f32)
        acc = jnp.zeros((BT, S, hd), f32)
        for c_idx, k0 in enumerate(chunk_starts):
            ke = min(S, k0 + kv_chunk)
            kc = k[:, k0:ke].astype(bf16)
            vc = v[:, k0:ke].astype(bf16)
            s = jnp.einsum('bqd,bkd->bqk', q, kc,
                           preferred_element_type=f32) * scale
            s = s + cbias[c_idx] + kb[:, :, k0:ke]         # additive causal + key bias
            m_new = jnp.maximum(m_i, jnp.max(s, axis=-1, keepdims=True))
            alpha = jnp.exp(m_i - m_new)
            p = jnp.exp(s - m_new)
            l_i = alpha * l_i + jnp.sum(p, axis=-1, keepdims=True)
            acc = alpha * acc + jnp.einsum('bqk,bkd->bqd', p.astype(bf16), vc,
                                           preferred_element_type=f32)
            m_i = m_new
        o_h = acc * pl.reciprocal(l_i, approx=True)        # deferred softmax norm (EUP)
        attn_ref[:, h * hd:(h + 1) * hd] = o_h.reshape(rows, hd)   # no concatenate

    x = x + bdot(attn_ref[...], wo_ref) + bo               # one full-K output projection

    # ---- row-tiled MLP (tanh-approx GELU) fused with final LN + v_head ----
    mlp_batches = max(1, min(BT, 512 // max(S, 1)))        # rows per block ~<= 512
    while BT % mlp_batches:
        mlp_batches -= 1
    c = 0.7978845608028654
    for b0 in range(0, BT, mlp_batches):
        r0 = b0 * S
        xc = x[r0:r0 + mlp_batches * S]
        xn2 = _layernorm(xc, ln2_g, ln2_b)
        h1 = bdot(xn2, w1_ref) + b1_ref[...]
        h1 = 0.5 * h1 * (1.0 + jnp.tanh(c * (h1 + 0.044715 * h1 * h1 * h1)))
        yc = xc + bdot(h1, w2_ref) + b2
        hs = _layernorm(yc, lnf_g, lnf_b).reshape(mlp_batches, S, D)
        rewards_ref[b0:b0 + mlp_batches, 0, :] = jnp.sum(hs * vhead[None], axis=-1)


def init_params(key, vocab, seq_len, d_model):
    ks = jax.random.split(key, 8)
    s = 0.02
    return {
        'wte': jax.random.normal(ks[0], (vocab, d_model), jnp.float32) * s,
        'wpe': jax.random.normal(ks[1], (seq_len, d_model), jnp.float32) * s,
        'ln1_g': jnp.ones((1, d_model), jnp.float32),
        'ln1_b': jnp.zeros((1, d_model), jnp.float32),
        'wqkv': jax.random.normal(ks[2], (d_model, 3 * d_model), jnp.float32) * s,
        'bqkv': jnp.zeros((1, 3 * d_model), jnp.float32),
        'wo': jax.random.normal(ks[3], (d_model, d_model), jnp.float32) * s,
        'bo': jnp.zeros((1, d_model), jnp.float32),
        'ln2_g': jnp.ones((1, d_model), jnp.float32),
        'ln2_b': jnp.zeros((1, d_model), jnp.float32),
        'w1': jax.random.normal(ks[4], (d_model, 4 * d_model), jnp.float32) * s,
        'b1': jnp.zeros((1, 4 * d_model), jnp.float32),
        'w2': jax.random.normal(ks[5], (4 * d_model, d_model), jnp.float32) * s,
        'b2': jnp.zeros((1, d_model), jnp.float32),
        'lnf_g': jnp.ones((1, d_model), jnp.float32),
        'lnf_b': jnp.zeros((1, d_model), jnp.float32),
        'v_head': jax.random.normal(ks[6], (1, d_model), jnp.float32) * s,
    }


def _chip_config():
    """Generation-aware VMEM budget / tile targets / core count."""
    try:
        kind = jax.devices()[0].device_kind.lower()
    except Exception:
        kind = ""
    if "v5 lite" in kind or "v5e" in kind or "v5litepod" in kind:
        return dict(vmem_limit=80 * 1024 * 1024, target_rows=512, num_cores=1)
    if "v6" in kind or "trillium" in kind:
        return dict(vmem_limit=80 * 1024 * 1024, target_rows=512, num_cores=1)
    if "v7" in kind or "tpu7" in kind:
        # only 64 MiB physical VMEM; smaller budget/bt, 2 TensorCores to feed
        return dict(vmem_limit=40 * 1024 * 1024, target_rows=256, num_cores=2)
    return dict(vmem_limit=32 * 1024 * 1024, target_rows=256, num_cores=1)


def _pick_batch_tile(bs, seq_len, target_rows, num_cores):
    bt = max(1, min(bs, target_rows // max(seq_len, 1)))
    if num_cores > 1 and bs >= num_cores:
        bt = min(bt, max(1, bs // num_cores))   # guarantee >= num_cores grid steps
    return bt


def _scores_from_rewards(rewards, input_ids, S):
    # torch: c_ind = first PAD index (else seq_len); score = rewards[i, c_ind - 1]
    # (negative index wraps to the last token when c_ind == 0).
    is_pad = (input_ids == PAD_ID)
    first = jnp.where(is_pad.any(-1), jnp.argmax(is_pad, -1), S)
    target = jnp.mod(first - 1 + S, S)
    bs = rewards.shape[0]
    return rewards[jnp.arange(bs), target]


def gpt_reward_forward(params, input_ids, attention_mask=None, position_ids=None):
    """Returns scores[bs]: reward at the token preceding the first PAD token."""
    bs, S = input_ids.shape
    D = params['wte'].shape[1]
    hd = D // N_HEAD
    cfg = _chip_config()

    if attention_mask is None:
        attention_mask = jnp.ones((bs, S), jnp.float32)
    if position_ids is None:
        position_ids = jnp.broadcast_to(jnp.arange(S), (bs, S))

    # glue: embedding lookups (gather) stay in plain JAX; activations DMA'd as bf16.
    x = (params['wte'][input_ids] + params['wpe'][position_ids]).astype(jnp.bfloat16)
    key_bias = ((attention_mask.astype(jnp.float32) - 1.0) * (-NEG_BIAS * -1.0)
                ).reshape(bs, 1, S)  # (mask-1)*1e9 -> 0 where visible, -1e9 where PAD
    key_bias = ((attention_mask.astype(jnp.float32) - 1.0) * 1e9).reshape(bs, 1, S)

    bt = _pick_batch_tile(bs, S, cfg['target_rows'], cfg['num_cores'])
    bs_pad = ((bs + bt - 1) // bt) * bt                    # pad batch instead of shrinking bt
    if bs_pad != bs:
        x = jnp.pad(x, ((0, bs_pad - bs), (0, 0), (0, 0)))
        key_bias = jnp.pad(key_bias, ((0, bs_pad - bs), (0, 0), (0, 0)))

    # Weight-side reorganisation (would be hoisted to weight-load time in a real model):
    #   head-major QKV layout so per-head slices are contiguous/aligned in the kernel,
    #   bf16 cast of MXU operands, and packing of the small (1,D) f32 vectors.
    wq, wk, wv = (params['wqkv'][:, :D], params['wqkv'][:, D:2 * D], params['wqkv'][:, 2 * D:])
    bq, bk, bv = (params['bqkv'][:, :D], params['bqkv'][:, D:2 * D], params['bqkv'][:, 2 * D:])
    wqkv_hm = jnp.concatenate(
        [jnp.concatenate([wq[:, h * hd:(h + 1) * hd],
                          wk[:, h * hd:(h + 1) * hd],
                          wv[:, h * hd:(h + 1) * hd]], axis=1) for h in range(N_HEAD)],
        axis=1).astype(jnp.bfloat16)
    bqkv_hm = jnp.concatenate(
        [jnp.concatenate([bq[:, h * hd:(h + 1) * hd],
                          bk[:, h * hd:(h + 1) * hd],
                          bv[:, h * hd:(h + 1) * hd]], axis=1) for h in range(N_HEAD)],
        axis=1).astype(jnp.float32)
    vecs = jnp.concatenate([params[n] for n in _VEC_ROWS], axis=0).astype(jnp.float32)  # (9, D)
    wo = params['wo'].astype(jnp.bfloat16)
    w1 = params['w1'].astype(jnp.bfloat16)
    b1 = params['b1'].astype(jnp.float32)
    w2 = params['w2'].astype(jnp.bfloat16)
    weights = (wqkv_hm, bqkv_hm, wo, w1, b1, w2, vecs)

    kernel = functools.partial(_reward_kernel, n_head=N_HEAD)

    def _run(single_buffer_weights):
        def wspec(arr):
            nd = arr.ndim
            kwargs = {}
            if single_buffer_weights:
                # grid-invariant weights: single-buffer -> halves their VMEM footprint
                kwargs['pipeline_mode'] = pl.Buffered(1)
            return pl.BlockSpec(arr.shape, lambda i, _n=nd: (0,) * _n, **kwargs)

        in_specs = [
            pl.BlockSpec((bt, S, D), lambda i: (i, 0, 0)),   # embedded tokens (bf16)
            pl.BlockSpec((bt, 1, S), lambda i: (i, 0, 0)),   # additive key bias (f32)
        ] + [wspec(w) for w in weights]

        return pl.pallas_call(
            kernel,
            out_shape=jax.ShapeDtypeStruct((bs_pad, 1, S), jnp.float32),
            grid_spec=pltpu.PrefetchScalarGridSpec(
                num_scalar_prefetch=0,
                grid=(bs_pad // bt,),
                in_specs=in_specs,
                out_specs=pl.BlockSpec((bt, 1, S), lambda i: (i, 0, 0)),
                scratch_shapes=[pltpu.VMEM((bt * S, D), jnp.float32)],  # attn buffer
            ),
            compiler_params=pltpu.CompilerParams(
                dimension_semantics=("parallel",),          # shard batch across TCs
                vmem_limit_bytes=cfg['vmem_limit'],         # generation-aware budget
            ),
        )(x, key_bias, *weights)

    try:
        rewards = _run(True)
    except Exception:
        # TODO(synk): Pallas build without per-BlockSpec pipeline_mode support;
        # fall back to default (double-buffered) grid-invariant weights.
        rewards = _run(False)

    rewards = rewards[:bs, 0, :]                            # drop padded rows -> (bs, S)
    return _scores_from_rewards(rewards, input_ids, S)


def _ref_forward(params, input_ids, attention_mask):
    """Pure-JAX reference with matching math (bf16 operands, f32 accum, additive mask)."""
    bs, S = input_ids.shape
    D = params['wte'].shape[1]
    hd = D // N_HEAD
    bf16, f32 = jnp.bfloat16, jnp.float32

    def bdot(a, w):
        return jnp.dot(a.astype(bf16), w.astype(bf16), preferred_element_type=f32)

    x = (params['wte'][input_ids] + params['wpe'][jnp.arange(S)][None])
    x = x.astype(bf16).astype(f32).reshape(bs * S, D)       # mirror bf16 activation DMA
    xn = _layernorm(x, params['ln1_g'], params['ln1_b'])
    qkv = (bdot(xn, params['wqkv']) + params['bqkv']).reshape(bs, S, 3 * D)
    causal_bias = jnp.where(jnp.arange(S)[:, None] >= jnp.arange(S)[None, :],
                            0.0, NEG_BIAS).astype(f32)[None]
    key_bias = ((attention_mask.astype(f32) - 1.0) * 1e9)[:, None, :]
    scale = 1.0 / (hd ** 0.5)
    heads = []
    for h in range(N_HEAD):
        q = qkv[:, :, h * hd:(h + 1) * hd]
        k = qkv[:, :, D + h * hd:D + (h + 1) * hd]
        v = qkv[:, :, 2 * D + h * hd:2 * D + (h + 1) * hd]
        s = jnp.einsum('bqd,bkd->bqk', q.astype(bf16), k.astype(bf16),
                       preferred_element_type=f32) * scale
        s = s + causal_bias + key_bias
        p = jnp.exp(s - s.max(-1, keepdims=True))
        o = jnp.einsum('bqk,bkd->bqd', p.astype(bf16), v.astype(bf16),
                       preferred_element_type=f32)
        heads.append(o / p.sum(-1, keepdims=True))
    attn = jnp.concatenate(heads, axis=-1).reshape(bs * S, D)
    x = x + bdot(attn, params['wo']) + params['bo']
    xn2 = _layernorm(x, params['ln2_g'], params['ln2_b'])
    h1 = bdot(xn2, params['w1']) + params['b1']
    c = 0.7978845608028654
    h1 = 0.5 * h1 * (1.0 + jnp.tanh(c * (h1 + 0.044715 * h1 * h1 * h1)))
    x = x + bdot(h1, params['w2']) + params['b2']
    hs = _layernorm(x, params['lnf_g'], params['lnf_b']).reshape(bs, S, D)
    rewards = jnp.sum(hs * params['v_head'][None], axis=-1)
    return _scores_from_rewards(rewards, input_ids, S)


if __name__ == "__main__":
    key = jax.random.PRNGKey(0)
    bs, S, D, vocab = 2, 8, 32, 64
    pkey, ikey = jax.random.split(key)
    params = init_params(pkey, vocab, S, D)

    input_ids = jax.random.randint(ikey, (bs, S), 1, vocab, dtype=jnp.int32)
    input_ids = input_ids.at[1, 5:].set(PAD_ID)            # batch 1 has trailing PAD tokens
    attention_mask = (input_ids != PAD_ID).astype(jnp.float32)

    scores = gpt_reward_forward(params, input_ids, attention_mask)
    scores = jax.block_until_ready(scores)

    ref = _ref_forward(params, input_ids, attention_mask)
    assert scores.shape == (bs,)
    assert jnp.allclose(scores, ref, atol=1e-2, rtol=1e-2), (scores, ref)
    print("KERNEL_OK")
</pallas_src>

<mosaic_0001>
module attributes {stable_mosaic.version = 11 : i64} {
  func.func @_reward_kernel(%arg0: i32, %arg1: memref<2x8x32xbf16, #tpu.memory_space<vmem>>, %arg2: memref<2x1x8xf32, #tpu.memory_space<vmem>>, %arg3: memref<32x96xbf16, #tpu.memory_space<vmem>>, %arg4: memref<1x96xf32, #tpu.memory_space<vmem>>, %arg5: memref<32x32xbf16, #tpu.memory_space<vmem>>, %arg6: memref<32x128xbf16, #tpu.memory_space<vmem>>, %arg7: memref<1x128xf32, #tpu.memory_space<vmem>>, %arg8: memref<128x32xbf16, #tpu.memory_space<vmem>>, %arg9: memref<9x32xf32, #tpu.memory_space<vmem>>, %arg10: memref<2x1x8xf32, #tpu.memory_space<vmem>>, %arg11: memref<16x32xf32, #tpu.memory_space<vmem>>) attributes {dimension_semantics = [#tpu.dimension_semantics<parallel>], iteration_bounds = array<i64: 1>, scalar_prefetch = 0 : i64, scratch_operands = 1 : i64, tpu.core_type = #tpu.core_type<tc>, window_params = [{transform_indices = @transform_0, window_bounds = array<i64: 2, 8, 32>}, {transform_indices = @transform_1, window_bounds = array<i64: 2, 1, 8>}, {pipeline_mode = #tpu.pipeline_mode<synchronous>, transform_indices = @transform_2, window_bounds = array<i64: 32, 96>}, {pipeline_mode = #tpu.pipeline_mode<synchronous>, transform_indices = @transform_3, window_bounds = array<i64: 1, 96>}, {pipeline_mode = #tpu.pipeline_mode<synchronous>, transform_indices = @transform_4, window_bounds = array<i64: 32, 32>}, {pipeline_mode = #tpu.pipeline_mode<synchronous>, transform_indices = @transform_5, window_bounds = array<i64: 32, 128>}, {pipeline_mode = #tpu.pipeline_mode<synchronous>, transform_indices = @transform_6, window_bounds = array<i64: 1, 128>}, {pipeline_mode = #tpu.pipeline_mode<synchronous>, transform_indices = @transform_7, window_bounds = array<i64: 128, 32>}, {pipeline_mode = #tpu.pipeline_mode<synchronous>, transform_indices = @transform_8, window_bounds = array<i64: 9, 32>}, {transform_indices = @transform_9, window_bounds = array<i64: 2, 1, 8>}]} {
    %c0 = arith.constant 0 : index
    %c0_0 = arith.constant 0 : index
    %0 = vector.load %arg9[%c0, %c0_0] : memref<9x32xf32, #tpu.memory_space<vmem>>, vector<9x32xf32>
    %1 = vector.extract_strided_slice %0 {offsets = [0, 0], sizes = [1, 32], strides = [1, 1]} : vector<9x32xf32> to vector<1x32xf32>
    %2 = vector.extract_strided_slice %0 {offsets = [1, 0], sizes = [1, 32], strides = [1, 1]} : vector<9x32xf32> to vector<1x32xf32>
    %3 = vector.extract_strided_slice %0 {offsets = [2, 0], sizes = [1, 32], strides = [1, 1]} : vector<9x32xf32> to vector<1x32xf32>
    %4 = vector.extract_strided_slice %0 {offsets = [3, 0], sizes = [1, 32], strides = [1, 1]} : vector<9x32xf32> to vector<1x32xf32>
    %5 = vector.extract_strided_slice %0 {offsets = [4, 0], sizes = [1, 32], strides = [1, 1]} : vector<9x32xf32> to vector<1x32xf32>
    %6 = vector.extract_strided_slice %0 {offsets = [5, 0], sizes = [1, 32], strides = [1, 1]} : vector<9x32xf32> to vector<1x32xf32>
    %7 = vector.extract_strided_slice %0 {offsets = [6, 0], sizes = [1, 32], strides = [1, 1]} : vector<9x32xf32> to vector<1x32xf32>
    %8 = vector.extract_strided_slice %0 {offsets = [7, 0], sizes = [1, 32], strides = [1, 1]} : vector<9x32xf32> to vector<1x32xf32>
    %9 = vector.extract_strided_slice %0 {offsets = [8, 0], sizes = [1, 32], strides = [1, 1]} : vector<9x32xf32> to vector<1x32xf32>
    %c0_1 = arith.constant 0 : index
    %c0_2 = arith.constant 0 : index
    %c0_3 = arith.constant 0 : index
    %10 = vector.load %arg1[%c0_1, %c0_2, %c0_3] : memref<2x8x32xbf16, #tpu.memory_space<vmem>>, vector<2x8x32xbf16>
    %11 = arith.extf %10 : vector<2x8x32xbf16> to vector<2x8x32xf32>
    %12 = vector.shape_cast %11 : vector<2x8x32xf32> to vector<16x32xf32>
    %cst = arith.constant dense<0.000000e+00> : vector<16xf32>
    %13 = vector.multi_reduction <add>, %12, %cst [1] : vector<16x32xf32> to vector<16xf32>
    %14 = vector.shape_cast %13 : vector<16xf32> to vector<16x1xf32>
    %cst_4 = arith.constant 3.200000e+01 : f32
    %15 = vector.broadcast %cst_4 : f32 to vector<16x1xf32>
    %16 = arith.divf %14, %15 : vector<16x1xf32>
    %17 = vector.broadcast %16 : vector<16x1xf32> to vector<16x32xf32>
    %18 = arith.subf %12, %17 : vector<16x32xf32>
    %19 = arith.mulf %18, %18 : vector<16x32xf32>
    %cst_5 = arith.constant dense<0.000000e+00> : vector<16xf32>
    %20 = vector.multi_reduction <add>, %19, %cst_5 [1] : vector<16x32xf32> to vector<16xf32>
    %21 = vector.shape_cast %20 : vector<16xf32> to vector<16x1xf32>
    %cst_6 = arith.constant 3.200000e+01 : f32
    %22 = vector.broadcast %cst_6 : f32 to vector<16x1xf32>
    %23 = arith.divf %21, %22 : vector<16x1xf32>
    %24 = vector.broadcast %16 : vector<16x1xf32> to vector<16x32xf32>
    %25 = arith.subf %12, %24 : vector<16x32xf32>
    %cst_7 = arith.constant 9.99999974E-6 : f32
    %26 = vector.broadcast %cst_7 : f32 to vector<16x1xf32>
    %27 = arith.addf %23, %26 : vector<16x1xf32>
    %28 = math.rsqrt %27 : vector<16x1xf32>
    %29 = vector.broadcast %28 : vector<16x1xf32> to vector<16x32xf32>
    %30 = arith.mulf %25, %29 : vector<16x32xf32>
    %31 = vector.broadcast %1 : vector<1x32xf32> to vector<16x32xf32>
    %32 = arith.mulf %30, %31 : vector<16x32xf32>
    %33 = vector.broadcast %2 : vector<1x32xf32> to vector<16x32xf32>
    %34 = arith.addf %32, %33 : vector<16x32xf32>
    %35 = arith.truncf %34 : vector<16x32xf32> to vector<16x32xbf16>
    %c0_8 = arith.constant 0 : index
    %c0_9 = arith.constant 0 : index
    %36 = vector.load %arg3[%c0_8, %c0_9] : memref<32x96xbf16, #tpu.memory_space<vmem>>, vector<32x96xbf16>
    %cst_10 = arith.constant dense<0.000000e+00> : vector<16x96xf32>
    %37 = tpu.matmul %35, %36, %cst_10 {dimension_numbers = #tpu.dot_dimension_numbers<[1], [0], [0], [1], [0, 0, 1, 1], [], []>} : vector<16x32xbf16>, vector<32x96xbf16>, vector<16x96xf32> -> vector<16x96xf32>
    %c0_11 = arith.constant 0 : index
    %c0_12 = arith.constant 0 : index
    %38 = vector.load %arg4[%c0_11, %c0_12] : memref<1x96xf32, #tpu.memory_space<vmem>>, vector<1x96xf32>
    %39 = vector.broadcast %38 : vector<1x96xf32> to vector<16x96xf32>
    %40 = arith.addf %37, %39 : vector<16x96xf32>
    %c0_13 = arith.constant 0 : index
    %c0_14 = arith.constant 0 : index
    %c0_15 = arith.constant 0 : index
    %41 = vector.load %arg2[%c0_13, %c0_14, %c0_15] : memref<2x1x8xf32, #tpu.memory_space<vmem>>, vector<2x1x8xf32>
    %42 = tpu.iota {dimensions = array<i32: 0>} : vector<8x8xi32>
    %43 = tpu.iota {dimensions = array<i32: 1>} : vector<8x8xi32>
    %c0_i32 = arith.constant 0 : i32
    %44 = vector.broadcast %c0_i32 : i32 to vector<8x8xi32>
    %45 = arith.addi %43, %44 : vector<8x8xi32>
    %46 = arith.cmpi sge, %42, %45 : vector<8x8xi32>
    %cst_16 = arith.constant 0.000000e+00 : f32
    %cst_17 = arith.constant -1.000000e+09 : f32
    %47 = vector.broadcast %cst_16 : f32 to vector<8x8xf32>
    %48 = vector.broadcast %cst_17 : f32 to vector<8x8xf32>
    %49 = arith.select %46, %47, %48 : vector<8x8xi1>, vector<8x8xf32>
    %50 = vector.shape_cast %49 : vector<8x8xf32> to vector<1x8x8xf32>
    %51 = vector.extract_strided_slice %40 {offsets = [0, 0], sizes = [16, 16], strides = [1, 1]} : vector<16x96xf32> to vector<16x16xf32>
    %52 = vector.shape_cast %51 : vector<16x16xf32> to vector<2x8x16xf32>
    %53 = arith.truncf %52 : vector<2x8x16xf32> to vector<2x8x16xbf16>
    %54 = vector.extract_strided_slice %40 {offsets = [0, 16], sizes = [16, 16], strides = [1, 1]} : vector<16x96xf32> to vector<16x16xf32>
    %55 = vector.shape_cast %54 : vector<16x16xf32> to vector<2x8x16xf32>
    %56 = vector.extract_strided_slice %40 {offsets = [0, 32], sizes = [16, 16], strides = [1, 1]} : vector<16x96xf32> to vector<16x16xf32>
    %57 = vector.shape_cast %56 : vector<16x16xf32> to vector<2x8x16xf32>
    %cst_18 = arith.constant 0xFF800000 : f32
    %58 = vector.broadcast %cst_18 : f32 to vector<2x8x1xf32>
    %cst_19 = arith.constant 0.000000e+00 : f32
    %59 = vector.broadcast %cst_19 : f32 to vector<2x8x1xf32>
    %cst_20 = arith.constant 0.000000e+00 : f32
    %60 = vector.broadcast %cst_20 : f32 to vector<2x8x16xf32>
    %61 = arith.truncf %55 : vector<2x8x16xf32> to vector<2x8x16xbf16>
    %62 = arith.truncf %57 : vector<2x8x16xf32> to vector<2x8x16xbf16>
    "tpu.trace_start"() <{level = 10 : i32, message = "bqd,bkd->bqk"}> : () -> ()
    %cst_21 = arith.constant dense<0.000000e+00> : vector<2x8x8xf32>
    %63 = tpu.matmul %53, %61, %cst_21 {dimension_numbers = #tpu.dot_dimension_numbers<[2], [2], [1], [1], [0, 0, 0, 1, 1, 1], [0], [0]>} : vector<2x8x16xbf16>, vector<2x8x16xbf16>, vector<2x8x8xf32> -> vector<2x8x8xf32>
    "tpu.trace_stop"() : () -> ()
    %cst_22 = arith.constant 2.500000e-01 : f32
    %64 = vector.broadcast %cst_22 : f32 to vector<2x8x8xf32>
    %65 = arith.mulf %63, %64 : vector<2x8x8xf32>
    %66 = vector.broadcast %50 : vector<1x8x8xf32> to vector<2x8x8xf32>
    %67 = arith.addf %65, %66 : vector<2x8x8xf32>
    %68 = vector.broadcast %41 : vector<2x1x8xf32> to vector<2x8x8xf32>
    %69 = arith.addf %67, %68 : vector<2x8x8xf32>
    %cst_23 = arith.constant dense<0xFF800000> : vector<2x8xf32>
    %70 = vector.multi_reduction <maximumf>, %69, %cst_23 [2] : vector<2x8x8xf32> to vector<2x8xf32>
    %71 = vector.shape_cast %70 : vector<2x8xf32> to vector<2x8x1xf32>
    %72 = arith.maximumf %58, %71 : vector<2x8x1xf32>
    %73 = arith.subf %58, %72 : vector<2x8x1xf32>
    %74 = math.exp %73 : vector<2x8x1xf32>
    %75 = vector.broadcast %72 : vector<2x8x1xf32> to vector<2x8x8xf32>
    %76 = arith.subf %69, %75 : vector<2x8x8xf32>
    %77 = math.exp %76 : vector<2x8x8xf32>
    %78 = arith.mulf %74, %59 : vector<2x8x1xf32>
    %cst_24 = arith.constant dense<0.000000e+00> : vector<2x8xf32>
    %79 = vector.multi_reduction <add>, %77, %cst_24 [2] : vector<2x8x8xf32> to vector<2x8xf32>
    %80 = vector.shape_cast %79 : vector<2x8xf32> to vector<2x8x1xf32>
    %81 = arith.addf %78, %80 : vector<2x8x1xf32>
    %82 = vector.broadcast %74 : vector<2x8x1xf32> to vector<2x8x16xf32>
    %83 = arith.mulf %82, %60 : vector<2x8x16xf32>
    %84 = arith.truncf %77 : vector<2x8x8xf32> to vector<2x8x8xbf16>
    "tpu.trace_start"() <{level = 10 : i32, message = "bqk,bkd->bqd"}> : () -> ()
    %cst_25 = arith.constant dense<0.000000e+00> : vector<2x8x16xf32>
    %85 = tpu.matmul %84, %62, %cst_25 {dimension_numbers = #tpu.dot_dimension_numbers<[2], [1], [1], [2], [0, 0, 0, 1, 1, 2], [0], [0]>} : vector<2x8x8xbf16>, vector<2x8x16xbf16>, vector<2x8x16xf32> -> vector<2x8x16xf32>
    "tpu.trace_stop"() : () -> ()
    %86 = arith.addf %83, %85 : vector<2x8x16xf32>
    %87 = tpu.reciprocal %81 {approx = true} : vector<2x8x1xf32> -> vector<2x8x1xf32>
    %88 = vector.broadcast %87 : vector<2x8x1xf32> to vector<2x8x16xf32>
    %89 = arith.mulf %86, %88 : vector<2x8x16xf32>
    %90 = vector.shape_cast %89 : vector<2x8x16xf32> to vector<16x16xf32>
    %c0_26 = arith.constant 0 : index
    %c0_27 = arith.constant 0 : index
    %91 = vector.load %arg11[%c0_26, %c0_27] : memref<16x32xf32, #tpu.memory_space<vmem>>, vector<16x16xf32>
    tpu.vector_store %arg11[%c0_26, %c0_27], %90 {strides = array<i32>} : memref<16x32xf32, #tpu.memory_space<vmem>>, vector<16x16xf32>,
    %92 = vector.extract_strided_slice %40 {offsets = [0, 48], sizes = [16, 16], strides = [1, 1]} : vector<16x96xf32> to vector<16x16xf32>
    %93 = vector.shape_cast %92 : vector<16x16xf32> to vector<2x8x16xf32>
    %94 = arith.truncf %93 : vector<2x8x16xf32> to vector<2x8x16xbf16>
    %95 = vector.extract_strided_slice %40 {offsets = [0, 64], sizes = [16, 16], strides = [1, 1]} : vector<16x96xf32> to vector<16x16xf32>
    %96 = vector.shape_cast %95 : vector<16x16xf32> to vector<2x8x16xf32>
    %97 = vector.extract_strided_slice %40 {offsets = [0, 80], sizes = [16, 16], strides = [1, 1]} : vector<16x96xf32> to vector<16x16xf32>
    %98 = vector.shape_cast %97 : vector<16x16xf32> to vector<2x8x16xf32>
    %cst_28 = arith.constant 0xFF800000 : f32
    %99 = vector.broadcast %cst_28 : f32 to vector<2x8x1xf32>
    %cst_29 = arith.constant 0.000000e+00 : f32
    %100 = vector.broadcast %cst_29 : f32 to vector<2x8x1xf32>
    %cst_30 = arith.constant 0.000000e+00 : f32
    %101 = vector.broadcast %cst_30 : f32 to vector<2x8x16xf32>
    %102 = arith.truncf %96 : vector<2x8x16xf32> to vector<2x8x16xbf16>
    %103 = arith.truncf %98 : vector<2x8x16xf32> to vector<2x8x16xbf16>
    "tpu.trace_start"() <{level = 10 : i32, message = "bqd,bkd->bqk"}> : () -> ()
    %cst_31 = arith.constant dense<0.000000e+00> : vector<2x8x8xf32>
    %104 = tpu.matmul %94, %102, %cst_31 {dimension_numbers = #tpu.dot_dimension_numbers<[2], [2], [1], [1], [0, 0, 0, 1, 1, 1], [0], [0]>} : vector<2x8x16xbf16>, vector<2x8x16xbf16>, vector<2x8x8xf32> -> vector<2x8x8xf32>
    "tpu.trace_stop"() : () -> ()
    %cst_32 = arith.constant 2.500000e-01 : f32
    %105 = vector.broadcast %cst_32 : f32 to vector<2x8x8xf32>
    %106 = arith.mulf %104, %105 : vector<2x8x8xf32>
    %107 = vector.broadcast %50 : vector<1x8x8xf32> to vector<2x8x8xf32>
    %108 = arith.addf %106, %107 : vector<2x8x8xf32>
    %109 = vector.broadcast %41 : vector<2x1x8xf32> to vector<2x8x8xf32>
    %110 = arith.addf %108, %109 : vector<2x8x8xf32>
    %cst_33 = arith.constant dense<0xFF800000> : vector<2x8xf32>
    %111 = vector.multi_reduction <maximumf>, %110, %cst_33 [2] : vector<2x8x8xf32> to vector<2x8xf32>
    %112 = vector.shape_cast %111 : vector<2x8xf32> to vector<2x8x1xf32>
    %113 = arith.maximumf %99, %112 : vector<2x8x1xf32>
    %114 = arith.subf %99, %113 : vector<2x8x1xf32>
    %115 = math.exp %114 : vector<2x8x1xf32>
    %116 = vector.broadcast %113 : vector<2x8x1xf32> to vector<2x8x8xf32>
    %117 = arith.subf %110, %116 : vector<2x8x8xf32>
    %118 = math.exp %117 : vector<2x8x8xf32>
    %119 = arith.mulf %115, %100 : vector<2x8x1xf32>
    %cst_34 = arith.constant dense<0.000000e+00> : vector<2x8xf32>
    %120 = vector.multi_reduction <add>, %118, %cst_34 [2] : vector<2x8x8xf32> to vector<2x8xf32>
    %121 = vector.shape_cast %120 : vector<2x8xf32> to vector<2x8x1xf32>
    %122 = arith.addf %119, %121 : vector<2x8x1xf32>
    %123 = vector.broadcast %115 : vector<2x8x1xf32> to vector<2x8x16xf32>
    %124 = arith.mulf %123, %101 : vector<2x8x16xf32>
    %125 = arith.truncf %118 : vector<2x8x8xf32> to vector<2x8x8xbf16>
    "tpu.trace_start"() <{level = 10 : i32, message = "bqk,bkd->bqd"}> : () -> ()
    %cst_35 = arith.constant dense<0.000000e+00> : vector<2x8x16xf32>
    %126 = tpu.matmul %125, %103, %cst_35 {dimension_numbers = #tpu.dot_dimension_numbers<[2], [1], [1], [2], [0, 0, 0, 1, 1, 2], [0], [0]>} : vector<2x8x8xbf16>, vector<2x8x16xbf16>, vector<2x8x16xf32> -> vector<2x8x16xf32>
    "tpu.trace_stop"() : () -> ()
    %127 = arith.addf %124, %126 : vector<2x8x16xf32>
    %128 = tpu.reciprocal %122 {approx = true} : vector<2x8x1xf32> -> vector<2x8x1xf32>
    %129 = vector.broadcast %128 : vector<2x8x1xf32> to vector<2x8x16xf32>
    %130 = arith.mulf %127, %129 : vector<2x8x16xf32>
    %131 = vector.shape_cast %130 : vector<2x8x16xf32> to vector<16x16xf32>
    %c0_36 = arith.constant 0 : index
    %c16 = arith.constant 16 : index
    %132 = vector.load %arg11[%c0_36, %c16] : memref<16x32xf32, #tpu.memory_space<vmem>>, vector<16x16xf32>
    tpu.vector_store %arg11[%c0_36, %c16], %131 {strides = array<i32>} : memref<16x32xf32, #tpu.memory_space<vmem>>, vector<16x16xf32>,
    %c0_37 = arith.constant 0 : index
    %c0_38 = arith.constant 0 : index
    %133 = vector.load %arg11[%c0_37, %c0_38] : memref<16x32xf32, #tpu.memory_space<vmem>>, vector<16x32xf32>
    %134 = arith.truncf %133 : vector<16x32xf32> to vector<16x32xbf16>
    %c0_39 = arith.constant 0 : index
    %c0_40 = arith.constant 0 : index
    %135 = vector.load %arg5[%c0_39, %c0_40] : memref<32x32xbf16, #tpu.memory_space<vmem>>, vector<32x32xbf16>
    %cst_41 = arith.constant dense<0.000000e+00> : vector<16x32xf32>
    %136 = tpu.matmul %134, %135, %cst_41 {dimension_numbers = #tpu.dot_dimension_numbers<[1], [0], [0], [1], [0, 0, 1, 1], [], []>} : vector<16x32xbf16>, vector<32x32xbf16>, vector<16x32xf32> -> vector<16x32xf32>
    %137 = arith.addf %12, %136 : vector<16x32xf32>
    %138 = vector.broadcast %3 : vector<1x32xf32> to vector<16x32xf32>
    %139 = arith.addf %137, %138 : vector<16x32xf32>
    %cst_42 = arith.constant dense<0.000000e+00> : vector<16xf32>
    %140 = vector.multi_reduction <add>, %139, %cst_42 [1] : vector<16x32xf32> to vector<16xf32>
    %141 = vector.shape_cast %140 : vector<16xf32> to vector<16x1xf32>
    %cst_43 = arith.constant 3.200000e+01 : f32
    %142 = vector.broadcast %cst_43 : f32 to vector<16x1xf32>
    %143 = arith.divf %141, %142 : vector<16x1xf32>
    %144 = vector.broadcast %143 : vector<16x1xf32> to vector<16x32xf32>
    %145 = arith.subf %139, %144 : vector<16x32xf32>
    %146 = arith.mulf %145, %145 : vector<16x32xf32>
    %cst_44 = arith.constant dense<0.000000e+00> : vector<16xf32>
    %147 = vector.multi_reduction <add>, %146, %cst_44 [1] : vector<16x32xf32> to vector<16xf32>
    %148 = vector.shape_cast %147 : vector<16xf32> to vector<16x1xf32>
    %cst_45 = arith.constant 3.200000e+01 : f32
    %149 = vector.broadcast %cst_45 : f32 to vector<16x1xf32>
    %150 = arith.divf %148, %149 : vector<16x1xf32>
    %151 = vector.broadcast %143 : vector<16x1xf32> to vector<16x32xf32>
    %152 = arith.subf %139, %151 : vector<16x32xf32>
    %cst_46 = arith.constant 9.99999974E-6 : f32
    %153 = vector.broadcast %cst_46 : f32 to vector<16x1xf32>
    %154 = arith.addf %150, %153 : vector<16x1xf32>
    %155 = math.rsqrt %154 : vector<16x1xf32>
    %156 = vector.broadcast %155 : vector<16x1xf32> to vector<16x32xf32>
    %157 = arith.mulf %152, %156 : vector<16x32xf32>
    %158 = vector.broadcast %4 : vector<1x32xf32> to vector<16x32xf32>
    %159 = arith.mulf %157, %158 : vector<16x32xf32>
    %160 = vector.broadcast %5 : vector<1x32xf32> to vector<16x32xf32>
    %161 = arith.addf %159, %160 : vector<16x32xf32>
    %162 = arith.truncf %161 : vector<16x32xf32> to vector<16x32xbf16>
    %c0_47 = arith.constant 0 : index
    %c0_48 = arith.constant 0 : index
    %163 = vector.load %arg6[%c0_47, %c0_48] : memref<32x128xbf16, #tpu.memory_space<vmem>>, vector<32x128xbf16>
    %cst_49 = arith.constant dense<0.000000e+00> : vector<16x128xf32>
    %164 = tpu.matmul %162, %163, %cst_49 {dimension_numbers = #tpu.dot_dimension_numbers<[1], [0], [0], [1], [0, 0, 1, 1], [], []>} : vector<16x32xbf16>, vector<32x128xbf16>, vector<16x128xf32> -> vector<16x128xf32>
    %c0_50 = arith.constant 0 : index
    %c0_51 = arith.constant 0 : index
    %165 = vector.load %arg7[%c0_50, %c0_51] : memref<1x128xf32, #tpu.memory_space<vmem>>, vector<1x128xf32>
    %166 = vector.broadcast %165 : vector<1x128xf32> to vector<16x128xf32>
    %167 = arith.addf %164, %166 : vector<16x128xf32>
    %cst_52 = arith.constant 5.000000e-01 : f32
    %168 = vector.broadcast %cst_52 : f32 to vector<16x128xf32>
    %169 = arith.mulf %168, %167 : vector<16x128xf32>
    %cst_53 = arith.constant 4.471500e-02 : f32
    %170 = vector.broadcast %cst_53 : f32 to vector<16x128xf32>
    %171 = arith.mulf %170, %167 : vector<16x128xf32>
    %172 = arith.mulf %171, %167 : vector<16x128xf32>
    %173 = arith.mulf %172, %167 : vector<16x128xf32>
    %174 = arith.addf %167, %173 : vector<16x128xf32>
    %cst_54 = arith.constant 0.797884583 : f32
    %175 = vector.broadcast %cst_54 : f32 to vector<16x128xf32>
    %176 = arith.mulf %175, %174 : vector<16x128xf32>
    %177 = math.tanh %176 : vector<16x128xf32>
    %cst_55 = arith.constant 1.000000e+00 : f32
    %178 = vector.broadcast %cst_55 : f32 to vector<16x128xf32>
    %179 = arith.addf %178, %177 : vector<16x128xf32>
    %180 = arith.mulf %169, %179 : vector<16x128xf32>
    %181 = arith.truncf %180 : vector<16x128xf32> to vector<16x128xbf16>
    %c0_56 = arith.constant 0 : index
    %c0_57 = arith.constant 0 : index
    %182 = vector.load %arg8[%c0_56, %c0_57] : memref<128x32xbf16, #tpu.memory_space<vmem>>, vector<128x32xbf16>
    %cst_58 = arith.constant dense<0.000000e+00> : vector<16x32xf32>
    %183 = tpu.matmul %181, %182, %cst_58 {dimension_numbers = #tpu.dot_dimension_numbers<[1], [0], [0], [1], [0, 0, 1, 1], [], []>} : vector<16x128xbf16>, vector<128x32xbf16>, vector<16x32xf32> -> vector<16x32xf32>
    %184 = arith.addf %139, %183 : vector<16x32xf32>
    %185 = vector.broadcast %6 : vector<1x32xf32> to vector<16x32xf32>
    %186 = arith.addf %184, %185 : vector<16x32xf32>
    %cst_59 = arith.constant dense<0.000000e+00> : vector<16xf32>
    %187 = vector.multi_reduction <add>, %186, %cst_59 [1] : vector<16x32xf32> to vector<16xf32>
    %188 = vector.shape_cast %187 : vector<16xf32> to vector<16x1xf32>
    %cst_60 = arith.constant 3.200000e+01 : f32
    %189 = vector.broadcast %cst_60 : f32 to vector<16x1xf32>
    %190 = arith.divf %188, %189 : vector<16x1xf32>
    %191 = vector.broadcast %190 : vector<16x1xf32> to vector<16x32xf32>
    %192 = arith.subf %186, %191 : vector<16x32xf32>
    %193 = arith.mulf %192, %192 : vector<16x32xf32>
    %cst_61 = arith.constant dense<0.000000e+00> : vector<16xf32>
    %194 = vector.multi_reduction <add>, %193, %cst_61 [1] : vector<16x32xf32> to vector<16xf32>
    %195 = vector.shape_cast %194 : vector<16xf32> to vector<16x1xf32>
    %cst_62 = arith.constant 3.200000e+01 : f32
    %196 = vector.broadcast %cst_62 : f32 to vector<16x1xf32>
    %197 = arith.divf %195, %196 : vector<16x1xf32>
    %198 = vector.broadcast %190 : vector<16x1xf32> to vector<16x32xf32>
    %199 = arith.subf %186, %198 : vector<16x32xf32>
    %cst_63 = arith.constant 9.99999974E-6 : f32
    %200 = vector.broadcast %cst_63 : f32 to vector<16x1xf32>
    %201 = arith.addf %197, %200 : vector<16x1xf32>
    %202 = math.rsqrt %201 : vector<16x1xf32>
    %203 = vector.broadcast %202 : vector<16x1xf32> to vector<16x32xf32>
    %204 = arith.mulf %199, %203 : vector<16x32xf32>
    %205 = vector.broadcast %7 : vector<1x32xf32> to vector<16x32xf32>
    %206 = arith.mulf %204, %205 : vector<16x32xf32>
    %207 = vector.broadcast %8 : vector<1x32xf32> to vector<16x32xf32>
    %208 = arith.addf %206, %207 : vector<16x32xf32>
    %209 = vector.shape_cast %208 : vector<16x32xf32> to vector<2x8x32xf32>
    %210 = vector.shape_cast %9 : vector<1x32xf32> to vector<1x1x32xf32>
    %211 = vector.broadcast %210 : vector<1x1x32xf32> to vector<2x8x32xf32>
    %212 = arith.mulf %209, %211 : vector<2x8x32xf32>
    %cst_64 = arith.constant dense<0.000000e+00> : vector<2x8xf32>
    %213 = vector.multi_reduction <add>, %212, %cst_64 [2] : vector<2x8x32xf32> to vector<2x8xf32>
    %c0_65 = arith.constant 0 : index
    %c0_66 = arith.constant 0 : index
    %c0_67 = arith.constant 0 : index
    %214 = vector.load %arg10[%c0_65, %c0_66, %c0_67] : memref<2x1x8xf32, #tpu.memory_space<vmem>>, vector<2x1x8xf32>
    %215 = vector.shape_cast %214 : vector<2x1x8xf32> to vector<2x8xf32>
    %216 = vector.shape_cast %213 : vector<2x8xf32> to vector<2x1x8xf32>
    tpu.vector_store %arg10[%c0_65, %c0_66, %c0_67], %216 {strides = array<i32>} : memref<2x1x8xf32, #tpu.memory_space<vmem>>, vector<2x1x8xf32>,
    return
  }
  func.func @transform_0(%arg0: i32) -> (i32, i32, i32) {
    %c0_i32 = arith.constant 0 : i32
    %c0_i32_0 = arith.constant 0 : i32
    %c0_i32_1 = arith.constant 0 : i32
    return %arg0, %c0_i32, %c0_i32_0 : i32, i32, i32
  }
  func.func @transform_1(%arg0: i32) -> (i32, i32, i32) {
    %c0_i32 = arith.constant 0 : i32
    %c0_i32_0 = arith.constant 0 : i32
    %c0_i32_1 = arith.constant 0 : i32
    return %arg0, %c0_i32, %c0_i32_0 : i32, i32, i32
  }
  func.func @transform_2(%arg0: i32) -> (i32, i32) {
    %c0_i32 = arith.constant 0 : i32
    %c0_i32_0 = arith.constant 0 : i32
    %c0_i32_1 = arith.constant 0 : i32
    return %c0_i32, %c0_i32_0 : i32, i32
  }
  func.func @transform_3(%arg0: i32) -> (i32, i32) {
    %c0_i32 = arith.constant 0 : i32
    %c0_i32_0 = arith.constant 0 : i32
    %c0_i32_1 = arith.constant 0 : i32
    return %c0_i32, %c0_i32_0 : i32, i32
  }
  func.func @transform_4(%arg0: i32) -> (i32, i32) {
    %c0_i32 = arith.constant 0 : i32
    %c0_i32_0 = arith.constant 0 : i32
    %c0_i32_1 = arith.constant 0 : i32
    return %c0_i32, %c0_i32_0 : i32, i32
  }
  func.func @transform_5(%arg0: i32) -> (i32, i32) {
    %c0_i32 = arith.constant 0 : i32
    %c0_i32_0 = arith.constant 0 : i32
    %c0_i32_1 = arith.constant 0 : i32
    return %c0_i32, %c0_i32_0 : i32, i32
  }
  func.func @transform_6(%arg0: i32) -> (i32, i32) {
    %c0_i32 = arith.constant 0 : i32
    %c0_i32_0 = arith.constant 0 : i32
    %c0_i32_1 = arith.constant 0 : i32
    return %c0_i32, %c0_i32_0 : i32, i32
  }
  func.func @transform_7(%arg0: i32) -> (i32, i32) {
    %c0_i32 = arith.constant 0 : i32
    %c0_i32_0 = arith.constant 0 : i32
    %c0_i32_1 = arith.constant 0 : i32
    return %c0_i32, %c0_i32_0 : i32, i32
  }
  func.func @transform_8(%arg0: i32) -> (i32, i32) {
    %c0_i32 = arith.constant 0 : i32
    %c0_i32_0 = arith.constant 0 : i32
    %c0_i32_1 = arith.constant 0 : i32
    return %c0_i32, %c0_i32_0 : i32, i32
  }
  func.func @transform_9(%arg0: i32) -> (i32, i32, i32) {
    %c0_i32 = arith.constant 0 : i32
    %c0_i32_0 = arith.constant 0 : i32
    %c0_i32_1 = arith.constant 0 : i32
    return %arg0, %c0_i32, %c0_i32_0 : i32, i32, i32
  }
}

module attributes {stable_mosaic.version = 11 : i64} {
  func.func @_reward_kernel(%arg0: i32, %arg1: memref<2x8x32xbf16, #tpu.memory_space<vmem>>, %arg2: memref<2x1x8xf32, #tpu.memory_space<vmem>>, %arg3: memref<32x96xbf16, #tpu.memory_space<vmem>>, %arg4: memref<1x96xf32, #tpu.memory_space<vmem>>, %arg5: memref<32x32xbf16, #tpu.memory_space<vmem>>, %arg6: memref<32x128xbf16, #tpu.memory_space<vmem>>, %arg7: memref<1x128xf32, #tpu.memory_space<vmem>>, %arg8: memref<128x32xbf16, #tpu.memory_space<vmem>>, %arg9: memref<9x32xf32, #tpu.memory_space<vmem>>, %arg10: memref<2x1x8xf32, #tpu.memory_space<vmem>>, %arg11: memref<16x32xf32, #tpu.memory_space<vmem>>) attributes {dimension_semantics = [#tpu.dimension_semantics<parallel>], iteration_bounds = array<i64: 1>, scalar_prefetch = 0 : i64, scratch_operands = 1 : i64, tpu.core_type = #tpu.core_type<tc>, window_params = [{transform_indices = @transform_0, window_bounds = array<i64: 2, 8, 32>}, {transform_indices = @transform_1, window_bounds = array<i64: 2, 1, 8>}, {pipeline_mode = #tpu.pipeline_mode<synchronous>, transform_indices = @transform_2, window_bounds = array<i64: 32, 96>}, {pipeline_mode = #tpu.pipeline_mode<synchronous>, transform_indices = @transform_3, window_bounds = array<i64: 1, 96>}, {pipeline_mode = #tpu.pipeline_mode<synchronous>, transform_indices = @transform_4, window_bounds = array<i64: 32, 32>}, {pipeline_mode = #tpu.pipeline_mode<synchronous>, transform_indices = @transform_5, window_bounds = array<i64: 32, 128>}, {pipeline_mode = #tpu.pipeline_mode<synchronous>, transform_indices = @transform_6, window_bounds = array<i64: 1, 128>}, {pipeline_mode = #tpu.pipeline_mode<synchronous>, transform_indices = @transform_7, window_bounds = array<i64: 128, 32>}, {pipeline_mode = #tpu.pipeline_mode<synchronous>, transform_indices = @transform_8, window_bounds = array<i64: 9, 32>}, {transform_indices = @transform_9, window_bounds = array<i64: 2, 1, 8>}]} {
    %c0 = arith.constant 0 : index
    %c0_0 = arith.constant 0 : index
    %0 = vector.load %arg9[%c0, %c0_0] : memref<9x32xf32, #tpu.memory_space<vmem>>, vector<9x32xf32>
    %1 = vector.extract_strided_slice %0 {offsets = [0, 0], sizes = [1, 32], strides = [1, 1]} : vector<9x32xf32> to vector<1x32xf32>
    %2 = vector.extract_strided_slice %0 {offsets = [1, 0], sizes = [1, 32], strides = [1, 1]} : vector<9x32xf32> to vector<1x32xf32>
    %3 = vector.extract_strided_slice %0 {offsets = [2, 0], sizes = [1, 32], strides = [1, 1]} : vector<9x32xf32> to vector<1x32xf32>
    %4 = vector.extract_strided_slice %0 {offsets = [3, 0], sizes = [1, 32], strides = [1, 1]} : vector<9x32xf32> to vector<1x32xf32>
    %5 = vector.extract_strided_slice %0 {offsets = [4, 0], sizes = [1, 32], strides = [1, 1]} : vector<9x32xf32> to vector<1x32xf32>
    %6 = vector.extract_strided_slice %0 {offsets = [5, 0], sizes = [1, 32], strides = [1, 1]} : vector<9x32xf32> to vector<1x32xf32>
    %7 = vector.extract_strided_slice %0 {offsets = [6, 0], sizes = [1, 32], strides = [1, 1]} : vector<9x32xf32> to vector<1x32xf32>
    %8 = vector.extract_strided_slice %0 {offsets = [7, 0], sizes = [1, 32], strides = [1, 1]} : vector<9x32xf32> to vector<1x32xf32>
    %9 = vector.extract_strided_slice %0 {offsets = [8, 0], sizes = [1, 32], strides = [1, 1]} : vector<9x32xf32> to vector<1x32xf32>
    %c0_1 = arith.constant 0 : index
    %c0_2 = arith.constant 0 : index
    %c0_3 = arith.constant 0 : index
    %10 = vector.load %arg1[%c0_1, %c0_2, %c0_3] : memref<2x8x32xbf16, #tpu.memory_space<vmem>>, vector<2x8x32xbf16>
    %11 = arith.extf %10 : vector<2x8x32xbf16> to vector<2x8x32xf32>
    %12 = vector.shape_cast %11 : vector<2x8x32xf32> to vector<16x32xf32>
    %cst = arith.constant dense<0.000000e+00> : vector<16xf32>
    %13 = vector.multi_reduction <add>, %12, %cst [1] : vector<16x32xf32> to vector<16xf32>
    %14 = vector.shape_cast %13 : vector<16xf32> to vector<16x1xf32>
    %cst_4 = arith.constant 3.200000e+01 : f32
    %15 = vector.broadcast %cst_4 : f32 to vector<16x1xf32>
    %16 = arith.divf %14, %15 : vector<16x1xf32>
    %17 = vector.broadcast %16 : vector<16x1xf32> to vector<16x32xf32>
    %18 = arith.subf %12, %17 : vector<16x32xf32>
    %19 = arith.mulf %18, %18 : vector<16x32xf32>
    %cst_5 = arith.constant dense<0.000000e+00> : vector<16xf32>
    %20 = vector.multi_reduction <add>, %19, %cst_5 [1] : vector<16x32xf32> to vector<16xf32>
    %21 = vector.shape_cast %20 : vector<16xf32> to vector<16x1xf32>
    %cst_6 = arith.constant 3.200000e+01 : f32
    %22 = vector.broadcast %cst_6 : f32 to vector<16x1xf32>
    %23 = arith.divf %21, %22 : vector<16x1xf32>
    %24 = vector.broadcast %16 : vector<16x1xf32> to vector<16x32xf32>
    %25 = arith.subf %12, %24 : vector<16x32xf32>
    %cst_7 = arith.constant 9.99999974E-6 : f32
    %26 = vector.broadcast %cst_7 : f32 to vector<16x1xf32>
    %27 = arith.addf %23, %26 : vector<16x1xf32>
    %28 = math.rsqrt %27 : vector<16x1xf32>
    %29 = vector.broadcast %28 : vector<16x1xf32> to vector<16x32xf32>
    %30 = arith.mulf %25, %29 : vector<16x32xf32>
    %31 = vector.broadcast %1 : vector<1x32xf32> to vector<16x32xf32>
    %32 = arith.mulf %30, %31 : vector<16x32xf32>
    %33 = vector.broadcast %2 : vector<1x32xf32> to vector<16x32xf32>
    %34 = arith.addf %32, %33 : vector<16x32xf32>
    %35 = arith.truncf %34 : vector<16x32xf32> to vector<16x32xbf16>
    %c0_8 = arith.constant 0 : index
    %c0_9 = arith.constant 0 : index
    %36 = vector.load %arg3[%c0_8, %c0_9] : memref<32x96xbf16, #tpu.memory_space<vmem>>, vector<32x96xbf16>
    %cst_10 = arith.constant dense<0.000000e+00> : vector<16x96xf32>
    %37 = tpu.matmul %35, %36, %cst_10 {dimension_numbers = #tpu.dot_dimension_numbers<[1], [0], [0], [1], [0, 0, 1, 1], [], []>} : vector<16x32xbf16>, vector<32x96xbf16>, vector<16x96xf32> -> vector<16x96xf32>
    %c0_11 = arith.constant 0 : index
    %c0_12 = arith.constant 0 : index
    %38 = vector.load %arg4[%c0_11, %c0_12] : memref<1x96xf32, #tpu.memory_space<vmem>>, vector<1x96xf32>
    %39 = vector.broadcast %38 : vector<1x96xf32> to vector<16x96xf32>
    %40 = arith.addf %37, %39 : vector<16x96xf32>
    %c0_13 = arith.constant 0 : index
    %c0_14 = arith.constant 0 : index
    %c0_15 = arith.constant 0 : index
    %41 = vector.load %arg2[%c0_13, %c0_14, %c0_15] : memref<2x1x8xf32, #tpu.memory_space<vmem>>, vector<2x1x8xf32>
    %42 = tpu.iota {dimensions = array<i32: 0>} : vector<8x8xi32>
    %43 = tpu.iota {dimensions = array<i32: 1>} : vector<8x8xi32>
    %c0_i32 = arith.constant 0 : i32
    %44 = vector.broadcast %c0_i32 : i32 to vector<8x8xi32>
    %45 = arith.addi %43, %44 : vector<8x8xi32>
    %46 = arith.cmpi sge, %42, %45 : vector<8x8xi32>
    %cst_16 = arith.constant 0.000000e+00 : f32
    %cst_17 = arith.constant -1.000000e+09 : f32
    %47 = vector.broadcast %cst_16 : f32 to vector<8x8xf32>
    %48 = vector.broadcast %cst_17 : f32 to vector<8x8xf32>
    %49 = arith.select %46, %47, %48 : vector<8x8xi1>, vector<8x8xf32>
    %50 = vector.shape_cast %49 : vector<8x8xf32> to vector<1x8x8xf32>
    %51 = vector.extract_strided_slice %40 {offsets = [0, 0], sizes = [16, 16], strides = [1, 1]} : vector<16x96xf32> to vector<16x16xf32>
    %52 = vector.shape_cast %51 : vector<16x16xf32> to vector<2x8x16xf32>
    %53 = arith.truncf %52 : vector<2x8x16xf32> to vector<2x8x16xbf16>
    %54 = vector.extract_strided_slice %40 {offsets = [0, 16], sizes = [16, 16], strides = [1, 1]} : vector<16x96xf32> to vector<16x16xf32>
    %55 = vector.shape_cast %54 : vector<16x16xf32> to vector<2x8x16xf32>
    %56 = vector.extract_strided_slice %40 {offsets = [0, 32], sizes = [16, 16], strides = [1, 1]} : vector<16x96xf32> to vector<16x16xf32>
    %57 = vector.shape_cast %56 : vector<16x16xf32> to vector<2x8x16xf32>
    %cst_18 = arith.constant 0xFF800000 : f32
    %58 = vector.broadcast %cst_18 : f32 to vector<2x8x1xf32>
    %cst_19 = arith.constant 0.000000e+00 : f32
    %59 = vector.broadcast %cst_19 : f32 to vector<2x8x1xf32>
    %cst_20 = arith.constant 0.000000e+00 : f32
    %60 = vector.broadcast %cst_20 : f32 to vector<2x8x16xf32>
    %61 = arith.truncf %55 : vector<2x8x16xf32> to vector<2x8x16xbf16>
    %62 = arith.truncf %57 : vector<2x8x16xf32> to vector<2x8x16xbf16>
    "tpu.trace_start"() <{level = 10 : i32, message = "bqd,bkd->bqk"}> : () -> ()
    %cst_21 = arith.constant dense<0.000000e+00> : vector<2x8x8xf32>
    %63 = tpu.matmul %53, %61, %cst_21 {dimension_numbers = #tpu.dot_dimension_numbers<[2], [2], [1], [1], [0, 0, 0, 1, 1, 1], [0], [0]>} : vector<2x8x16xbf16>, vector<2x8x16xbf16>, vector<2x8x8xf32> -> vector<2x8x8xf32>
    "tpu.trace_stop"() : () -> ()
    %cst_22 = arith.constant 2.500000e-01 : f32
    %64 = vector.broadcast %cst_22 : f32 to vector<2x8x8xf32>
    %65 = arith.mulf %63, %64 : vector<2x8x8xf32>
    %66 = vector.broadcast %50 : vector<1x8x8xf32> to vector<2x8x8xf32>
    %67 = arith.addf %65, %66 : vector<2x8x8xf32>
    %68 = vector.broadcast %41 : vector<2x1x8xf32> to vector<2x8x8xf32>
    %69 = arith.addf %67, %68 : vector<2x8x8xf32>
    %cst_23 = arith.constant dense<0xFF800000> : vector<2x8xf32>
    %70 = vector.multi_reduction <maximumf>, %69, %cst_23 [2] : vector<2x8x8xf32> to vector<2x8xf32>
    %71 = vector.shape_cast %70 : vector<2x8xf32> to vector<2x8x1xf32>
    %72 = arith.maximumf %58, %71 : vector<2x8x1xf32>
    %73 = arith.subf %58, %72 : vector<2x8x1xf32>
    %74 = math.exp %73 : vector<2x8x1xf32>
    %75 = vector.broadcast %72 : vector<2x8x1xf32> to vector<2x8x8xf32>
    %76 = arith.subf %69, %75 : vector<2x8x8xf32>
    %77 = math.exp %76 : vector<2x8x8xf32>
    %78 = arith.mulf %74, %59 : vector<2x8x1xf32>
    %cst_24 = arith.constant dense<0.000000e+00> : vector<2x8xf32>
    %79 = vector.multi_reduction <add>, %77, %cst_24 [2] : vector<2x8x8xf32> to vector<2x8xf32>
    %80 = vector.shape_cast %79 : vector<2x8xf32> to vector<2x8x1xf32>
    %81 = arith.addf %78, %80 : vector<2x8x1xf32>
    %82 = vector.broadcast %74 : vector<2x8x1xf32> to vector<2x8x16xf32>
    %83 = arith.mulf %82, %60 : vector<2x8x16xf32>
    %84 = arith.truncf %77 : vector<2x8x8xf32> to vector<2x8x8xbf16>
    "tpu.trace_start"() <{level = 10 : i32, message = "bqk,bkd->bqd"}> : () -> ()
    %cst_25 = arith.constant dense<0.000000e+00> : vector<2x8x16xf32>
    %85 = tpu.matmul %84, %62, %cst_25 {dimension_numbers = #tpu.dot_dimension_numbers<[2], [1], [1], [2], [0, 0, 0, 1, 1, 2], [0], [0]>} : vector<2x8x8xbf16>, vector<2x8x16xbf16>, vector<2x8x16xf32> -> vector<2x8x16xf32>
    "tpu.trace_stop"() : () -> ()
    %86 = arith.addf %83, %85 : vector<2x8x16xf32>
    %87 = tpu.reciprocal %81 {approx = true} : vector<2x8x1xf32> -> vector<2x8x1xf32>
    %88 = vector.broadcast %87 : vector<2x8x1xf32> to vector<2x8x16xf32>
    %89 = arith.mulf %86, %88 : vector<2x8x16xf32>
    %90 = vector.shape_cast %89 : vector<2x8x16xf32> to vector<16x16xf32>
    %c0_26 = arith.constant 0 : index
    %c0_27 = arith.constant 0 : index
    %91 = vector.load %arg11[%c0_26, %c0_27] : memref<16x32xf32, #tpu.memory_space<vmem>>, vector<16x16xf32>
    tpu.vector_store %arg11[%c0_26, %c0_27], %90 {strides = array<i32>} : memref<16x32xf32, #tpu.memory_space<vmem>>, vector<16x16xf32>,
    %92 = vector.extract_strided_slice %40 {offsets = [0, 48], sizes = [16, 16], strides = [1, 1]} : vector<16x96xf32> to vector<16x16xf32>
    %93 = vector.shape_cast %92 : vector<16x16xf32> to vector<2x8x16xf32>
    %94 = arith.truncf %93 : vector<2x8x16xf32> to vector<2x8x16xbf16>
    %95 = vector.extract_strided_slice %40 {offsets = [0, 64], sizes = [16, 16], strides = [1, 1]} : vector<16x96xf32> to vector<16x16xf32>
    %96 = vector.shape_cast %95 : vector<16x16xf32> to vector<2x8x16xf32>
    %97 = vector.extract_strided_slice %40 {offsets = [0, 80], sizes = [16, 16], strides = [1, 1]} : vector<16x96xf32> to vector<16x16xf32>
    %98 = vector.shape_cast %97 : vector<16x16xf32> to vector<2x8x16xf32>
    %cst_28 = arith.constant 0xFF800000 : f32
    %99 = vector.broadcast %cst_28 : f32 to vector<2x8x1xf32>
    %cst_29 = arith.constant 0.000000e+00 : f32
    %100 = vector.broadcast %cst_29 : f32 to vector<2x8x1xf32>
    %cst_30 = arith.constant 0.000000e+00 : f32
    %101 = vector.broadcast %cst_30 : f32 to vector<2x8x16xf32>
    %102 = arith.truncf %96 : vector<2x8x16xf32> to vector<2x8x16xbf16>
    %103 = arith.truncf %98 : vector<2x8x16xf32> to vector<2x8x16xbf16>
    "tpu.trace_start"() <{level = 10 : i32, message = "bqd,bkd->bqk"}> : () -> ()
    %cst_31 = arith.constant dense<0.000000e+00> : vector<2x8x8xf32>
    %104 = tpu.matmul %94, %102, %cst_31 {dimension_numbers = #tpu.dot_dimension_numbers<[2], [2], [1], [1], [0, 0, 0, 1, 1, 1], [0], [0]>} : vector<2x8x16xbf16>, vector<2x8x16xbf16>, vector<2x8x8xf32> -> vector<2x8x8xf32>
    "tpu.trace_stop"() : () -> ()
    %cst_32 = arith.constant 2.500000e-01 : f32
    %105 = vector.broadcast %cst_32 : f32 to vector<2x8x8xf32>
    %106 = arith.mulf %104, %105 : vector<2x8x8xf32>
    %107 = vector.broadcast %50 : vector<1x8x8xf32> to vector<2x8x8xf32>
    %108 = arith.addf %106, %107 : vector<2x8x8xf32>
    %109 = vector.broadcast %41 : vector<2x1x8xf32> to vector<2x8x8xf32>
    %110 = arith.addf %108, %109 : vector<2x8x8xf32>
    %cst_33 = arith.constant dense<0xFF800000> : vector<2x8xf32>
    %111 = vector.multi_reduction <maximumf>, %110, %cst_33 [2] : vector<2x8x8xf32> to vector<2x8xf32>
    %112 = vector.shape_cast %111 : vector<2x8xf32> to vector<2x8x1xf32>
    %113 = arith.maximumf %99, %112 : vector<2x8x1xf32>
    %114 = arith.subf %99, %113 : vector<2x8x1xf32>
    %115 = math.exp %114 : vector<2x8x1xf32>
    %116 = vector.broadcast %113 : vector<2x8x1xf32> to vector<2x8x8xf32>
    %117 = arith.subf %110, %116 : vector<2x8x8xf32>
    %118 = math.exp %117 : vector<2x8x8xf32>
    %119 = arith.mulf %115, %100 : vector<2x8x1xf32>
    %cst_34 = arith.constant dense<0.000000e+00> : vector<2x8xf32>
    %120 = vector.multi_reduction <add>, %118, %cst_34 [2] : vector<2x8x8xf32> to vector<2x8xf32>
    %121 = vector.shape_cast %120 : vector<2x8xf32> to vector<2x8x1xf32>
    %122 = arith.addf %119, %121 : vector<2x8x1xf32>
    %123 = vector.broadcast %115 : vector<2x8x1xf32> to vector<2x8x16xf32>
    %124 = arith.mulf %123, %101 : vector<2x8x16xf32>
    %125 = arith.truncf %118 : vector<2x8x8xf32> to vector<2x8x8xbf16>
    "tpu.trace_start"() <{level = 10 : i32, message = "bqk,bkd->bqd"}> : () -> ()
    %cst_35 = arith.constant dense<0.000000e+00> : vector<2x8x16xf32>
    %126 = tpu.matmul %125, %103, %cst_35 {dimension_numbers = #tpu.dot_dimension_numbers<[2], [1], [1], [2], [0, 0, 0, 1, 1, 2], [0], [0]>} : vector<2x8x8xbf16>, vector<2x8x16xbf16>, vector<2x8x16xf32> -> vector<2x8x16xf32>
    "tpu.trace_stop"() : () -> ()
    %127 = arith.addf %124, %126 : vector<2x8x16xf32>
    %128 = tpu.reciprocal %122 {approx = true} : vector<2x8x1xf32> -> vector<2x8x1xf32>
    %129 = vector.broadcast %128 : vector<2x8x1xf32> to vector<2x8x16xf32>
    %130 = arith.mulf %127, %129 : vector<2x8x16xf32>
    %131 = vector.shape_cast %130 : vector<2x8x16xf32> to vector<16x16xf32>
    %c0_36 = arith.constant 0 : index
    %c16 = arith.constant 16 : index
    %132 = vector.load %arg11[%c0_36, %c16] : memref<16x32xf32, #tpu.memory_space<vmem>>, vector<16x16xf32>
    tpu.vector_store %arg11[%c0_36, %c16], %131 {strides = array<i32>} : memref<16x32xf32, #tpu.memory_space<vmem>>, vector<16x16xf32>,
    %c0_37 = arith.constant 0 : index
    %c0_38 = arith.constant 0 : index
    %133 = vector.load %arg11[%c0_37, %c0_38] : memref<16x32xf32, #tpu.memory_space<vmem>>, vector<16x32xf32>
    %134 = arith.truncf %133 : vector<16x32xf32> to vector<16x32xbf16>
    %c0_39 = arith.constant 0 : index
    %c0_40 = arith.constant 0 : index
    %135 = vector.load %arg5[%c0_39, %c0_40] : memref<32x32xbf16, #tpu.memory_space<vmem>>, vector<32x32xbf16>
    %cst_41 = arith.constant dense<0.000000e+00> : vector<16x32xf32>
    %136 = tpu.matmul %134, %135, %cst_41 {dimension_numbers = #tpu.dot_dimension_numbers<[1], [0], [0], [1], [0, 0, 1, 1], [], []>} : vector<16x32xbf16>, vector<32x32xbf16>, vector<16x32xf32> -> vector<16x32xf32>
    %137 = arith.addf %12, %136 : vector<16x32xf32>
    %138 = vector.broadcast %3 : vector<1x32xf32> to vector<16x32xf32>
    %139 = arith.addf %137, %138 : vector<16x32xf32>
    %cst_42 = arith.constant dense<0.000000e+00> : vector<16xf32>
    %140 = vector.multi_reduction <add>, %139, %cst_42 [1] : vector<16x32xf32> to vector<16xf32>
    %141 = vector.shape_cast %140 : vector<16xf32> to vector<16x1xf32>
    %cst_43 = arith.constant 3.200000e+01 : f32
    %142 = vector.broadcast %cst_43 : f32 to vector<16x1xf32>
    %143 = arith.divf %141, %142 : vector<16x1xf32>
    %144 = vector.broadcast %143 : vector<16x1xf32> to vector<16x32xf32>
    %145 = arith.subf %139, %144 : vector<16x32xf32>
    %146 = arith.mulf %145, %145 : vector<16x32xf32>
    %cst_44 = arith.constant dense<0.000000e+00> : vector<16xf32>
    %147 = vector.multi_reduction <add>, %146, %cst_44 [1] : vector<16x32xf32> to vector<16xf32>
    %148 = vector.shape_cast %147 : vector<16xf32> to vector<16x1xf32>
    %cst_45 = arith.constant 3.200000e+01 : f32
    %149 = vector.broadcast %cst_45 : f32 to vector<16x1xf32>
    %150 = arith.divf %148, %149 : vector<16x1xf32>
    %151 = vector.broadcast %143 : vector<16x1xf32> to vector<16x32xf32>
    %152 = arith.subf %139, %151 : vector<16x32xf32>
    %cst_46 = arith.constant 9.99999974E-6 : f32
    %153 = vector.broadcast %cst_46 : f32 to vector<16x1xf32>
    %154 = arith.addf %150, %153 : vector<16x1xf32>
    %155 = math.rsqrt %154 : vector<16x1xf32>
    %156 = vector.broadcast %155 : vector<16x1xf32> to vector<16x32xf32>
    %157 = arith.mulf %152, %156 : vector<16x32xf32>
    %158 = vector.broadcast %4 : vector<1x32xf32> to vector<16x32xf32>
    %159 = arith.mulf %157, %158 : vector<16x32xf32>
    %160 = vector.broadcast %5 : vector<1x32xf32> to vector<16x32xf32>
    %161 = arith.addf %159, %160 : vector<16x32xf32>
    %162 = arith.truncf %161 : vector<16x32xf32> to vector<16x32xbf16>
    %c0_47 = arith.constant 0 : index
    %c0_48 = arith.constant 0 : index
    %163 = vector.load %arg6[%c0_47, %c0_48] : memref<32x128xbf16, #tpu.memory_space<vmem>>, vector<32x128xbf16>
    %cst_49 = arith.constant dense<0.000000e+00> : vector<16x128xf32>
    %164 = tpu.matmul %162, %163, %cst_49 {dimension_numbers = #tpu.dot_dimension_numbers<[1], [0], [0], [1], [0, 0, 1, 1], [], []>} : vector<16x32xbf16>, vector<32x128xbf16>, vector<16x128xf32> -> vector<16x128xf32>
    %c0_50 = arith.constant 0 : index
    %c0_51 = arith.constant 0 : index
    %165 = vector.load %arg7[%c0_50, %c0_51] : memref<1x128xf32, #tpu.memory_space<vmem>>, vector<1x128xf32>
    %166 = vector.broadcast %165 : vector<1x128xf32> to vector<16x128xf32>
    %167 = arith.addf %164, %166 : vector<16x128xf32>
    %cst_52 = arith.constant 5.000000e-01 : f32
    %168 = vector.broadcast %cst_52 : f32 to vector<16x128xf32>
    %169 = arith.mulf %168, %167 : vector<16x128xf32>
    %cst_53 = arith.constant 4.471500e-02 : f32
    %170 = vector.broadcast %cst_53 : f32 to vector<16x128xf32>
    %171 = arith.mulf %170, %167 : vector<16x128xf32>
    %172 = arith.mulf %171, %167 : vector<16x128xf32>
    %173 = arith.mulf %172, %167 : vector<16x128xf32>
    %174 = arith.addf %167, %173 : vector<16x128xf32>
    %cst_54 = arith.constant 0.797884583 : f32
    %175 = vector.broadcast %cst_54 : f32 to vector<16x128xf32>
    %176 = arith.mulf %175, %174 : vector<16x128xf32>
    %177 = math.tanh %176 : vector<16x128xf32>
    %cst_55 = arith.constant 1.000000e+00 : f32
    %178 = vector.broadcast %cst_55 : f32 to vector<16x128xf32>
    %179 = arith.addf %178, %177 : vector<16x128xf32>
    %180 = arith.mulf %169, %179 : vector<16x128xf32>
    %181 = arith.truncf %180 : vector<16x128xf32> to vector<16x128xbf16>
    %c0_56 = arith.constant 0 : index
    %c0_57 = arith.constant 0 : index
    %182 = vector.load %arg8[%c0_56, %c0_57] : memref<128x32xbf16, #tpu.memory_space<vmem>>, vector<128x32xbf16>
    %cst_58 = arith.constant dense<0.000000e+00> : vector<16x32xf32>
    %183 = tpu.matmul %181, %182, %cst_58 {dimension_numbers = #tpu.dot_dimension_numbers<[1], [0], [0], [1], [0, 0, 1, 1], [], []>} : vector<16x128xbf16>, vector<128x32xbf16>, vector<16x32xf32> -> vector<16x32xf32>
    %184 = arith.addf %139, %183 : vector<16x32xf32>
    %185 = vector.broadcast %6 : vector<1x32xf32> to vector<16x32xf32>
    %186 = arith.addf %184, %185 : vector<16x32xf32>
    %cst_59 = arith.constant dense<0.000000e+00> : vector<16xf32>
    %187 = vector.multi_reduction <add>, %186, %cst_59 [1] : vector<16x32xf32> to vector<16xf32>
    %188 = vector.shape_cast %187 : vector<16xf32> to vector<16x1xf32>
    %cst_60 = arith.constant 3.200000e+01 : f32
    %189 = vector.broadcast %cst_60 : f32 to vector<16x1xf32>
    %190 = arith.divf %188, %189 : vector<16x1xf32>
    %191 = vector.broadcast %190 : vector<16x1xf32> to vector<16x32xf32>
    %192 = arith.subf %186, %191 : vector<16x32xf32>
    %193 = arith.mulf %192, %192 : vector<16x32xf32>
    %cst_61 = arith.constant dense<0.000000e+00> : vector<16xf32>
    %194 = vector.multi_reduction <add>, %193, %cst_61 [1] : vector<16x32xf32> to vector<16xf32>
    %195 = vector.shape_cast %194 : vector<16xf32> to vector<16x1xf32>
    %cst_62 = arith.constant 3.200000e+01 : f32
    %196 = vector.broadcast %cst_62 : f32 to vector<16x1xf32>
    %197 = arith.divf %195, %196 : vector<16x1xf32>
    %198 = vector.broadcast %190 : vector<16x1xf32> to vector<16x32xf32>
    %199 = arith.subf %186, %198 : vector<16x32xf32>
    %cst_63 = arith.constant 9.99999974E-6 : f32
    %200 = vector.broadcast %cst_63 : f32 to vector<16x1xf32>
    %201 = arith.addf %197, %200 : vector<16x1xf32>
    %202 = math.rsqrt %201 : vector<16x1xf32>
    %203 = vector.broadcast %202 : vector<16x1xf32> to vector<16x32xf32>
    %204 = arith.mulf %199, %203 : vector<16x32xf32>
    %205 = vector.broadcast %7 : vector<1x32xf32> to vector<16x32xf32>
    %206 = arith.mulf %204, %205 : vector<16x32xf32>
    %207 = vector.broadcast %8 : vector<1x32xf32> to vector<16x32xf32>
    %208 = arith.addf %206, %207 : vector<16x32xf32>
    %209 = vector.shape_cast %208 : vector<16x32xf32> to vector<2x8x32xf32>
    %210 = vector.shape_cast %9 : vector<1x32xf32> to vector<1x1x32xf32>
    %211 = vector.broadcast %210 : vector<1x1x32xf32> to vector<2x8x32xf32>
    %212 = arith.mulf %209, %211 : vector<2x8x32xf32>
    %cst_64 = arith.constant dense<0.000000e+00> : vector<2x8xf32>
    %213 = vector.multi_reduction <add>, %212, %cst_64 [2] : vector<2x8x32xf32> to vector<2x8xf32>
    %c0_65 = arith.constant 0 : index
    %c0_66 = arith.constant 0 : index
    %c0_67 = arith.constant 0 : index
    %214 = vector.load %arg10[%c0_65, %c0_66, %c0_67] : memref<2x1x8xf32, #tpu.memory_space<vmem>>, vector<2x1x8xf32>
    %215 = vector.shape_cast %214 : vector<2x1x8xf32> to vector<2x8xf32>
    %216 = vector.shape_cast %213 : vector<2x8xf32> to vector<2x1x8xf32>
    tpu.vector_store %arg10[%c0_65, %c0_66, %c0_67], %216 {strides = array<i32>} : memref<2x1x8xf32, #tpu.memory_space<vmem>>, vector<2x1x8xf32>,
    return
  }
  func.func @transform_0(%arg0: i32) -> (i32, i32, i32) {
    %c0_i32 = arith.constant 0 : i32
    %c0_i32_0 = arith.constant 0 : i32
    %c0_i32_1 = arith.constant 0 : i32
    return %arg0, %c0_i32, %c0_i32_0 : i32, i32, i32
  }
  func.func @transform_1(%arg0: i32) -> (i32, i32, i32) {
    %c0_i32 = arith.constant 0 : i32
    %c0_i32_0 = arith.constant 0 : i32
    %c0_i32_1 = arith.constant 0 : i32
    return %arg0, %c0_i32, %c0_i32_0 : i32, i32, i32
  }
  func.func @transform_2(%arg0: i32) -> (i32, i32) {
    %c0_i32 = arith.constant 0 : i32
    %c0_i32_0 = arith.constant 0 : i32
    %c0_i32_1 = arith.constant 0 : i32
    return %c0_i32, %c0_i32_0 : i32, i32
  }
  func.func @transform_3(%arg0: i32) -> (i32, i32) {
    %c0_i32 = arith.constant 0 : i32
    %c0_i32_0 = arith.constant 0 : i32
    %c0_i32_1 = arith.constant 0 : i32
    return %c0_i32, %c0_i32_0 : i32, i32
  }
  func.func @transform_4(%arg0: i32) -> (i32, i32) {
    %c0_i32 = arith.constant 0 : i32
    %c0_i32_0 = arith.constant 0 : i32
    %c0_i32_1 = arith.constant 0 : i32
    return %c0_i32, %c0_i32_0 : i32, i32
  }
  func.func @transform_5(%arg0: i32) -> (i32, i32) {
    %c0_i32 = arith.constant 0 : i32
    %c0_i32_0 = arith.constant 0 : i32
    %c0_i32_1 = arith.constant 0 : i32
    return %c0_i32, %c0_i32_0 : i32, i32
  }
  func.func @transform_6(%arg0: i32) -> (i32, i32) {
    %c0_i32 = arith.constant 0 : i32
    %c0_i32_0 = arith.constant 0 : i32
    %c0_i32_1 = arith.constant 0 : i32
    return %c0_i32, %c0_i32_0 : i32, i32
  }
  func.func @transform_7(%arg0: i32) -> (i32, i32) {
    %c0_i32 = arith.constant 0 : i32
    %c0_i32_0 = arith.constant 0 : i32
    %c0_i32_1 = arith.constant 0 : i32
    return %c0_i32, %c0_i32_0 : i32, i32
  }
  func.func @transform_8(%arg0: i32) -> (i32, i32) {
    %c0_i32 = arith.constant 0 : i32
    %c0_i32_0 = arith.constant 0 : i32
    %c0_i32_1 = arith.constant 0 : i32
    return %c0_i32, %c0_i32_0 : i32, i32
  }
  func.func @transform_9(%arg0: i32) -> (i32, i32, i32) {
    %c0_i32 = arith.constant 0 : i32
    %c0_i32_0 = arith.constant 0 : i32
    %c0_i32_1 = arith.constant 0 : i32
    return %arg0, %c0_i32, %c0_i32_0 : i32, i32, i32
  }
}

</mosaic_0001>

<llo_original>
// kernel: tpu_custom_call.1
$region0: #{tpu_custom_call.1}
  #allocation0 [shape = 'u32[]', space=smem, size = 0x4, offset = 0x4, fixed_abs, tag = 'smem constant byte address 0x4 - core index']
  #allocation1 [shape = 'u32[144,128]{1,0:T(1,128)}', space=vmem, size = 0x12000, scoped, tag = 'internal scratch']
  #allocation2 [shape = 'f32[16,32]{1,0:T(8,128)}', space=vmem, size = 0x2000, scoped, tag = 'scratch operand']
  %s0 = inlined_call_operand.vmem [shape: bf16[2,8,32], index: 0, kind: input, shape index: {}]
  %s1 = inlined_call_operand.vmem [shape: f32[2,1,8], index: 1, kind: input, shape index: {}]
  %s2 = inlined_call_operand.vmem [shape: bf16[32,96], index: 2, kind: input, shape index: {}]
  %s3 = inlined_call_operand.vmem [shape: f32[1,96], index: 3, kind: input, shape index: {}]
  %s4 = inlined_call_operand.vmem [shape: bf16[32,32], index: 4, kind: input, shape index: {}]
  %s5 = inlined_call_operand.vmem [shape: bf16[32,128], index: 5, kind: input, shape index: {}]
  %s6 = inlined_call_operand.vmem [shape: f32[1,128], index: 6, kind: input, shape index: {}]
  %s7 = inlined_call_operand.vmem [shape: bf16[128,32], index: 7, kind: input, shape index: {}]
  %s8 = inlined_call_operand.vmem [shape: f32[9,32], index: 8, kind: input, shape index: {}]
  %s9 = inlined_call_operand.hbm [shape: f32[2,1,8], index: 9, kind: output, shape index: {}]
  %s10 = sld [smem:[#allocation0]]
  $region46: #{tpu_custom_call.1} parent=0
    _
  %s12 = ssub.s32 1, %s10
  %s13 = scalar_select 0, %s12, %s10
  $region1: #{tpu_custom_call.1} parent=0
    #allocation3 [shape = 'u8[1024]{0}', space=vmem, size = 0x400, scoped, tag = 'output window, operand 0, single buffered']
    #allocation4 [shape = 's32[1]{0}', space=sflag, size = 0x4, scoped, tag = 'scoped memory for tpu_custom_call.1']
    %14 = vsyncpa [#allocation4], 0
    // Predicated region
    $region2: #{tpu_custom_call.1} parent=1 // pred_check
      _
    $region3: #{tpu_custom_call.1} parent=1 // pred_check_branch
      %16 = sbr.rel (0) target = $region5
    $region4: #{tpu_custom_call.1} parent=1 // pred_region
      _
    $region5: #{tpu_custom_call.1} parent=1 // pred_fallthru
      _
    // Predicated region
    $region6: #{tpu_custom_call.1} parent=1 // pred_check
      _
    $region7: #{tpu_custom_call.1} parent=1 // pred_check_branch
      %18 = sbr.rel (0) target = $region9
    $region8: #{tpu_custom_call.1} parent=1 // pred_region
      _
    $region9: #{tpu_custom_call.1} parent=1 // pred_fallthru
      _
    // Predicated region
    $region10: #{tpu_custom_call.1} parent=1 // pred_check
      _
    $region11: #{tpu_custom_call.1} parent=1 // pred_check_branch
      %20 = sbr.rel (0) target = $region13
    $region12: #{tpu_custom_call.1} parent=1 // pred_region
      _
    $region13: #{tpu_custom_call.1} parent=1 // pred_fallthru
      _
    // Predicated region
    $region14: #{tpu_custom_call.1} parent=1 // pred_check
      _
    $region15: #{tpu_custom_call.1} parent=1 // pred_check_branch
      %22 = sbr.rel (0) target = $region17
    $region16: #{tpu_custom_call.1} parent=1 // pred_region
      _
    $region17: #{tpu_custom_call.1} parent=1 // pred_fallthru
      _
    // Predicated region
    $region18: #{tpu_custom_call.1} parent=1 // pred_check
      _
    $region19: #{tpu_custom_call.1} parent=1 // pred_check_branch
      %24 = sbr.rel (0) target = $region21
    $region20: #{tpu_custom_call.1} parent=1 // pred_region
      _
    $region21: #{tpu_custom_call.1} parent=1 // pred_fallthru
      _
    // Predicated region
    $region22: #{tpu_custom_call.1} parent=1 // pred_check
      _
    $region23: #{tpu_custom_call.1} parent=1 // pred_check_branch
      %26 = sbr.rel (0) target = $region25
    $region24: #{tpu_custom_call.1} parent=1 // pred_region
      _
    $region25: #{tpu_custom_call.1} parent=1 // pred_fallthru
      _
    // Predicated region
    $region26: #{tpu_custom_call.1} parent=1 // pred_check
      _
    $region27: #{tpu_custom_call.1} parent=1 // pred_check_branch
      %28 = sbr.rel (0) target = $region29
    $region28: #{tpu_custom_call.1} parent=1 // pred_region
      _
    $region29: #{tpu_custom_call.1} parent=1 // pred_fallthru
      _
    // Predicated region
    $region30: #{tpu_custom_call.1} parent=1 // pred_check
      _
    $region31: #{tpu_custom_call.1} parent=1 // pred_check_branch
      %30 = sbr.rel (0) target = $region33
    $region32: #{tpu_custom_call.1} parent=1 // pred_region
      _
    $region33: #{tpu_custom_call.1} parent=1 // pred_fallthru
      _
    // Predicated region
    $region34: #{tpu_custom_call.1} parent=1 // pred_check
      _
    $region35: #{tpu_custom_call.1} parent=1 // pred_check_branch
      %32 = sbr.rel (0) target = $region37
    $region36: #{tpu_custom_call.1} parent=1 // pred_region
      _
    $region37: #{tpu_custom_call.1} parent=1 // pred_fallthru
      _
    %v34 = vld [vmem:[%s8] sm:$0xff]
    %v35 = vld [vmem:[%s8 + $0x8] sm:$0x1]
    %v36 = vld [vmem:[%s0] sm:$0xf]
    %v37 = vld [vmem:[%s0 + $0x4] sm:$0xf]
    %v38 = vunpack.c.l.bf16 %v36
    %v39 = vunpack.c.l.bf16 %v37
    %vm40 = vcmask 261120
    %v41 = vsel %vm40, %v38, 0.0
    %42 = vadd.xlane.f32.xlu0 %v41
    %v43 = vpop.xlane.xlu0 %42
    %v44 = vsel %vm40, %v39, 0.0
    %45 = vadd.xlane.f32.xlu0 %v44
    %v46 = vpop.xlane.xlu0 %45
    %v47 = vrcp.pop 32.0
    %v48 = vmul.f32 %v43, %v47
    %v49 = vmul.f32 %v46, %v47
    %v50 = vsub.f32 %v38, %v48
    %v51 = vsub.f32 %v39, %v49
    %v52 = vmul.f32 %v50, %v50
    %v53 = vmul.f32 %v51, %v51
    %v54 = vsel %vm40, %v52, 0.0
    %55 = vadd.xlane.f32.xlu0 %v54
    %v56 = vpop.xlane.xlu0 %55
    %v57 = vsel %vm40, %v53, 0.0
    %58 = vadd.xlane.f32.xlu0 %v57
    %v59 = vpop.xlane.xlu0 %58
    %v60 = vmul.f32 %v56, %v47
    %v61 = vmul.f32 %v59, %v47
    %v62 = vadd.f32 %v60, 1e-05
    %v63 = vadd.f32 %v61, 1e-05
    %v64 = vrsqrt.pop %v62
    %v65 = vrsqrt.pop %v63
    %v66 = vmul.f32 %v50, %v64
    %v67 = vmul.f32 %v51, %v65
    %v68 = vlaneseq
    %v69 = vshrl.u32 %v68, 7
    %v70 = vsub.s32 0, %v69
    %v71 = vrot.slane %v34, %v70
    %v72 = vmul.f32 %v66, %v71
    %v73 = vmul.f32 %v67, %v71
    %v74 = vlaneseq
    %v75 = vshrl.u32 %v74, 7
    %v76 = vsub.s32 1, %v75
    %v77 = vrot.slane %v34, %v76
    %v78 = vadd.f32 %v72, %v77
    %v79 = vadd.f32 %v73, %v77
    %v80 = vpack.c.bf16 %v79, %v78
    %v81 = vld [vmem:[%s2] sm:$0xf]
    %v82 = vld [vmem:[%s2 + $0x4] sm:$0xf]
    %v83 = vld [vmem:[%s2 + $0x8] sm:$0xf]
    %v84 = vld [vmem:[%s2 + $0xc] sm:$0xf]
    %v85 = vld [vmem:[%s3] sm:$0x1]
    %v87 = vlaneseq
    %v88 = vshrl.u32 %v87, 7
    %v89 = vsub.s32 0, %v88
    %v90 = vrot.slane %v85, %v89
    %v96 = vunpack.c.l.b16 %v81
    %v97 = vunpack.c.l.b16 %v82
    %v98 = vunpack.c.l.b16 %v83
    %v99 = vunpack.c.l.b16 %v84
    %v100 = vpack.c.b16 %v97, %v96
    %v101 = vpack.c.b16 %v99, %v98
    %v105 = vsel %vm40, %v80, 0
    %107 = vmatprep.subr.bf16.mxu0 0
    %108 = vmatpush1.bf16.msra.mxu0 %v100
    %109 = vmatprep.subr.bf16.mxu0 0
    %110 = vmatpush1.bf16.msra.mxu0 %v101
    %111 = vmatprep.subr.bf16.mxu0 0
    %112 = vmatpush1.bf16.msra.mxu0 0
    %113 = vmatprep.subr.bf16.mxu0 0
    %114 = vmatpush1.bf16.msra.mxu0 0
    %115 = vmatprep.subr.bf16.mxu0 0
    %116 = vmatpush1.bf16.msra.mxu0 0
    %117 = vmatprep.subr.bf16.mxu0 0
    %118 = vmatpush1.bf16.msra.mxu0 0
    %119 = vmatprep.subr.bf16.mxu0 0
    %120 = vmatpush1.bf16.msra.mxu0 0
    %121 = vmatprep.subr.bf16.mxu0 0
    %122 = vmatpush1.bf16.msra.mxu0 0
    %123 = vmatprep.subr.bf16.mxu0 0
    %124 = vmatpush1.bf16.msra.mxu0 0
    %125 = vmatprep.subr.bf16.mxu0 0
    %126 = vmatpush1.bf16.msra.mxu0 0
    %127 = vmatprep.subr.bf16.mxu0 0
    %128 = vmatpush1.bf16.msra.mxu0 0
    %129 = vmatprep.subr.bf16.mxu0 0
    %130 = vmatpush1.bf16.msra.mxu0 0
    %131 = vmatprep.subr.bf16.mxu0 0
    %132 = vmatpush1.bf16.msra.mxu0 0
    %133 = vmatprep.subr.bf16.mxu0 0
    %134 = vmatpush1.bf16.msra.mxu0 0
    %135 = vmatprep.subr.bf16.mxu0 0
    %136 = vmatpush1.bf16.msra.mxu0 0
    %137 = vmatprep.subr.bf16.mxu0 0
    %138 = vmatpush1.bf16.msra.mxu0 0
    %139 = vmatprep.mubr.bf16.mxu0 0
    %140 = vmatmul.mubr.bf16.gmra.mrb[0].mxu0 %v105
    %v141 = vpop.f32.mrb[0].mxu0
    %v142 = vadd.f32 %v90, %v141
    %v143 = vpop.f32.mrb[0].mxu0
    %v144 = vpop.f32.mrb[0].mxu0
    %v145 = vadd.f32 %v90, %v144
    %v146 = vpop.f32.mrb[0].mxu0
    %147 = vdwg.mxu0
    %v148 = vld [vmem:[%s1] sm:$0x1]
    %v149 = vld [vmem:[%s1 + $0x1] sm:$0x1]
    %v150 = vlaneseq
    %v151 = vshrl.u32 %v150, 7
    %v152 = vlaneseq
    %v153 = vand.u32 %v152, 127
    %vm154 = vcmp.ge.s32.totalorder %v151, %v153
    %v155 = vsel %vm154, 0.0, -1e+09
    %v156 = vpack.c.bf16 %v142, %v142
    %v157 = vpack.c.bf16 %v145, %v145
    %159 = vrot.lane.b32.xlu0 %v156, 112
    %v160 = vpop.permute.xlu0 %159
    %vm161 = vcmask 130048
    %v163 = vsel %vm161, %v156, 0
    %v166 = vsel %vm161, %v160, 0
    %168 = vmatprep.subr.bf16.mxu0 0
    %169 = vmatpush1.bf16.xpose.msra.mxu0 %v166
    %170 = vmatprep.subr.bf16.mxu0 0
    %171 = vmatpush1.bf16.xpose.msra.mxu0 0
    %172 = vmatprep.subr.bf16.mxu0 0
    %173 = vmatpush1.bf16.xpose.msra.mxu0 0
    %174 = vmatprep.subr.bf16.mxu0 0
    %175 = vmatpush1.bf16.xpose.msra.mxu0 0
    %176 = vmatprep.subr.bf16.mxu0 0
    %177 = vmatpush1.bf16.xpose.msra.mxu0 0
    %178 = vmatprep.subr.bf16.mxu0 0
    %179 = vmatpush1.bf16.xpose.msra.mxu0 0
    %180 = vmatprep.subr.bf16.mxu0 0
    %181 = vmatpush1.bf16.xpose.msra.mxu0 0
    %182 = vmatprep.subr.bf16.mxu0 0
    %183 = vmatpush1.bf16.xpose.msra.mxu0 0
    %184 = vmatprep.subr.bf16.mxu0 0
    %185 = vmatpush1.bf16.xpose.msra.mxu0 0
    %186 = vmatprep.subr.bf16.mxu0 0
    %187 = vmatpush1.bf16.xpose.msra.mxu0 0
    %188 = vmatprep.subr.bf16.mxu0 0
    %189 = vmatpush1.bf16.xpose.msra.mxu0 0
    %190 = vmatprep.subr.bf16.mxu0 0
    %191 = vmatpush1.bf16.xpose.msra.mxu0 0
    %192 = vmatprep.subr.bf16.mxu0 0
    %193 = vmatpush1.bf16.xpose.msra.mxu0 0
    %194 = vmatprep.subr.bf16.mxu0 0
    %195 = vmatpush1.bf16.xpose.msra.mxu0 0
    %196 = vmatprep.subr.bf16.mxu0 0
    %197 = vmatpush1.bf16.xpose.msra.mxu0 0
    %198 = vmatprep.subr.bf16.mxu0 0
    %199 = vmatpush1.bf16.xpose.msra.mxu0 0
    %200 = vmatprep.mubr.bf16.mxu0 0
    %201 = vmatmul.mubr.bf16.gmra.mrb[0].mxu0 %v163
    %v202 = vpop.f32.mrb[0].mxu0
    %v203 = vadd.f32 0.0, %v202
    %v204 = vpop.f32.mrb[0].mxu0
    %v205 = vpop.f32.mrb[0].mxu0
    %v206 = vpop.f32.mrb[0].mxu0
    %207 = vdwg.mxu0
    %209 = vrot.lane.b32.xlu0 %v157, 112
    %v210 = vpop.permute.xlu0 %209
    %v212 = vsel %vm161, %v157, 0
    %v215 = vsel %vm161, %v210, 0
    %217 = vmatprep.subr.bf16.mxu0 0
    %218 = vmatpush1.bf16.xpose.msra.mxu0 %v215
    %219 = vmatprep.subr.bf16.mxu0 0
    %220 = vmatpush1.bf16.xpose.msra.mxu0 0
    %221 = vmatprep.subr.bf16.mxu0 0
    %222 = vmatpush1.bf16.xpose.msra.mxu0 0
    %223 = vmatprep.subr.bf16.mxu0 0
    %224 = vmatpush1.bf16.xpose.msra.mxu0 0
    %225 = vmatprep.subr.bf16.mxu0 0
    %226 = vmatpush1.bf16.xpose.msra.mxu0 0
    %227 = vmatprep.subr.bf16.mxu0 0
    %228 = vmatpush1.bf16.xpose.msra.mxu0 0
    %229 = vmatprep.subr.bf16.mxu0 0
    %230 = vmatpush1.bf16.xpose.msra.mxu0 0
    %231 = vmatprep.subr.bf16.mxu0 0
    %232 = vmatpush1.bf16.xpose.msra.mxu0 0
    %233 = vmatprep.subr.bf16.mxu0 0
    %234 = vmatpush1.bf16.xpose.msra.mxu0 0
    %235 = vmatprep.subr.bf16.mxu0 0
    %236 = vmatpush1.bf16.xpose.msra.mxu0 0
    %237 = vmatprep.subr.bf16.mxu0 0
    %238 = vmatpush1.bf16.xpose.msra.mxu0 0
    %239 = vmatprep.subr.bf16.mxu0 0
    %240 = vmatpush1.bf16.xpose.msra.mxu0 0
    %241 = vmatprep.subr.bf16.mxu0 0
    %242 = vmatpush1.bf16.xpose.msra.mxu0 0
    %243 = vmatprep.subr.bf16.mxu0 0
    %244 = vmatpush1.bf16.xpose.msra.mxu0 0
    %245 = vmatprep.subr.bf16.mxu0 0
    %246 = vmatpush1.bf16.xpose.msra.mxu0 0
    %247 = vmatprep.subr.bf16.mxu0 0
    %248 = vmatpush1.bf16.xpose.msra.mxu0 0
    %249 = vmatprep.mubr.bf16.mxu0 0
    %250 = vmatmul.mubr.bf16.gmra.mrb[0].mxu0 %v212
    %v251 = vpop.f32.mrb[0].mxu0
    %v252 = vadd.f32 0.0, %v251
    %v253 = vpop.f32.mrb[0].mxu0
    %v254 = vpop.f32.mrb[0].mxu0
    %v255 = vpop.f32.mrb[0].mxu0
    %256 = vdwg.mxu0
    %v257 = vmul.f32 %v203, 0.25
    %v258 = vmul.f32 %v252, 0.25
    %v259 = vadd.f32 %v257, %v155
    %v260 = vadd.f32 %v258, %v155
    %v263 = vlaneseq
    %v264 = vshrl.u32 %v263, 7
    %v265 = vsub.s32 0, %v264
    %v266 = vrot.slane %v148, %v265
    %v267 = vlaneseq
    %v268 = vshrl.u32 %v267, 7
    %v269 = vsub.s32 0, %v268
    %v270 = vrot.slane %v149, %v269
    %v273 = vadd.f32 %v259, %v266
    %v274 = vadd.f32 %v260, %v270
    %vm275 = vcmask 64512
    %v276 = vsel %vm275, %v273, -inf
    %277 = vmax.xlane.f32.xlu0 %v276
    %v278 = vpop.xlane.xlu0 %277
    %v279 = vsel %vm275, %v274, -inf
    %280 = vmax.xlane.f32.xlu0 %v279
    %v281 = vpop.xlane.xlu0 %280
    %v282 = vsub.f32 -inf, %v278
    %v283 = vsub.f32 -inf, %v281
    %v284 = vmul.f32 %v282, 1.442695
    %v285 = vpow.pop %v284
    %v286 = vmul.f32 %v283, 1.442695
    %v287 = vpow.pop %v286
    %v288 = vsub.f32 %v273, %v278
    %v289 = vsub.f32 %v274, %v281
    %v290 = vmul.f32 %v288, 1.442695
    %v291 = vpow.pop %v290
    %v292 = vmul.f32 %v289, 1.442695
    %v293 = vpow.pop %v292
    %v294 = vmul.f32 %v285, 0.0
    %v295 = vmul.f32 %v287, 0.0
    %v296 = vsel %vm275, %v291, 0.0
    %297 = vadd.xlane.f32.xlu0 %v296
    %v298 = vpop.xlane.xlu0 %297
    %v299 = vsel %vm275, %v293, 0.0
    %300 = vadd.xlane.f32.xlu0 %v299
    %v301 = vpop.xlane.xlu0 %300
    %v302 = vadd.f32 %v294, %v298
    %v303 = vadd.f32 %v295, %v301
    %v304 = vpack.c.bf16 %v291, %v291
    %v305 = vpack.c.bf16 %v293, %v293
    %306 = vrot.lane.b32.xlu0 %v156, 96
    %v307 = vpop.permute.xlu0 %306
    %v309 = vsel %vm275, %v304, 0
    %vm311 = vcmask 1043456
    %v313 = vsel %vm311, %v307, 0
    %315 = vmatprep.subr.bf16.mxu0 0
    %316 = vmatpush1.bf16.msra.mxu0 %v313
    %317 = vmatprep.subr.bf16.mxu0 0
    %318 = vmatpush1.bf16.msra.mxu0 0
    %319 = vmatprep.subr.bf16.mxu0 0
    %320 = vmatpush1.bf16.msra.mxu0 0
    %321 = vmatprep.subr.bf16.mxu0 0
    %322 = vmatpush1.bf16.msra.mxu0 0
    %323 = vmatprep.subr.bf16.mxu0 0
    %324 = vmatpush1.bf16.msra.mxu0 0
    %325 = vmatprep.subr.bf16.mxu0 0
    %326 = vmatpush1.bf16.msra.mxu0 0
    %327 = vmatprep.subr.bf16.mxu0 0
    %328 = vmatpush1.bf16.msra.mxu0 0
    %329 = vmatprep.subr.bf16.mxu0 0
    %330 = vmatpush1.bf16.msra.mxu0 0
    %331 = vmatprep.subr.bf16.mxu0 0
    %332 = vmatpush1.bf16.msra.mxu0 0
    %333 = vmatprep.subr.bf16.mxu0 0
    %334 = vmatpush1.bf16.msra.mxu0 0
    %335 = vmatprep.subr.bf16.mxu0 0
    %336 = vmatpush1.bf16.msra.mxu0 0
    %337 = vmatprep.subr.bf16.mxu0 0
    %338 = vmatpush1.bf16.msra.mxu0 0
    %339 = vmatprep.subr.bf16.mxu0 0
    %340 = vmatpush1.bf16.msra.mxu0 0
    %341 = vmatprep.subr.bf16.mxu0 0
    %342 = vmatpush1.bf16.msra.mxu0 0
    %343 = vmatprep.subr.bf16.mxu0 0
    %344 = vmatpush1.bf16.msra.mxu0 0
    %345 = vmatprep.subr.bf16.mxu0 0
    %346 = vmatpush1.bf16.msra.mxu0 0
    %347 = vmatprep.mubr.bf16.mxu0 0
    %348 = vmatmul.mubr.bf16.gmra.mrb[0].mxu0 %v309
    %v349 = vpop.f32.mrb[0].mxu0
    %v350 = vadd.f32 0.0, %v349
    %v351 = vpop.f32.mrb[0].mxu0
    %v352 = vpop.f32.mrb[0].mxu0
    %v353 = vpop.f32.mrb[0].mxu0
    %354 = vdwg.mxu0
    %355 = vrot.lane.b32.xlu0 %v157, 96
    %v356 = vpop.permute.xlu0 %355
    %v358 = vsel %vm275, %v305, 0
    %v361 = vsel %vm311, %v356, 0
    %363 = vmatprep.subr.bf16.mxu0 0
    %364 = vmatpush1.bf16.msra.mxu0 %v361
    %365 = vmatprep.subr.bf16.mxu0 0
    %366 = vmatpush1.bf16.msra.mxu0 0
    %367 = vmatprep.subr.bf16.mxu0 0
    %368 = vmatpush1.bf16.msra.mxu0 0
    %369 = vmatprep.subr.bf16.mxu0 0
    %370 = vmatpush1.bf16.msra.mxu0 0
    %371 = vmatprep.subr.bf16.mxu0 0
    %372 = vmatpush1.bf16.msra.mxu0 0
    %373 = vmatprep.subr.bf16.mxu0 0
    %374 = vmatpush1.bf16.msra.mxu0 0
    %375 = vmatprep.subr.bf16.mxu0 0
    %376 = vmatpush1.bf16.msra.mxu0 0
    %377 = vmatprep.subr.bf16.mxu0 0
    %378 = vmatpush1.bf16.msra.mxu0 0
    %379 = vmatprep.subr.bf16.mxu0 0
    %380 = vmatpush1.bf16.msra.mxu0 0
    %381 = vmatprep.subr.bf16.mxu0 0
    %382 = vmatpush1.bf16.msra.mxu0 0
    %383 = vmatprep.subr.bf16.mxu0 0
    %384 = vmatpush1.bf16.msra.mxu0 0
    %385 = vmatprep.subr.bf16.mxu0 0
    %386 = vmatpush1.bf16.msra.mxu0 0
    %387 = vmatprep.subr.bf16.mxu0 0
    %388 = vmatpush1.bf16.msra.mxu0 0
    %389 = vmatprep.subr.bf16.mxu0 0
    %390 = vmatpush1.bf16.msra.mxu0 0
    %391 = vmatprep.subr.bf16.mxu0 0
    %392 = vmatpush1.bf16.msra.mxu0 0
    %393 = vmatprep.subr.bf16.mxu0 0
    %394 = vmatpush1.bf16.msra.mxu0 0
    %395 = vmatprep.mubr.bf16.mxu0 0
    %396 = vmatmul.mubr.bf16.gmra.mrb[0].mxu0 %v358
    %v397 = vpop.f32.mrb[0].mxu0
    %v398 = vadd.f32 0.0, %v397
    %v399 = vpop.f32.mrb[0].mxu0
    %v400 = vpop.f32.mrb[0].mxu0
    %v401 = vpop.f32.mrb[0].mxu0
    %402 = vdwg.mxu0
    %v403 = vadd.f32 %v294, %v350
    %v404 = vadd.f32 %v295, %v398
    %v405 = vrcp.pop %v302
    %v406 = vrcp.pop %v303
    %v407 = vmul.f32 %v403, %v405
    %v408 = vmul.f32 %v404, %v406
    %409 = vst.msk [vmem:[#allocation2] sm:$0xff] %vm161, %v407
    %410 = vst.msk [vmem:[#allocation2 + $0x8] sm:$0xff] %vm161, %v408
    %411 = vrot.lane.b32.xlu0 %v156, 80
    %v412 = vpop.permute.xlu0 %411
    %413 = vrot.lane.b32.xlu0 %v156, 64
    %v414 = vpop.permute.xlu0 %413
    %v416 = vsel %vm161, %v412, 0
    %v419 = vsel %vm161, %v414, 0
    %421 = vmatprep.subr.bf16.mxu0 0
    %422 = vmatpush1.bf16.xpose.msra.mxu0 %v419
    %423 = vmatprep.subr.bf16.mxu0 0
    %424 = vmatpush1.bf16.xpose.msra.mxu0 0
    %425 = vmatprep.subr.bf16.mxu0 0
    %426 = vmatpush1.bf16.xpose.msra.mxu0 0
    %427 = vmatprep.subr.bf16.mxu0 0
    %428 = vmatpush1.bf16.xpose.msra.mxu0 0
    %429 = vmatprep.subr.bf16.mxu0 0
    %430 = vmatpush1.bf16.xpose.msra.mxu0 0
    %431 = vmatprep.subr.bf16.mxu0 0
    %432 = vmatpush1.bf16.xpose.msra.mxu0 0
    %433 = vmatprep.subr.bf16.mxu0 0
    %434 = vmatpush1.bf16.xpose.msra.mxu0 0
    %435 = vmatprep.subr.bf16.mxu0 0
    %436 = vmatpush1.bf16.xpose.msra.mxu0 0
    %437 = vmatprep.subr.bf16.mxu0 0
    %438 = vmatpush1.bf16.xpose.msra.mxu0 0
    %439 = vmatprep.subr.bf16.mxu0 0
    %440 = vmatpush1.bf16.xpose.msra.mxu0 0
    %441 = vmatprep.subr.bf16.mxu0 0
    %442 = vmatpush1.bf16.xpose.msra.mxu0 0
    %443 = vmatprep.subr.bf16.mxu0 0
    %444 = vmatpush1.bf16.xpose.msra.mxu0 0
    %445 = vmatprep.subr.bf16.mxu0 0
    %446 = vmatpush1.bf16.xpose.msra.mxu0 0
    %447 = vmatprep.subr.bf16.mxu0 0
    %448 = vmatpush1.bf16.xpose.msra.mxu0 0
    %449 = vmatprep.subr.bf16.mxu0 0
    %450 = vmatpush1.bf16.xpose.msra.mxu0 0
    %451 = vmatprep.subr.bf16.mxu0 0
    %452 = vmatpush1.bf16.xpose.msra.mxu0 0
    %453 = vmatprep.mubr.bf16.mxu0 0
    %454 = vmatmul.mubr.bf16.gmra.mrb[0].mxu0 %v416
    %v455 = vpop.f32.mrb[0].mxu0
    %v456 = vadd.f32 0.0, %v455
    %v457 = vpop.f32.mrb[0].mxu0
    %v458 = vpop.f32.mrb[0].mxu0
    %v459 = vpop.f32.mrb[0].mxu0
    %460 = vdwg.mxu0
    %461 = vrot.lane.b32.xlu0 %v157, 80
    %v462 = vpop.permute.xlu0 %461
    %463 = vrot.lane.b32.xlu0 %v157, 64
    %v464 = vpop.permute.xlu0 %463
    %v466 = vsel %vm161, %v462, 0
    %v469 = vsel %vm161, %v464, 0
    %471 = vmatprep.subr.bf16.mxu0 0
    %472 = vmatpush1.bf16.xpose.msra.mxu0 %v469
    %473 = vmatprep.subr.bf16.mxu0 0
    %474 = vmatpush1.bf16.xpose.msra.mxu0 0
    %475 = vmatprep.subr.bf16.mxu0 0
    %476 = vmatpush1.bf16.xpose.msra.mxu0 0
    %477 = vmatprep.subr.bf16.mxu0 0
    %478 = vmatpush1.bf16.xpose.msra.mxu0 0
    %479 = vmatprep.subr.bf16.mxu0 0
    %480 = vmatpush1.bf16.xpose.msra.mxu0 0
    %481 = vmatprep.subr.bf16.mxu0 0
    %482 = vmatpush1.bf16.xpose.msra.mxu0 0
    %483 = vmatprep.subr.bf16.mxu0 0
    %484 = vmatpush1.bf16.xpose.msra.mxu0 0
    %485 = vmatprep.subr.bf16.mxu0 0
    %486 = vmatpush1.bf16.xpose.msra.mxu0 0
    %487 = vmatprep.subr.bf16.mxu0 0
    %488 = vmatpush1.bf16.xpose.msra.mxu0 0
    %489 = vmatprep.subr.bf16.mxu0 0
    %490 = vmatpush1.bf16.xpose.msra.mxu0 0
    %491 = vmatprep.subr.bf16.mxu0 0
    %492 = vmatpush1.bf16.xpose.msra.mxu0 0
    %493 = vmatprep.subr.bf16.mxu0 0
    %494 = vmatpush1.bf16.xpose.msra.mxu0 0
    %495 = vmatprep.subr.bf16.mxu0 0
    %496 = vmatpush1.bf16.xpose.msra.mxu0 0
    %497 = vmatprep.subr.bf16.mxu0 0
    %498 = vmatpush1.bf16.xpose.msra.mxu0 0
    %499 = vmatprep.subr.bf16.mxu0 0
    %500 = vmatpush1.bf16.xpose.msra.mxu0 0
    %501 = vmatprep.subr.bf16.mxu0 0
    %502 = vmatpush1.bf16.xpose.msra.mxu0 0
    %503 = vmatprep.mubr.bf16.mxu0 0
    %504 = vmatmul.mubr.bf16.gmra.mrb[0].mxu0 %v466
    %v505 = vpop.f32.mrb[0].mxu0
    %v506 = vadd.f32 0.0, %v505
    %v507 = vpop.f32.mrb[0].mxu0
    %v508 = vpop.f32.mrb[0].mxu0
    %v509 = vpop.f32.mrb[0].mxu0
    %510 = vdwg.mxu0
    %v511 = vmul.f32 %v456, 0.25
    %v512 = vmul.f32 %v506, 0.25
    %v513 = vadd.f32 %v511, %v155
    %v514 = vadd.f32 %v512, %v155
    %v515 = vadd.f32 %v513, %v266
    %v516 = vadd.f32 %v514, %v270
    %v517 = vsel %vm275, %v515, -inf
    %518 = vmax.xlane.f32.xlu0 %v517
    %v519 = vpop.xlane.xlu0 %518
    %v520 = vsel %vm275, %v516, -inf
    %521 = vmax.xlane.f32.xlu0 %v520
    %v522 = vpop.xlane.xlu0 %521
    %v523 = vsub.f32 -inf, %v519
    %v524 = vsub.f32 -inf, %v522
    %v525 = vmul.f32 %v523, 1.442695
    %v526 = vpow.pop %v525
    %v527 = vmul.f32 %v524, 1.442695
    %v528 = vpow.pop %v527
    %v529 = vsub.f32 %v515, %v519
    %v530 = vsub.f32 %v516, %v522
    %v531 = vmul.f32 %v529, 1.442695
    %v532 = vpow.pop %v531
    %v533 = vmul.f32 %v530, 1.442695
    %v534 = vpow.pop %v533
    %v535 = vmul.f32 %v526, 0.0
    %v536 = vmul.f32 %v528, 0.0
    %v537 = vsel %vm275, %v532, 0.0
    %538 = vadd.xlane.f32.xlu0 %v537
    %v539 = vpop.xlane.xlu0 %538
    %v540 = vsel %vm275, %v534, 0.0
    %541 = vadd.xlane.f32.xlu0 %v540
    %v542 = vpop.xlane.xlu0 %541
    %v543 = vadd.f32 %v535, %v539
    %v544 = vadd.f32 %v536, %v542
    %v545 = vpack.c.bf16 %v532, %v532
    %v546 = vpack.c.bf16 %v534, %v534
    %547 = vrot.lane.b32.xlu0 %v156, 48
    %v548 = vpop.permute.xlu0 %547
    %v550 = vsel %vm275, %v545, 0
    %v553 = vsel %vm311, %v548, 0
    %555 = vmatprep.subr.bf16.mxu0 0
    %556 = vmatpush1.bf16.msra.mxu0 %v553
    %557 = vmatprep.subr.bf16.mxu0 0
    %558 = vmatpush1.bf16.msra.mxu0 0
    %559 = vmatprep.subr.bf16.mxu0 0
    %560 = vmatpush1.bf16.msra.mxu0 0
    %561 = vmatprep.subr.bf16.mxu0 0
    %562 = vmatpush1.bf16.msra.mxu0 0
    %563 = vmatprep.subr.bf16.mxu0 0
    %564 = vmatpush1.bf16.msra.mxu0 0
    %565 = vmatprep.subr.bf16.mxu0 0
    %566 = vmatpush1.bf16.msra.mxu0 0
    %567 = vmatprep.subr.bf16.mxu0 0
    %568 = vmatpush1.bf16.msra.mxu0 0
    %569 = vmatprep.subr.bf16.mxu0 0
    %570 = vmatpush1.bf16.msra.mxu0 0
    %571 = vmatprep.subr.bf16.mxu0 0
    %572 = vmatpush1.bf16.msra.mxu0 0
    %573 = vmatprep.subr.bf16.mxu0 0
    %574 = vmatpush1.bf16.msra.mxu0 0
    %575 = vmatprep.subr.bf16.mxu0 0
    %576 = vmatpush1.bf16.msra.mxu0 0
    %577 = vmatprep.subr.bf16.mxu0 0
    %578 = vmatpush1.bf16.msra.mxu0 0
    %579 = vmatprep.subr.bf16.mxu0 0
    %580 = vmatpush1.bf16.msra.mxu0 0
    %581 = vmatprep.subr.bf16.mxu0 0
    %582 = vmatpush1.bf16.msra.mxu0 0
    %583 = vmatprep.subr.bf16.mxu0 0
    %584 = vmatpush1.bf16.msra.mxu0 0
    %585 = vmatprep.subr.bf16.mxu0 0
    %586 = vmatpush1.bf16.msra.mxu0 0
    %587 = vmatprep.mubr.bf16.mxu0 0
    %588 = vmatmul.mubr.bf16.gmra.mrb[0].mxu0 %v550
    %v589 = vpop.f32.mrb[0].mxu0
    %v590 = vadd.f32 0.0, %v589
    %v591 = vpop.f32.mrb[0].mxu0
    %v592 = vpop.f32.mrb[0].mxu0
    %v593 = vpop.f32.mrb[0].mxu0
    %594 = vdwg.mxu0
    %595 = vrot.lane.b32.xlu0 %v157, 48
    %v596 = vpop.permute.xlu0 %595
    %v598 = vsel %vm275, %v546, 0
    %v601 = vsel %vm311, %v596, 0
    %603 = vmatprep.subr.bf16.mxu0 0
    %604 = vmatpush1.bf16.msra.mxu0 %v601
    %605 = vmatprep.subr.bf16.mxu0 0
    %606 = vmatpush1.bf16.msra.mxu0 0
    %607 = vmatprep.subr.bf16.mxu0 0
    %608 = vmatpush1.bf16.msra.mxu0 0
    %609 = vmatprep.subr.bf16.mxu0 0
    %610 = vmatpush1.bf16.msra.mxu0 0
    %611 = vmatprep.subr.bf16.mxu0 0
    %612 = vmatpush1.bf16.msra.mxu0 0
    %613 = vmatprep.subr.bf16.mxu0 0
    %614 = vmatpush1.bf16.msra.mxu0 0
    %615 = vmatprep.subr.bf16.mxu0 0
    %616 = vmatpush1.bf16.msra.mxu0 0
    %617 = vmatprep.subr.bf16.mxu0 0
    %618 = vmatpush1.bf16.msra.mxu0 0
    %619 = vmatprep.subr.bf16.mxu0 0
    %620 = vmatpush1.bf16.msra.mxu0 0
    %621 = vmatprep.subr.bf16.mxu0 0
    %622 = vmatpush1.bf16.msra.mxu0 0
    %623 = vmatprep.subr.bf16.mxu0 0
    %624 = vmatpush1.bf16.msra.mxu0 0
    %625 = vmatprep.subr.bf16.mxu0 0
    %626 = vmatpush1.bf16.msra.mxu0 0
    %627 = vmatprep.subr.bf16.mxu0 0
    %628 = vmatpush1.bf16.msra.mxu0 0
    %629 = vmatprep.subr.bf16.mxu0 0
    %630 = vmatpush1.bf16.msra.mxu0 0
    %631 = vmatprep.subr.bf16.mxu0 0
    %632 = vmatpush1.bf16.msra.mxu0 0
    %633 = vmatprep.subr.bf16.mxu0 0
    %634 = vmatpush1.bf16.msra.mxu0 0
    %635 = vmatprep.mubr.bf16.mxu0 0
    %636 = vmatmul.mubr.bf16.gmra.mrb[0].mxu0 %v598
    %v637 = vpop.f32.mrb[0].mxu0
    %v638 = vadd.f32 0.0, %v637
    %v639 = vpop.f32.mrb[0].mxu0
    %v640 = vpop.f32.mrb[0].mxu0
    %v641 = vpop.f32.mrb[0].mxu0
    %642 = vdwg.mxu0
    %v643 = vadd.f32 %v535, %v590
    %v644 = vadd.f32 %v536, %v638
    %v645 = vrcp.pop %v543
    %v646 = vrcp.pop %v544
    %v647 = vmul.f32 %v643, %v645
    %v648 = vmul.f32 %v644, %v646
    %651 = vrot.lane.b32.xlu0 %v647, 16
    %v652 = vpop.permute.xlu0 %651
    %653 = vrot.lane.b32.xlu0 %v648, 16
    %v654 = vpop.permute.xlu0 %653
    %vm657 = vcmask 261248
    %658 = vst.msk [vmem:[#allocation2] sm:$0xff] %vm657, %v652
    %659 = vst.msk [vmem:[#allocation2 + $0x8] sm:$0xff] %vm657, %v654
    %v660 = vld [vmem:[#allocation2] sm:$0xff]
    %v661 = vld [vmem:[#allocation2 + $0x8] sm:$0xff]
    %v662 = vpack.c.bf16 %v661, %v660
    %v663 = vld [vmem:[%s4] sm:$0xf]
    %v664 = vld [vmem:[%s4 + $0x4] sm:$0xf]
    %v665 = vld [vmem:[%s4 + $0x8] sm:$0xf]
    %v666 = vld [vmem:[%s4 + $0xc] sm:$0xf]
    %v671 = vunpack.c.l.b16 %v663
    %v672 = vunpack.c.l.b16 %v664
    %v673 = vunpack.c.l.b16 %v665
    %v674 = vunpack.c.l.b16 %v666
    %v675 = vpack.c.b16 %v672, %v671
    %v676 = vpack.c.b16 %v674, %v673
    %v680 = vsel %vm40, %v662, 0
    %682 = vmatprep.subr.bf16.mxu0 0
    %683 = vmatpush1.bf16.msra.mxu0 %v675
    %684 = vmatprep.subr.bf16.mxu0 0
    %685 = vmatpush1.bf16.msra.mxu0 %v676
    %686 = vmatprep.subr.bf16.mxu0 0
    %687 = vmatpush1.bf16.msra.mxu0 0
    %688 = vmatprep.subr.bf16.mxu0 0
    %689 = vmatpush1.bf16.msra.mxu0 0
    %690 = vmatprep.subr.bf16.mxu0 0
    %691 = vmatpush1.bf16.msra.mxu0 0
    %692 = vmatprep.subr.bf16.mxu0 0
    %693 = vmatpush1.bf16.msra.mxu0 0
    %694 = vmatprep.subr.bf16.mxu0 0
    %695 = vmatpush1.bf16.msra.mxu0 0
    %696 = vmatprep.subr.bf16.mxu0 0
    %697 = vmatpush1.bf16.msra.mxu0 0
    %698 = vmatprep.subr.bf16.mxu0 0
    %699 = vmatpush1.bf16.msra.mxu0 0
    %700 = vmatprep.subr.bf16.mxu0 0
    %701 = vmatpush1.bf16.msra.mxu0 0
    %702 = vmatprep.subr.bf16.mxu0 0
    %703 = vmatpush1.bf16.msra.mxu0 0
    %704 = vmatprep.subr.bf16.mxu0 0
    %705 = vmatpush1.bf16.msra.mxu0 0
    %706 = vmatprep.subr.bf16.mxu0 0
    %707 = vmatpush1.bf16.msra.mxu0 0
    %708 = vmatprep.subr.bf16.mxu0 0
    %709 = vmatpush1.bf16.msra.mxu0 0
    %710 = vmatprep.subr.bf16.mxu0 0
    %711 = vmatpush1.bf16.msra.mxu0 0
    %712 = vmatprep.subr.bf16.mxu0 0
    %713 = vmatpush1.bf16.msra.mxu0 0
    %714 = vmatprep.mubr.bf16.mxu0 0
    %715 = vmatmul.mubr.bf16.gmra.mrb[0].mxu0 %v680
    %v716 = vpop.f32.mrb[0].mxu0
    %v717 = vadd.f32 0.0, %v716
    %v718 = vpop.f32.mrb[0].mxu0
    %v719 = vpop.f32.mrb[0].mxu0
    %v720 = vadd.f32 0.0, %v719
    %v721 = vpop.f32.mrb[0].mxu0
    %722 = vdwg.mxu0
    %v723 = vadd.f32 %v38, %v717
    %v724 = vadd.f32 %v39, %v720
    %v725 = vlaneseq
    %v726 = vshrl.u32 %v725, 7
    %v727 = vsub.s32 2, %v726
    %v728 = vrot.slane %v34, %v727
    %v729 = vadd.f32 %v723, %v728
    %v730 = vadd.f32 %v724, %v728
    %v731 = vsel %vm40, %v729, 0.0
    %732 = vadd.xlane.f32.xlu0 %v731
    %v733 = vpop.xlane.xlu0 %732
    %v734 = vsel %vm40, %v730, 0.0
    %735 = vadd.xlane.f32.xlu0 %v734
    %v736 = vpop.xlane.xlu0 %735
    %v737 = vmul.f32 %v733, %v47
    %v738 = vmul.f32 %v736, %v47
    %v739 = vsub.f32 %v729, %v737
    %v740 = vsub.f32 %v730, %v738
    %v741 = vmul.f32 %v739, %v739
    %v742 = vmul.f32 %v740, %v740
    %v743 = vsel %vm40, %v741, 0.0
    %744 = vadd.xlane.f32.xlu0 %v743
    %v745 = vpop.xlane.xlu0 %744
    %v746 = vsel %vm40, %v742, 0.0
    %747 = vadd.xlane.f32.xlu0 %v746
    %v748 = vpop.xlane.xlu0 %747
    %v749 = vmul.f32 %v745, %v47
    %v750 = vmul.f32 %v748, %v47
    %v751 = vadd.f32 %v749, 1e-05
    %v752 = vadd.f32 %v750, 1e-05
    %v753 = vrsqrt.pop %v751
    %v754 = vrsqrt.pop %v752
    %v755 = vmul.f32 %v739, %v753
    %v756 = vmul.f32 %v740, %v754
    %v757 = vlaneseq
    %v758 = vshrl.u32 %v757, 7
    %v759 = vsub.s32 3, %v758
    %v760 = vrot.slane %v34, %v759
    %v761 = vmul.f32 %v755, %v760
    %v762 = vmul.f32 %v756, %v760
    %v763 = vlaneseq
    %v764 = vshrl.u32 %v763, 7
    %v765 = vsub.s32 4, %v764
    %v766 = vrot.slane %v34, %v765
    %v767 = vadd.f32 %v761, %v766
    %v768 = vadd.f32 %v762, %v766
    %v769 = vpack.c.bf16 %v768, %v767
    %v770 = vld [vmem:[%s5] sm:$0xf]
    %v771 = vld [vmem:[%s5 + $0x4] sm:$0xf]
    %v772 = vld [vmem:[%s5 + $0x8] sm:$0xf]
    %v773 = vld [vmem:[%s5 + $0xc] sm:$0xf]
    %v774 = vld [vmem:[%s6] sm:$0x1]
    %v776 = vlaneseq
    %v777 = vshrl.u32 %v776, 7
    %v778 = vsub.s32 0, %v777
    %v779 = vrot.slane %v774, %v778
    %v785 = vunpack.c.l.b16 %v770
    %v786 = vunpack.c.l.b16 %v771
    %v787 = vunpack.c.l.b16 %v772
    %v788 = vunpack.c.l.b16 %v773
    %v789 = vpack.c.b16 %v786, %v785
    %v790 = vpack.c.b16 %v788, %v787
    %v794 = vsel %vm40, %v769, 0
    %796 = vmatprep.subr.bf16.mxu0 0
    %797 = vmatpush1.bf16.msra.mxu0 %v789
    %798 = vmatprep.subr.bf16.mxu0 0
    %799 = vmatpush1.bf16.msra.mxu0 %v790
    %800 = vmatprep.subr.bf16.mxu0 0
    %801 = vmatpush1.bf16.msra.mxu0 0
    %802 = vmatprep.subr.bf16.mxu0 0
    %803 = vmatpush1.bf16.msra.mxu0 0
    %804 = vmatprep.subr.bf16.mxu0 0
    %805 = vmatpush1.bf16.msra.mxu0 0
    %806 = vmatprep.subr.bf16.mxu0 0
    %807 = vmatpush1.bf16.msra.mxu0 0
    %808 = vmatprep.subr.bf16.mxu0 0
    %809 = vmatpush1.bf16.msra.mxu0 0
    %810 = vmatprep.subr.bf16.mxu0 0
    %811 = vmatpush1.bf16.msra.mxu0 0
    %812 = vmatprep.subr.bf16.mxu0 0
    %813 = vmatpush1.bf16.msra.mxu0 0
    %814 = vmatprep.subr.bf16.mxu0 0
    %815 = vmatpush1.bf16.msra.mxu0 0
    %816 = vmatprep.subr.bf16.mxu0 0
    %817 = vmatpush1.bf16.msra.mxu0 0
    %818 = vmatprep.subr.bf16.mxu0 0
    %819 = vmatpush1.bf16.msra.mxu0 0
    %820 = vmatprep.subr.bf16.mxu0 0
    %821 = vmatpush1.bf16.msra.mxu0 0
    %822 = vmatprep.subr.bf16.mxu0 0
    %823 = vmatpush1.bf16.msra.mxu0 0
    %824 = vmatprep.subr.bf16.mxu0 0
    %825 = vmatpush1.bf16.msra.mxu0 0
    %826 = vmatprep.subr.bf16.mxu0 0
    %827 = vmatpush1.bf16.msra.mxu0 0
    %828 = vmatprep.mubr.bf16.mxu0 0
    %829 = vmatmul.mubr.bf16.gmra.mrb[0].mxu0 %v794
    %v830 = vpop.f32.mrb[0].mxu0
    %v831 = vadd.f32 %v779, %v830
    %v832 = vpop.f32.mrb[0].mxu0
    %v833 = vpop.f32.mrb[0].mxu0
    %v834 = vadd.f32 %v779, %v833
    %v835 = vpop.f32.mrb[0].mxu0
    %836 = vdwg.mxu0
    %v837 = vmul.f32 %v831, 0.5
    %v838 = vmul.f32 %v834, 0.5
    %v839 = vmul.f32 %v831, 0.044715
    %v840 = vmul.f32 %v834, 0.044715
    %v841 = vmul.f32 %v839, %v831
    %v842 = vmul.f32 %v840, %v834
    %v843 = vmul.f32 %v841, %v831
    %v844 = vmul.f32 %v842, %v834
    %v845 = vadd.f32 %v831, %v843
    %v846 = vadd.f32 %v834, %v844
    %v847 = vmul.f32 %v845, 0.7978846
    %v848 = vmul.f32 %v846, 0.7978846
    %v849 = vtanh.pop %v847
    %v850 = vtanh.pop %v848
    %v851 = vadd.f32 %v849, 1.0
    %v852 = vadd.f32 %v850, 1.0
    %v853 = vmul.f32 %v837, %v851
    %v854 = vmul.f32 %v838, %v852
    %v855 = vpack.c.bf16 %v854, %v853
    %v856 = vld [vmem:[%s7] sm:$0xf]
    %v857 = vld [vmem:[%s7 + $0x4] sm:$0xf]
    %v858 = vld [vmem:[%s7 + $0x8] sm:$0xf]
    %v859 = vld [vmem:[%s7 + $0xc] sm:$0xf]
    %v860 = vld [vmem:[%s7 + $0x10] sm:$0xf]
    %v861 = vld [vmem:[%s7 + $0x14] sm:$0xf]
    %v862 = vld [vmem:[%s7 + $0x18] sm:$0xf]
    %v863 = vld [vmem:[%s7 + $0x1c] sm:$0xf]
    %v864 = vld [vmem:[%s7 + $0x20] sm:$0xf]
    %v865 = vld [vmem:[%s7 + $0x24] sm:$0xf]
    %v866 = vld [vmem:[%s7 + $0x28] sm:$0xf]
    %v867 = vld [vmem:[%s7 + $0x2c] sm:$0xf]
    %v868 = vld [vmem:[%s7 + $0x30] sm:$0xf]
    %v869 = vld [vmem:[%s7 + $0x34] sm:$0xf]
    %v870 = vld [vmem:[%s7 + $0x38] sm:$0xf]
    %v871 = vld [vmem:[%s7 + $0x3c] sm:$0xf]
    %v888 = vunpack.c.l.b16 %v856
    %v889 = vunpack.c.l.b16 %v857
    %v890 = vunpack.c.l.b16 %v858
    %v891 = vunpack.c.l.b16 %v859
    %v892 = vunpack.c.l.b16 %v860
    %v893 = vunpack.c.l.b16 %v861
    %v894 = vunpack.c.l.b16 %v862
    %v895 = vunpack.c.l.b16 %v863
    %v896 = vunpack.c.l.b16 %v864
    %v897 = vunpack.c.l.b16 %v865
    %v898 = vunpack.c.l.b16 %v866
    %v899 = vunpack.c.l.b16 %v867
    %v900 = vunpack.c.l.b16 %v868
    %v901 = vunpack.c.l.b16 %v869
    %v902 = vunpack.c.l.b16 %v870
    %v903 = vunpack.c.l.b16 %v871
    %v904 = vpack.c.b16 %v889, %v888
    %v905 = vpack.c.b16 %v891, %v890
    %v906 = vpack.c.b16 %v893, %v892
    %v907 = vpack.c.b16 %v895, %v894
    %v908 = vpack.c.b16 %v897, %v896
    %v909 = vpack.c.b16 %v899, %v898
    %v910 = vpack.c.b16 %v901, %v900
    %v911 = vpack.c.b16 %v903, %v902
    %920 = vmatprep.subr.bf16.mxu0 0
    %921 = vmatpush1.bf16.msra.mxu0 %v904
    %922 = vmatprep.subr.bf16.mxu0 0
    %923 = vmatpush1.bf16.msra.mxu0 %v905
    %924 = vmatprep.subr.bf16.mxu0 0
    %925 = vmatpush1.bf16.msra.mxu0 %v906
    %926 = vmatprep.subr.bf16.mxu0 0
    %927 = vmatpush1.bf16.msra.mxu0 %v907
    %928 = vmatprep.subr.bf16.mxu0 0
    %929 = vmatpush1.bf16.msra.mxu0 %v908
    %930 = vmatprep.subr.bf16.mxu0 0
    %931 = vmatpush1.bf16.msra.mxu0 %v909
    %932 = vmatprep.subr.bf16.mxu0 0
    %933 = vmatpush1.bf16.msra.mxu0 %v910
    %934 = vmatprep.subr.bf16.mxu0 0
    %935 = vmatpush1.bf16.msra.mxu0 %v911
    %936 = vmatprep.subr.bf16.mxu0 0
    %937 = vmatpush1.bf16.msra.mxu0 0
    %938 = vmatprep.subr.bf16.mxu0 0
    %939 = vmatpush1.bf16.msra.mxu0 0
    %940 = vmatprep.subr.bf16.mxu0 0
    %941 = vmatpush1.bf16.msra.mxu0 0
    %942 = vmatprep.subr.bf16.mxu0 0
    %943 = vmatpush1.bf16.msra.mxu0 0
    %944 = vmatprep.subr.bf16.mxu0 0
    %945 = vmatpush1.bf16.msra.mxu0 0
    %946 = vmatprep.subr.bf16.mxu0 0
    %947 = vmatpush1.bf16.msra.mxu0 0
    %948 = vmatprep.subr.bf16.mxu0 0
    %949 = vmatpush1.bf16.msra.mxu0 0
    %950 = vmatprep.subr.bf16.mxu0 0
    %951 = vmatpush1.bf16.msra.mxu0 0
    %952 = vmatprep.mubr.bf16.mxu0 0
    %953 = vmatmul.mubr.bf16.gmra.mrb[0].mxu0 %v855
    %v954 = vpop.f32.mrb[0].mxu0
    %v955 = vadd.f32 0.0, %v954
    %v956 = vpop.f32.mrb[0].mxu0
    %v957 = vpop.f32.mrb[0].mxu0
    %v958 = vadd.f32 0.0, %v957
    %v959 = vpop.f32.mrb[0].mxu0
    %960 = vdwg.mxu0
    %v961 = vadd.f32 %v729, %v955
    %v962 = vadd.f32 %v730, %v958
    %v963 = vlaneseq
    %v964 = vshrl.u32 %v963, 7
    %v965 = vsub.s32 5, %v964
    %v966 = vrot.slane %v34, %v965
    %v967 = vadd.f32 %v961, %v966
    %v968 = vadd.f32 %v962, %v966
    %v969 = vsel %vm40, %v967, 0.0
    %970 = vadd.xlane.f32.xlu0 %v969
    %v971 = vpop.xlane.xlu0 %970
    %v972 = vsel %vm40, %v968, 0.0
    %973 = vadd.xlane.f32.xlu0 %v972
    %v974 = vpop.xlane.xlu0 %973
    %v975 = vmul.f32 %v971, %v47
    %v976 = vmul.f32 %v974, %v47
    %v977 = vsub.f32 %v967, %v975
    %v978 = vsub.f32 %v968, %v976
    %v979 = vmul.f32 %v977, %v977
    %v980 = vmul.f32 %v978, %v978
    %v981 = vsel %vm40, %v979, 0.0
    %982 = vadd.xlane.f32.xlu0 %v981
    %v983 = vpop.xlane.xlu0 %982
    %v984 = vsel %vm40, %v980, 0.0
    %985 = vadd.xlane.f32.xlu0 %v984
    %v986 = vpop.xlane.xlu0 %985
    %v987 = vmul.f32 %v983, %v47
    %v988 = vmul.f32 %v986, %v47
    %v989 = vadd.f32 %v987, 1e-05
    %v990 = vadd.f32 %v988, 1e-05
    %v991 = vrsqrt.pop %v989
    %v992 = vrsqrt.pop %v990
    %v993 = vmul.f32 %v977, %v991
    %v994 = vmul.f32 %v978, %v992
    %v995 = vlaneseq
    %v996 = vshrl.u32 %v995, 7
    %v997 = vsub.s32 6, %v996
    %v998 = vrot.slane %v34, %v997
    %v999 = vmul.f32 %v993, %v998
    %v1000 = vmul.f32 %v994, %v998
    %v1001 = vlaneseq
    %v1002 = vshrl.u32 %v1001, 7
    %v1003 = vsub.s32 7, %v1002
    %v1004 = vrot.slane %v34, %v1003
    %v1005 = vadd.f32 %v999, %v1004
    %v1006 = vadd.f32 %v1000, %v1004
    %v1007 = vlaneseq
    %v1008 = vshrl.u32 %v1007, 7
    %v1009 = vsub.s32 0, %v1008
    %v1010 = vrot.slane %v35, %v1009
    %v1011 = vmul.f32 %v1005, %v1010
    %v1012 = vmul.f32 %v1006, %v1010
    %v1013 = vsel %vm40, %v1011, 0.0
    %1014 = vadd.xlane.f32.xlu0 %v1013
    %v1015 = vpop.xlane.xlu0 %1014
    %v1016 = vsel %vm40, %v1012, 0.0
    %1017 = vadd.xlane.f32.xlu0 %v1016
    %v1018 = vpop.xlane.xlu0 %1017
    %v1021 = vlaneseq
    %v1022 = vshrl.u32 %v1021, 7
    %v1023 = vsub.s32 %v153, %v1022
    %v1024 = vrot.slane %v1015, %v1023
    %v1025 = vlaneseq
    %v1026 = vshrl.u32 %v1025, 7
    %v1027 = vsub.s32 %v153, %v1026
    %v1028 = vrot.slane %v1018, %v1027
    %vm1031 = vcmask 57344
    %1032 = vst.msk [vmem:[#allocation3] sm:$0x1] %vm1031, %v1024
    %1033 = vst.msk [vmem:[#allocation3 + $0x1] sm:$0x1] %vm1031, %v1028
    // Predicated region
    $region38: #{tpu_custom_call.1} parent=1 // pred_check
      _
    $region39: #{tpu_custom_call.1} parent=1 // pred_check_branch
      %1035 = sbr.rel (0) target = $region41
    $region40: #{tpu_custom_call.1} parent=1 // pred_region
      %s1037 = ssub.s32 32, 32
      %1038 = vsyncadd [#allocation4], %s1037
      %s1039 = sshll.u32 [#allocation3], 4
      %s1040 = int_to_ptr.vmem [resolvable:$true] %s1039
      %1045 = dma.vmem_to_hbm [thread:$0]  %s1040, 32, %s9, [#allocation4], 16, 16, 1
    $region41: #{tpu_custom_call.1} parent=1 // pred_fallthru
      _
    // Predicated region
    $region42: #{tpu_custom_call.1} parent=1 // pred_check
      _
    $region43: #{tpu_custom_call.1} parent=1 // pred_check_branch
      %1047 = sbr.rel (0) target = $region45
    $region44: #{tpu_custom_call.1} parent=1 // pred_region
      %1048 = dma.done [#allocation4], 32
    $region45: #{tpu_custom_call.1} parent=1 // pred_fallthru
      _
    %1049 = vsyncpa [#allocation4], 1

// kernel: tpu_custom_call.1
$region0: #{tpu_custom_call.1}
  #allocation0 [shape = 'u32[]', space=smem, size = 0x4, offset = 0x4, fixed_abs, tag = 'smem constant byte address 0x4 - core index']
  #allocation1 [shape = 'u32[144,128]{1,0:T(1,128)}', space=vmem, size = 0x12000, scoped, tag = 'internal scratch']
  #allocation2 [shape = 'f32[16,32]{1,0:T(8,128)}', space=vmem, size = 0x2000, scoped, tag = 'scratch operand']
  %s0 = inlined_call_operand.vmem [shape: bf16[2,8,32], index: 0, kind: input, shape index: {}]
  %s1 = inlined_call_operand.vmem [shape: f32[2,1,8], index: 1, kind: input, shape index: {}]
  %s2 = inlined_call_operand.vmem [shape: bf16[32,96], index: 2, kind: input, shape index: {}]
  %s3 = inlined_call_operand.vmem [shape: f32[1,96], index: 3, kind: input, shape index: {}]
  %s4 = inlined_call_operand.vmem [shape: bf16[32,32], index: 4, kind: input, shape index: {}]
  %s5 = inlined_call_operand.vmem [shape: bf16[32,128], index: 5, kind: input, shape index: {}]
  %s6 = inlined_call_operand.vmem [shape: f32[1,128], index: 6, kind: input, shape index: {}]
  %s7 = inlined_call_operand.vmem [shape: bf16[128,32], index: 7, kind: input, shape index: {}]
  %s8 = inlined_call_operand.vmem [shape: f32[9,32], index: 8, kind: input, shape index: {}]
  %s9 = inlined_call_operand.hbm [shape: f32[2,1,8], index: 9, kind: output, shape index: {}]
  %s10 = sld [smem:[#allocation0]]
  $region46: #{tpu_custom_call.1} parent=0
    _
  %s12 = ssub.s32 1, %s10
  %s13 = scalar_select 0, %s12, %s10
  $region1: #{tpu_custom_call.1} parent=0
    #allocation3 [shape = 'u8[1024]{0}', space=vmem, size = 0x400, scoped, tag = 'output window, operand 0, single buffered']
    #allocation4 [shape = 's32[1]{0}', space=sflag, size = 0x4, scoped, tag = 'scoped memory for tpu_custom_call.1']
    %14 = vsyncpa [#allocation4], 0
    // Predicated region
    $region2: #{tpu_custom_call.1} parent=1 // pred_check
      _
    $region3: #{tpu_custom_call.1} parent=1 // pred_check_branch
      %16 = sbr.rel (0) target = $region5
    $region4: #{tpu_custom_call.1} parent=1 // pred_region
      _
    $region5: #{tpu_custom_call.1} parent=1 // pred_fallthru
      _
    // Predicated region
    $region6: #{tpu_custom_call.1} parent=1 // pred_check
      _
    $region7: #{tpu_custom_call.1} parent=1 // pred_check_branch
      %18 = sbr.rel (0) target = $region9
    $region8: #{tpu_custom_call.1} parent=1 // pred_region
      _
    $region9: #{tpu_custom_call.1} parent=1 // pred_fallthru
      _
    // Predicated region
    $region10: #{tpu_custom_call.1} parent=1 // pred_check
      _
    $region11: #{tpu_custom_call.1} parent=1 // pred_check_branch
      %20 = sbr.rel (0) target = $region13
    $region12: #{tpu_custom_call.1} parent=1 // pred_region
      _
    $region13: #{tpu_custom_call.1} parent=1 // pred_fallthru
      _
    // Predicated region
    $region14: #{tpu_custom_call.1} parent=1 // pred_check
      _
    $region15: #{tpu_custom_call.1} parent=1 // pred_check_branch
      %22 = sbr.rel (0) target = $region17
    $region16: #{tpu_custom_call.1} parent=1 // pred_region
      _
    $region17: #{tpu_custom_call.1} parent=1 // pred_fallthru
      _
    // Predicated region
    $region18: #{tpu_custom_call.1} parent=1 // pred_check
      _
    $region19: #{tpu_custom_call.1} parent=1 // pred_check_branch
      %24 = sbr.rel (0) target = $region21
    $region20: #{tpu_custom_call.1} parent=1 // pred_region
      _
    $region21: #{tpu_custom_call.1} parent=1 // pred_fallthru
      _
    // Predicated region
    $region22: #{tpu_custom_call.1} parent=1 // pred_check
      _
    $region23: #{tpu_custom_call.1} parent=1 // pred_check_branch
      %26 = sbr.rel (0) target = $region25
    $region24: #{tpu_custom_call.1} parent=1 // pred_region
      _
    $region25: #{tpu_custom_call.1} parent=1 // pred_fallthru
      _
    // Predicated region
    $region26: #{tpu_custom_call.1} parent=1 // pred_check
      _
    $region27: #{tpu_custom_call.1} parent=1 // pred_check_branch
      %28 = sbr.rel (0) target = $region29
    $region28: #{tpu_custom_call.1} parent=1 // pred_region
      _
    $region29: #{tpu_custom_call.1} parent=1 // pred_fallthru
      _
    // Predicated region
    $region30: #{tpu_custom_call.1} parent=1 // pred_check
      _
    $region31: #{tpu_custom_call.1} parent=1 // pred_check_branch
      %30 = sbr.rel (0) target = $region33
    $region32: #{tpu_custom_call.1} parent=1 // pred_region
      _
    $region33: #{tpu_custom_call.1} parent=1 // pred_fallthru
      _
    // Predicated region
    $region34: #{tpu_custom_call.1} parent=1 // pred_check
      _
    $region35: #{tpu_custom_call.1} parent=1 // pred_check_branch
      %32 = sbr.rel (0) target = $region37
    $region36: #{tpu_custom_call.1} parent=1 // pred_region
      _
    $region37: #{tpu_custom_call.1} parent=1 // pred_fallthru
      _
    %v34 = vld [vmem:[%s8] sm:$0xff]
    %v35 = vld [vmem:[%s8 + $0x8] sm:$0x1]
    %v36 = vld [vmem:[%s0] sm:$0xf]
    %v37 = vld [vmem:[%s0 + $0x4] sm:$0xf]
    %v38 = vunpack.c.l.bf16 %v36
    %v39 = vunpack.c.l.bf16 %v37
    %vm40 = vcmask 261120
    %v41 = vsel %vm40, %v38, 0.0
    %42 = vadd.xlane.f32.xlu0 %v41
    %v43 = vpop.xlane.xlu0 %42
    %v44 = vsel %vm40, %v39, 0.0
    %45 = vadd.xlane.f32.xlu0 %v44
    %v46 = vpop.xlane.xlu0 %45
    %v47 = vrcp.pop 32.0
    %v48 = vmul.f32 %v43, %v47
    %v49 = vmul.f32 %v46, %v47
    %v50 = vsub.f32 %v38, %v48
    %v51 = vsub.f32 %v39, %v49
    %v52 = vmul.f32 %v50, %v50
    %v53 = vmul.f32 %v51, %v51
    %v54 = vsel %vm40, %v52, 0.0
    %55 = vadd.xlane.f32.xlu0 %v54
    %v56 = vpop.xlane.xlu0 %55
    %v57 = vsel %vm40, %v53, 0.0
    %58 = vadd.xlane.f32.xlu0 %v57
    %v59 = vpop.xlane.xlu0 %58
    %v60 = vmul.f32 %v56, %v47
    %v61 = vmul.f32 %v59, %v47
    %v62 = vadd.f32 %v60, 1e-05
    %v63 = vadd.f32 %v61, 1e-05
    %v64 = vrsqrt.pop %v62
    %v65 = vrsqrt.pop %v63
    %v66 = vmul.f32 %v50, %v64
    %v67 = vmul.f32 %v51, %v65
    %v68 = vlaneseq
    %v69 = vshrl.u32 %v68, 7
    %v70 = vsub.s32 0, %v69
    %v71 = vrot.slane %v34, %v70
    %v72 = vmul.f32 %v66, %v71
    %v73 = vmul.f32 %v67, %v71
    %v74 = vlaneseq
    %v75 = vshrl.u32 %v74, 7
    %v76 = vsub.s32 1, %v75
    %v77 = vrot.slane %v34, %v76
    %v78 = vadd.f32 %v72, %v77
    %v79 = vadd.f32 %v73, %v77
    %v80 = vpack.c.bf16 %v79, %v78
    %v81 = vld [vmem:[%s2] sm:$0xf]
    %v82 = vld [vmem:[%s2 + $0x4] sm:$0xf]
    %v83 = vld [vmem:[%s2 + $0x8] sm:$0xf]
    %v84 = vld [vmem:[%s2 + $0xc] sm:$0xf]
    %v85 = vld [vmem:[%s3] sm:$0x1]
    %v87 = vlaneseq
    %v88 = vshrl.u32 %v87, 7
    %v89 = vsub.s32 0, %v88
    %v90 = vrot.slane %v85, %v89
    %v96 = vunpack.c.l.b16 %v81
    %v97 = vunpack.c.l.b16 %v82
    %v98 = vunpack.c.l.b16 %v83
    %v99 = vunpack.c.l.b16 %v84
    %v100 = vpack.c.b16 %v97, %v96
    %v101 = vpack.c.b16 %v99, %v98
    %v105 = vsel %vm40, %v80, 0
    %107 = vmatprep.subr.bf16.mxu0 0
    %108 = vmatpush1.bf16.msra.mxu0 %v100
    %109 = vmatprep.subr.bf16.mxu0 0
    %110 = vmatpush1.bf16.msra.mxu0 %v101
    %111 = vmatprep.subr.bf16.mxu0 0
    %112 = vmatpush1.bf16.msra.mxu0 0
    %113 = vmatprep.subr.bf16.mxu0 0
    %114 = vmatpush1.bf16.msra.mxu0 0
    %115 = vmatprep.subr.bf16.mxu0 0
    %116 = vmatpush1.bf16.msra.mxu0 0
    %117 = vmatprep.subr.bf16.mxu0 0
    %118 = vmatpush1.bf16.msra.mxu0 0
    %119 = vmatprep.subr.bf16.mxu0 0
    %120 = vmatpush1.bf16.msra.mxu0 0
    %121 = vmatprep.subr.bf16.mxu0 0
    %122 = vmatpush1.bf16.msra.mxu0 0
    %123 = vmatprep.subr.bf16.mxu0 0
    %124 = vmatpush1.bf16.msra.mxu0 0
    %125 = vmatprep.subr.bf16.mxu0 0
    %126 = vmatpush1.bf16.msra.mxu0 0
    %127 = vmatprep.subr.bf16.mxu0 0
    %128 = vmatpush1.bf16.msra.mxu0 0
    %129 = vmatprep.subr.bf16.mxu0 0
    %130 = vmatpush1.bf16.msra.mxu0 0
    %131 = vmatprep.subr.bf16.mxu0 0
    %132 = vmatpush1.bf16.msra.mxu0 0
    %133 = vmatprep.subr.bf16.mxu0 0
    %134 = vmatpush1.bf16.msra.mxu0 0
    %135 = vmatprep.subr.bf16.mxu0 0
    %136 = vmatpush1.bf16.msra.mxu0 0
    %137 = vmatprep.subr.bf16.mxu0 0
    %138 = vmatpush1.bf16.msra.mxu0 0
    %139 = vmatprep.mubr.bf16.mxu0 0
    %140 = vmatmul.mubr.bf16.gmra.mrb[0].mxu0 %v105
    %v141 = vpop.f32.mrb[0].mxu0
    %v142 = vadd.f32 %v90, %v141
    %v143 = vpop.f32.mrb[0].mxu0
    %v144 = vpop.f32.mrb[0].mxu0
    %v145 = vadd.f32 %v90, %v144
    %v146 = vpop.f32.mrb[0].mxu0
    %147 = vdwg.mxu0
    %v148 = vld [vmem:[%s1] sm:$0x1]
    %v149 = vld [vmem:[%s1 + $0x1] sm:$0x1]
    %v150 = vlaneseq
    %v151 = vshrl.u32 %v150, 7
    %v152 = vlaneseq
    %v153 = vand.u32 %v152, 127
    %vm154 = vcmp.ge.s32.totalorder %v151, %v153
    %v155 = vsel %vm154, 0.0, -1e+09
    %v156 = vpack.c.bf16 %v142, %v142
    %v157 = vpack.c.bf16 %v145, %v145
    %159 = vrot.lane.b32.xlu0 %v156, 112
    %v160 = vpop.permute.xlu0 %159
    %vm161 = vcmask 130048
    %v163 = vsel %vm161, %v156, 0
    %v166 = vsel %vm161, %v160, 0
    %168 = vmatprep.subr.bf16.mxu0 0
    %169 = vmatpush1.bf16.xpose.msra.mxu0 %v166
    %170 = vmatprep.subr.bf16.mxu0 0
    %171 = vmatpush1.bf16.xpose.msra.mxu0 0
    %172 = vmatprep.subr.bf16.mxu0 0
    %173 = vmatpush1.bf16.xpose.msra.mxu0 0
    %174 = vmatprep.subr.bf16.mxu0 0
    %175 = vmatpush1.bf16.xpose.msra.mxu0 0
    %176 = vmatprep.subr.bf16.mxu0 0
    %177 = vmatpush1.bf16.xpose.msra.mxu0 0
    %178 = vmatprep.subr.bf16.mxu0 0
    %179 = vmatpush1.bf16.xpose.msra.mxu0 0
    %180 = vmatprep.subr.bf16.mxu0 0
    %181 = vmatpush1.bf16.xpose.msra.mxu0 0
    %182 = vmatprep.subr.bf16.mxu0 0
    %183 = vmatpush1.bf16.xpose.msra.mxu0 0
    %184 = vmatprep.subr.bf16.mxu0 0
    %185 = vmatpush1.bf16.xpose.msra.mxu0 0
    %186 = vmatprep.subr.bf16.mxu0 0
    %187 = vmatpush1.bf16.xpose.msra.mxu0 0
    %188 = vmatprep.subr.bf16.mxu0 0
    %189 = vmatpush1.bf16.xpose.msra.mxu0 0
    %190 = vmatprep.subr.bf16.mxu0 0
    %191 = vmatpush1.bf16.xpose.msra.mxu0 0
    %192 = vmatprep.subr.bf16.mxu0 0
    %193 = vmatpush1.bf16.xpose.msra.mxu0 0
    %194 = vmatprep.subr.bf16.mxu0 0
    %195 = vmatpush1.bf16.xpose.msra.mxu0 0
    %196 = vmatprep.subr.bf16.mxu0 0
    %197 = vmatpush1.bf16.xpose.msra.mxu0 0
    %198 = vmatprep.subr.bf16.mxu0 0
    %199 = vmatpush1.bf16.xpose.msra.mxu0 0
    %200 = vmatprep.mubr.bf16.mxu0 0
    %201 = vmatmul.mubr.bf16.gmra.mrb[0].mxu0 %v163
    %v202 = vpop.f32.mrb[0].mxu0
    %v203 = vadd.f32 0.0, %v202
    %v204 = vpop.f32.mrb[0].mxu0
    %v205 = vpop.f32.mrb[0].mxu0
    %v206 = vpop.f32.mrb[0].mxu0
    %207 = vdwg.mxu0
    %209 = vrot.lane.b32.xlu0 %v157, 112
    %v210 = vpop.permute.xlu0 %209
    %v212 = vsel %vm161, %v157, 0
    %v215 = vsel %vm161, %v210, 0
    %217 = vmatprep.subr.bf16.mxu0 0
    %218 = vmatpush1.bf16.xpose.msra.mxu0 %v215
    %219 = vmatprep.subr.bf16.mxu0 0
    %220 = vmatpush1.bf16.xpose.msra.mxu0 0
    %221 = vmatprep.subr.bf16.mxu0 0
    %222 = vmatpush1.bf16.xpose.msra.mxu0 0
    %223 = vmatprep.subr.bf16.mxu0 0
    %224 = vmatpush1.bf16.xpose.msra.mxu0 0
    %225 = vmatprep.subr.bf16.mxu0 0
    %226 = vmatpush1.bf16.xpose.msra.mxu0 0
    %227 = vmatprep.subr.bf16.mxu0 0
    %228 = vmatpush1.bf16.xpose.msra.mxu0 0
    %229 = vmatprep.subr.bf16.mxu0 0
    %230 = vmatpush1.bf16.xpose.msra.mxu0 0
    %231 = vmatprep.subr.bf16.mxu0 0
    %232 = vmatpush1.bf16.xpose.msra.mxu0 0
    %233 = vmatprep.subr.bf16.mxu0 0
    %234 = vmatpush1.bf16.xpose.msra.mxu0 0
    %235 = vmatprep.subr.bf16.mxu0 0
    %236 = vmatpush1.bf16.xpose.msra.mxu0 0
    %237 = vmatprep.subr.bf16.mxu0 0
    %238 = vmatpush1.bf16.xpose.msra.mxu0 0
    %239 = vmatprep.subr.bf16.mxu0 0
    %240 = vmatpush1.bf16.xpose.msra.mxu0 0
    %241 = vmatprep.subr.bf16.mxu0 0
    %242 = vmatpush1.bf16.xpose.msra.mxu0 0
    %243 = vmatprep.subr.bf16.mxu0 0
    %244 = vmatpush1.bf16.xpose.msra.mxu0 0
    %245 = vmatprep.subr.bf16.mxu0 0
    %246 = vmatpush1.bf16.xpose.msra.mxu0 0
    %247 = vmatprep.subr.bf16.mxu0 0
    %248 = vmatpush1.bf16.xpose.msra.mxu0 0
    %249 = vmatprep.mubr.bf16.mxu0 0
    %250 = vmatmul.mubr.bf16.gmra.mrb[0].mxu0 %v212
    %v251 = vpop.f32.mrb[0].mxu0
    %v252 = vadd.f32 0.0, %v251
    %v253 = vpop.f32.mrb[0].mxu0
    %v254 = vpop.f32.mrb[0].mxu0
    %v255 = vpop.f32.mrb[0].mxu0
    %256 = vdwg.mxu0
    %v257 = vmul.f32 %v203, 0.25
    %v258 = vmul.f32 %v252, 0.25
    %v259 = vadd.f32 %v257, %v155
    %v260 = vadd.f32 %v258, %v155
    %v263 = vlaneseq
    %v264 = vshrl.u32 %v263, 7
    %v265 = vsub.s32 0, %v264
    %v266 = vrot.slane %v148, %v265
    %v267 = vlaneseq
    %v268 = vshrl.u32 %v267, 7
    %v269 = vsub.s32 0, %v268
    %v270 = vrot.slane %v149, %v269
    %v273 = vadd.f32 %v259, %v266
    %v274 = vadd.f32 %v260, %v270
    %vm275 = vcmask 64512
    %v276 = vsel %vm275, %v273, -inf
    %277 = vmax.xlane.f32.xlu0 %v276
    %v278 = vpop.xlane.xlu0 %277
    %v279 = vsel %vm275, %v274, -inf
    %280 = vmax.xlane.f32.xlu0 %v279
    %v281 = vpop.xlane.xlu0 %280
    %v282 = vsub.f32 -inf, %v278
    %v283 = vsub.f32 -inf, %v281
    %v284 = vmul.f32 %v282, 1.442695
    %v285 = vpow.pop %v284
    %v286 = vmul.f32 %v283, 1.442695
    %v287 = vpow.pop %v286
    %v288 = vsub.f32 %v273, %v278
    %v289 = vsub.f32 %v274, %v281
    %v290 = vmul.f32 %v288, 1.442695
    %v291 = vpow.pop %v290
    %v292 = vmul.f32 %v289, 1.442695
    %v293 = vpow.pop %v292
    %v294 = vmul.f32 %v285, 0.0
    %v295 = vmul.f32 %v287, 0.0
    %v296 = vsel %vm275, %v291, 0.0
    %297 = vadd.xlane.f32.xlu0 %v296
    %v298 = vpop.xlane.xlu0 %297
    %v299 = vsel %vm275, %v293, 0.0
    %300 = vadd.xlane.f32.xlu0 %v299
    %v301 = vpop.xlane.xlu0 %300
    %v302 = vadd.f32 %v294, %v298
    %v303 = vadd.f32 %v295, %v301
    %v304 = vpack.c.bf16 %v291, %v291
    %v305 = vpack.c.bf16 %v293, %v293
    %306 = vrot.lane.b32.xlu0 %v156, 96
    %v307 = vpop.permute.xlu0 %306
    %v309 = vsel %vm275, %v304, 0
    %vm311 = vcmask 1043456
    %v313 = vsel %vm311, %v307, 0
    %315 = vmatprep.subr.bf16.mxu0 0
    %316 = vmatpush1.bf16.msra.mxu0 %v313
    %317 = vmatprep.subr.bf16.mxu0 0
    %318 = vmatpush1.bf16.msra.mxu0 0
    %319 = vmatprep.subr.bf16.mxu0 0
    %320 = vmatpush1.bf16.msra.mxu0 0
    %321 = vmatprep.subr.bf16.mxu0 0
    %322 = vmatpush1.bf16.msra.mxu0 0
    %323 = vmatprep.subr.bf16.mxu0 0
    %324 = vmatpush1.bf16.msra.mxu0 0
    %325 = vmatprep.subr.bf16.mxu0 0
    %326 = vmatpush1.bf16.msra.mxu0 0
    %327 = vmatprep.subr.bf16.mxu0 0
    %328 = vmatpush1.bf16.msra.mxu0 0
    %329 = vmatprep.subr.bf16.mxu0 0
    %330 = vmatpush1.bf16.msra.mxu0 0
    %331 = vmatprep.subr.bf16.mxu0 0
    %332 = vmatpush1.bf16.msra.mxu0 0
    %333 = vmatprep.subr.bf16.mxu0 0
    %334 = vmatpush1.bf16.msra.mxu0 0
    %335 = vmatprep.subr.bf16.mxu0 0
    %336 = vmatpush1.bf16.msra.mxu0 0
    %337 = vmatprep.subr.bf16.mxu0 0
    %338 = vmatpush1.bf16.msra.mxu0 0
    %339 = vmatprep.subr.bf16.mxu0 0
    %340 = vmatpush1.bf16.msra.mxu0 0
    %341 = vmatprep.subr.bf16.mxu0 0
    %342 = vmatpush1.bf16.msra.mxu0 0
    %343 = vmatprep.subr.bf16.mxu0 0
    %344 = vmatpush1.bf16.msra.mxu0 0
    %345 = vmatprep.subr.bf16.mxu0 0
    %346 = vmatpush1.bf16.msra.mxu0 0
    %347 = vmatprep.mubr.bf16.mxu0 0
    %348 = vmatmul.mubr.bf16.gmra.mrb[0].mxu0 %v309
    %v349 = vpop.f32.mrb[0].mxu0
    %v350 = vadd.f32 0.0, %v349
    %v351 = vpop.f32.mrb[0].mxu0
    %v352 = vpop.f32.mrb[0].mxu0
    %v353 = vpop.f32.mrb[0].mxu0
    %354 = vdwg.mxu0
    %355 = vrot.lane.b32.xlu0 %v157, 96
    %v356 = vpop.permute.xlu0 %355
    %v358 = vsel %vm275, %v305, 0
    %v361 = vsel %vm311, %v356, 0
    %363 = vmatprep.subr.bf16.mxu0 0
    %364 = vmatpush1.bf16.msra.mxu0 %v361
    %365 = vmatprep.subr.bf16.mxu0 0
    %366 = vmatpush1.bf16.msra.mxu0 0
    %367 = vmatprep.subr.bf16.mxu0 0
    %368 = vmatpush1.bf16.msra.mxu0 0
    %369 = vmatprep.subr.bf16.mxu0 0
    %370 = vmatpush1.bf16.msra.mxu0 0
    %371 = vmatprep.subr.bf16.mxu0 0
    %372 = vmatpush1.bf16.msra.mxu0 0
    %373 = vmatprep.subr.bf16.mxu0 0
    %374 = vmatpush1.bf16.msra.mxu0 0
    %375 = vmatprep.subr.bf16.mxu0 0
    %376 = vmatpush1.bf16.msra.mxu0 0
    %377 = vmatprep.subr.bf16.mxu0 0
    %378 = vmatpush1.bf16.msra.mxu0 0
    %379 = vmatprep.subr.bf16.mxu0 0
    %380 = vmatpush1.bf16.msra.mxu0 0
    %381 = vmatprep.subr.bf16.mxu0 0
    %382 = vmatpush1.bf16.msra.mxu0 0
    %383 = vmatprep.subr.bf16.mxu0 0
    %384 = vmatpush1.bf16.msra.mxu0 0
    %385 = vmatprep.subr.bf16.mxu0 0
    %386 = vmatpush1.bf16.msra.mxu0 0
    %387 = vmatprep.subr.bf16.mxu0 0
    %388 = vmatpush1.bf16.msra.mxu0 0
    %389 = vmatprep.subr.bf16.mxu0 0
    %390 = vmatpush1.bf16.msra.mxu0 0
    %391 = vmatprep.subr.bf16.mxu0 0
    %392 = vmatpush1.bf16.msra.mxu0 0
    %393 = vmatprep.subr.bf16.mxu0 0
    %394 = vmatpush1.bf16.msra.mxu0 0
    %395 = vmatprep.mubr.bf16.mxu0 0
    %396 = vmatmul.mubr.bf16.gmra.mrb[0].mxu0 %v358
    %v397 = vpop.f32.mrb[0].mxu0
    %v398 = vadd.f32 0.0, %v397
    %v399 = vpop.f32.mrb[0].mxu0
    %v400 = vpop.f32.mrb[0].mxu0
    %v401 = vpop.f32.mrb[0].mxu0
    %402 = vdwg.mxu0
    %v403 = vadd.f32 %v294, %v350
    %v404 = vadd.f32 %v295, %v398
    %v405 = vrcp.pop %v302
    %v406 = vrcp.pop %v303
    %v407 = vmul.f32 %v403, %v405
    %v408 = vmul.f32 %v404, %v406
    %409 = vst.msk [vmem:[#allocation2] sm:$0xff] %vm161, %v407
    %410 = vst.msk [vmem:[#allocation2 + $0x8] sm:$0xff] %vm161, %v408
    %411 = vrot.lane.b32.xlu0 %v156, 80
    %v412 = vpop.permute.xlu0 %411
    %413 = vrot.lane.b32.xlu0 %v156, 64
    %v414 = vpop.permute.xlu0 %413
    %v416 = vsel %vm161, %v412, 0
    %v419 = vsel %vm161, %v414, 0
    %421 = vmatprep.subr.bf16.mxu0 0
    %422 = vmatpush1.bf16.xpose.msra.mxu0 %v419
    %423 = vmatprep.subr.bf16.mxu0 0
    %424 = vmatpush1.bf16.xpose.msra.mxu0 0
    %425 = vmatprep.subr.bf16.mxu0 0
    %426 = vmatpush1.bf16.xpose.msra.mxu0 0
    %427 = vmatprep.subr.bf16.mxu0 0
    %428 = vmatpush1.bf16.xpose.msra.mxu0 0
    %429 = vmatprep.subr.bf16.mxu0 0
    %430 = vmatpush1.bf16.xpose.msra.mxu0 0
    %431 = vmatprep.subr.bf16.mxu0 0
    %432 = vmatpush1.bf16.xpose.msra.mxu0 0
    %433 = vmatprep.subr.bf16.mxu0 0
    %434 = vmatpush1.bf16.xpose.msra.mxu0 0
    %435 = vmatprep.subr.bf16.mxu0 0
    %436 = vmatpush1.bf16.xpose.msra.mxu0 0
    %437 = vmatprep.subr.bf16.mxu0 0
    %438 = vmatpush1.bf16.xpose.msra.mxu0 0
    %439 = vmatprep.subr.bf16.mxu0 0
    %440 = vmatpush1.bf16.xpose.msra.mxu0 0
    %441 = vmatprep.subr.bf16.mxu0 0
    %442 = vmatpush1.bf16.xpose.msra.mxu0 0
    %443 = vmatprep.subr.bf16.mxu0 0
    %444 = vmatpush1.bf16.xpose.msra.mxu0 0
    %445 = vmatprep.subr.bf16.mxu0 0
    %446 = vmatpush1.bf16.xpose.msra.mxu0 0
    %447 = vmatprep.subr.bf16.mxu0 0
    %448 = vmatpush1.bf16.xpose.msra.mxu0 0
    %449 = vmatprep.subr.bf16.mxu0 0
    %450 = vmatpush1.bf16.xpose.msra.mxu0 0
    %451 = vmatprep.subr.bf16.mxu0 0
    %452 = vmatpush1.bf16.xpose.msra.mxu0 0
    %453 = vmatprep.mubr.bf16.mxu0 0
    %454 = vmatmul.mubr.bf16.gmra.mrb[0].mxu0 %v416
    %v455 = vpop.f32.mrb[0].mxu0
    %v456 = vadd.f32 0.0, %v455
    %v457 = vpop.f32.mrb[0].mxu0
    %v458 = vpop.f32.mrb[0].mxu0
    %v459 = vpop.f32.mrb[0].mxu0
    %460 = vdwg.mxu0
    %461 = vrot.lane.b32.xlu0 %v157, 80
    %v462 = vpop.permute.xlu0 %461
    %463 = vrot.lane.b32.xlu0 %v157, 64
    %v464 = vpop.permute.xlu0 %463
    %v466 = vsel %vm161, %v462, 0
    %v469 = vsel %vm161, %v464, 0
    %471 = vmatprep.subr.bf16.mxu0 0
    %472 = vmatpush1.bf16.xpose.msra.mxu0 %v469
    %473 = vmatprep.subr.bf16.mxu0 0
    %474 = vmatpush1.bf16.xpose.msra.mxu0 0
    %475 = vmatprep.subr.bf16.mxu0 0
    %476 = vmatpush1.bf16.xpose.msra.mxu0 0
    %477 = vmatprep.subr.bf16.mxu0 0
    %478 = vmatpush1.bf16.xpose.msra.mxu0 0
    %479 = vmatprep.subr.bf16.mxu0 0
    %480 = vmatpush1.bf16.xpose.msra.mxu0 0
    %481 = vmatprep.subr.bf16.mxu0 0
    %482 = vmatpush1.bf16.xpose.msra.mxu0 0
    %483 = vmatprep.subr.bf16.mxu0 0
    %484 = vmatpush1.bf16.xpose.msra.mxu0 0
    %485 = vmatprep.subr.bf16.mxu0 0
    %486 = vmatpush1.bf16.xpose.msra.mxu0 0
    %487 = vmatprep.subr.bf16.mxu0 0
    %488 = vmatpush1.bf16.xpose.msra.mxu0 0
    %489 = vmatprep.subr.bf16.mxu0 0
    %490 = vmatpush1.bf16.xpose.msra.mxu0 0
    %491 = vmatprep.subr.bf16.mxu0 0
    %492 = vmatpush1.bf16.xpose.msra.mxu0 0
    %493 = vmatprep.subr.bf16.mxu0 0
    %494 = vmatpush1.bf16.xpose.msra.mxu0 0
    %495 = vmatprep.subr.bf16.mxu0 0
    %496 = vmatpush1.bf16.xpose.msra.mxu0 0
    %497 = vmatprep.subr.bf16.mxu0 0
    %498 = vmatpush1.bf16.xpose.msra.mxu0 0
    %499 = vmatprep.subr.bf16.mxu0 0
    %500 = vmatpush1.bf16.xpose.msra.mxu0 0
    %501 = vmatprep.subr.bf16.mxu0 0
    %502 = vmatpush1.bf16.xpose.msra.mxu0 0
    %503 = vmatprep.mubr.bf16.mxu0 0
    %504 = vmatmul.mubr.bf16.gmra.mrb[0].mxu0 %v466
    %v505 = vpop.f32.mrb[0].mxu0
    %v506 = vadd.f32 0.0, %v505
    %v507 = vpop.f32.mrb[0].mxu0
    %v508 = vpop.f32.mrb[0].mxu0
    %v509 = vpop.f32.mrb[0].mxu0
    %510 = vdwg.mxu0
    %v511 = vmul.f32 %v456, 0.25
    %v512 = vmul.f32 %v506, 0.25
    %v513 = vadd.f32 %v511, %v155
    %v514 = vadd.f32 %v512, %v155
    %v515 = vadd.f32 %v513, %v266
    %v516 = vadd.f32 %v514, %v270
    %v517 = vsel %vm275, %v515, -inf
    %518 = vmax.xlane.f32.xlu0 %v517
    %v519 = vpop.xlane.xlu0 %518
    %v520 = vsel %vm275, %v516, -inf
    %521 = vmax.xlane.f32.xlu0 %v520
    %v522 = vpop.xlane.xlu0 %521
    %v523 = vsub.f32 -inf, %v519
    %v524 = vsub.f32 -inf, %v522
    %v525 = vmul.f32 %v523, 1.442695
    %v526 = vpow.pop %v525
    %v527 = vmul.f32 %v524, 1.442695
    %v528 = vpow.pop %v527
    %v529 = vsub.f32 %v515, %v519
    %v530 = vsub.f32 %v516, %v522
    %v531 = vmul.f32 %v529, 1.442695
    %v532 = vpow.pop %v531
    %v533 = vmul.f32 %v530, 1.442695
    %v534 = vpow.pop %v533
    %v535 = vmul.f32 %v526, 0.0
    %v536 = vmul.f32 %v528, 0.0
    %v537 = vsel %vm275, %v532, 0.0
    %538 = vadd.xlane.f32.xlu0 %v537
    %v539 = vpop.xlane.xlu0 %538
    %v540 = vsel %vm275, %v534, 0.0
    %541 = vadd.xlane.f32.xlu0 %v540
    %v542 = vpop.xlane.xlu0 %541
    %v543 = vadd.f32 %v535, %v539
    %v544 = vadd.f32 %v536, %v542
    %v545 = vpack.c.bf16 %v532, %v532
    %v546 = vpack.c.bf16 %v534, %v534
    %547 = vrot.lane.b32.xlu0 %v156, 48
    %v548 = vpop.permute.xlu0 %547
    %v550 = vsel %vm275, %v545, 0
    %v553 = vsel %vm311, %v548, 0
    %555 = vmatprep.subr.bf16.mxu0 0
    %556 = vmatpush1.bf16.msra.mxu0 %v553
    %557 = vmatprep.subr.bf16.mxu0 0
    %558 = vmatpush1.bf16.msra.mxu0 0
    %559 = vmatprep.subr.bf16.mxu0 0
    %560 = vmatpush1.bf16.msra.mxu0 0
    %561 = vmatprep.subr.bf16.mxu0 0
    %562 = vmatpush1.bf16.msra.mxu0 0
    %563 = vmatprep.subr.bf16.mxu0 0
    %564 = vmatpush1.bf16.msra.mxu0 0
    %565 = vmatprep.subr.bf16.mxu0 0
    %566 = vmatpush1.bf16.msra.mxu0 0
    %567 = vmatprep.subr.bf16.mxu0 0
    %568 = vmatpush1.bf16.msra.mxu0 0
    %569 = vmatprep.subr.bf16.mxu0 0
    %570 = vmatpush1.bf16.msra.mxu0 0
    %571 = vmatprep.subr.bf16.mxu0 0
    %572 = vmatpush1.bf16.msra.mxu0 0
    %573 = vmatprep.subr.bf16.mxu0 0
    %574 = vmatpush1.bf16.msra.mxu0 0
    %575 = vmatprep.subr.bf16.mxu0 0
    %576 = vmatpush1.bf16.msra.mxu0 0
    %577 = vmatprep.subr.bf16.mxu0 0
    %578 = vmatpush1.bf16.msra.mxu0 0
    %579 = vmatprep.subr.bf16.mxu0 0
    %580 = vmatpush1.bf16.msra.mxu0 0
    %581 = vmatprep.subr.bf16.mxu0 0
    %582 = vmatpush1.bf16.msra.mxu0 0
    %583 = vmatprep.subr.bf16.mxu0 0
    %584 = vmatpush1.bf16.msra.mxu0 0
    %585 = vmatprep.subr.bf16.mxu0 0
    %586 = vmatpush1.bf16.msra.mxu0 0
    %587 = vmatprep.mubr.bf16.mxu0 0
    %588 = vmatmul.mubr.bf16.gmra.mrb[0].mxu0 %v550
    %v589 = vpop.f32.mrb[0].mxu0
    %v590 = vadd.f32 0.0, %v589
    %v591 = vpop.f32.mrb[0].mxu0
    %v592 = vpop.f32.mrb[0].mxu0
    %v593 = vpop.f32.mrb[0].mxu0
    %594 = vdwg.mxu0
    %595 = vrot.lane.b32.xlu0 %v157, 48
    %v596 = vpop.permute.xlu0 %595
    %v598 = vsel %vm275, %v546, 0
    %v601 = vsel %vm311, %v596, 0
    %603 = vmatprep.subr.bf16.mxu0 0
    %604 = vmatpush1.bf16.msra.mxu0 %v601
    %605 = vmatprep.subr.bf16.mxu0 0
    %606 = vmatpush1.bf16.msra.mxu0 0
    %607 = vmatprep.subr.bf16.mxu0 0
    %608 = vmatpush1.bf16.msra.mxu0 0
    %609 = vmatprep.subr.bf16.mxu0 0
    %610 = vmatpush1.bf16.msra.mxu0 0
    %611 = vmatprep.subr.bf16.mxu0 0
    %612 = vmatpush1.bf16.msra.mxu0 0
    %613 = vmatprep.subr.bf16.mxu0 0
    %614 = vmatpush1.bf16.msra.mxu0 0
    %615 = vmatprep.subr.bf16.mxu0 0
    %616 = vmatpush1.bf16.msra.mxu0 0
    %617 = vmatprep.subr.bf16.mxu0 0
    %618 = vmatpush1.bf16.msra.mxu0 0
    %619 = vmatprep.subr.bf16.mxu0 0
    %620 = vmatpush1.bf16.msra.mxu0 0
    %621 = vmatprep.subr.bf16.mxu0 0
    %622 = vmatpush1.bf16.msra.mxu0 0
    %623 = vmatprep.subr.bf16.mxu0 0
    %624 = vmatpush1.bf16.msra.mxu0 0
    %625 = vmatprep.subr.bf16.mxu0 0
    %626 = vmatpush1.bf16.msra.mxu0 0
    %627 = vmatprep.subr.bf16.mxu0 0
    %628 = vmatpush1.bf16.msra.mxu0 0
    %629 = vmatprep.subr.bf16.mxu0 0
    %630 = vmatpush1.bf16.msra.mxu0 0
    %631 = vmatprep.subr.bf16.mxu0 0
    %632 = vmatpush1.bf16.msra.mxu0 0
    %633 = vmatprep.subr.bf16.mxu0 0
    %634 = vmatpush1.bf16.msra.mxu0 0
    %635 = vmatprep.mubr.bf16.mxu0 0
    %636 = vmatmul.mubr.bf16.gmra.mrb[0].mxu0 %v598
    %v637 = vpop.f32.mrb[0].mxu0
    %v638 = vadd.f32 0.0, %v637
    %v639 = vpop.f32.mrb[0].mxu0
    %v640 = vpop.f32.mrb[0].mxu0
    %v641 = vpop.f32.mrb[0].mxu0
    %642 = vdwg.mxu0
    %v643 = vadd.f32 %v535, %v590
    %v644 = vadd.f32 %v536, %v638
    %v645 = vrcp.pop %v543
    %v646 = vrcp.pop %v544
    %v647 = vmul.f32 %v643, %v645
    %v648 = vmul.f32 %v644, %v646
    %651 = vrot.lane.b32.xlu0 %v647, 16
    %v652 = vpop.permute.xlu0 %651
    %653 = vrot.lane.b32.xlu0 %v648, 16
    %v654 = vpop.permute.xlu0 %653
    %vm657 = vcmask 261248
    %658 = vst.msk [vmem:[#allocation2] sm:$0xff] %vm657, %v652
    %659 = vst.msk [vmem:[#allocation2 + $0x8] sm:$0xff] %vm657, %v654
    %v660 = vld [vmem:[#allocation2] sm:$0xff]
    %v661 = vld [vmem:[#allocation2 + $0x8] sm:$0xff]
    %v662 = vpack.c.bf16 %v661, %v660
    %v663 = vld [vmem:[%s4] sm:$0xf]
    %v664 = vld [vmem:[%s4 + $0x4] sm:$0xf]
    %v665 = vld [vmem:[%s4 + $0x8] sm:$0xf]
    %v666 = vld [vmem:[%s4 + $0xc] sm:$0xf]
    %v671 = vunpack.c.l.b16 %v663
    %v672 = vunpack.c.l.b16 %v664
    %v673 = vunpack.c.l.b16 %v665
    %v674 = vunpack.c.l.b16 %v666
    %v675 = vpack.c.b16 %v672, %v671
    %v676 = vpack.c.b16 %v674, %v673
    %v680 = vsel %vm40, %v662, 0
    %682 = vmatprep.subr.bf16.mxu0 0
    %683 = vmatpush1.bf16.msra.mxu0 %v675
    %684 = vmatprep.subr.bf16.mxu0 0
    %685 = vmatpush1.bf16.msra.mxu0 %v676
    %686 = vmatprep.subr.bf16.mxu0 0
    %687 = vmatpush1.bf16.msra.mxu0 0
    %688 = vmatprep.subr.bf16.mxu0 0
    %689 = vmatpush1.bf16.msra.mxu0 0
    %690 = vmatprep.subr.bf16.mxu0 0
    %691 = vmatpush1.bf16.msra.mxu0 0
    %692 = vmatprep.subr.bf16.mxu0 0
    %693 = vmatpush1.bf16.msra.mxu0 0
    %694 = vmatprep.subr.bf16.mxu0 0
    %695 = vmatpush1.bf16.msra.mxu0 0
    %696 = vmatprep.subr.bf16.mxu0 0
    %697 = vmatpush1.bf16.msra.mxu0 0
    %698 = vmatprep.subr.bf16.mxu0 0
    %699 = vmatpush1.bf16.msra.mxu0 0
    %700 = vmatprep.subr.bf16.mxu0 0
    %701 = vmatpush1.bf16.msra.mxu0 0
    %702 = vmatprep.subr.bf16.mxu0 0
    %703 = vmatpush1.bf16.msra.mxu0 0
    %704 = vmatprep.subr.bf16.mxu0 0
    %705 = vmatpush1.bf16.msra.mxu0 0
    %706 = vmatprep.subr.bf16.mxu0 0
    %707 = vmatpush1.bf16.msra.mxu0 0
    %708 = vmatprep.subr.bf16.mxu0 0
    %709 = vmatpush1.bf16.msra.mxu0 0
    %710 = vmatprep.subr.bf16.mxu0 0
    %711 = vmatpush1.bf16.msra.mxu0 0
    %712 = vmatprep.subr.bf16.mxu0 0
    %713 = vmatpush1.bf16.msra.mxu0 0
    %714 = vmatprep.mubr.bf16.mxu0 0
    %715 = vmatmul.mubr.bf16.gmra.mrb[0].mxu0 %v680
    %v716 = vpop.f32.mrb[0].mxu0
    %v717 = vadd.f32 0.0, %v716
    %v718 = vpop.f32.mrb[0].mxu0
    %v719 = vpop.f32.mrb[0].mxu0
    %v720 = vadd.f32 0.0, %v719
    %v721 = vpop.f32.mrb[0].mxu0
    %722 = vdwg.mxu0
    %v723 = vadd.f32 %v38, %v717
    %v724 = vadd.f32 %v39, %v720
    %v725 = vlaneseq
    %v726 = vshrl.u32 %v725, 7
    %v727 = vsub.s32 2, %v726
    %v728 = vrot.slane %v34, %v727
    %v729 = vadd.f32 %v723, %v728
    %v730 = vadd.f32 %v724, %v728
    %v731 = vsel %vm40, %v729, 0.0
    %732 = vadd.xlane.f32.xlu0 %v731
    %v733 = vpop.xlane.xlu0 %732
    %v734 = vsel %vm40, %v730, 0.0
    %735 = vadd.xlane.f32.xlu0 %v734
    %v736 = vpop.xlane.xlu0 %735
    %v737 = vmul.f32 %v733, %v47
    %v738 = vmul.f32 %v736, %v47
    %v739 = vsub.f32 %v729, %v737
    %v740 = vsub.f32 %v730, %v738
    %v741 = vmul.f32 %v739, %v739
    %v742 = vmul.f32 %v740, %v740
    %v743 = vsel %vm40, %v741, 0.0
    %744 = vadd.xlane.f32.xlu0 %v743
    %v745 = vpop.xlane.xlu0 %744
    %v746 = vsel %vm40, %v742, 0.0
    %747 = vadd.xlane.f32.xlu0 %v746
    %v748 = vpop.xlane.xlu0 %747
    %v749 = vmul.f32 %v745, %v47
    %v750 = vmul.f32 %v748, %v47
    %v751 = vadd.f32 %v749, 1e-05
    %v752 = vadd.f32 %v750, 1e-05
    %v753 = vrsqrt.pop %v751
    %v754 = vrsqrt.pop %v752
    %v755 = vmul.f32 %v739, %v753
    %v756 = vmul.f32 %v740, %v754
    %v757 = vlaneseq
    %v758 = vshrl.u32 %v757, 7
    %v759 = vsub.s32 3, %v758
    %v760 = vrot.slane %v34, %v759
    %v761 = vmul.f32 %v755, %v760
    %v762 = vmul.f32 %v756, %v760
    %v763 = vlaneseq
    %v764 = vshrl.u32 %v763, 7
    %v765 = vsub.s32 4, %v764
    %v766 = vrot.slane %v34, %v765
    %v767 = vadd.f32 %v761, %v766
    %v768 = vadd.f32 %v762, %v766
    %v769 = vpack.c.bf16 %v768, %v767
    %v770 = vld [vmem:[%s5] sm:$0xf]
    %v771 = vld [vmem:[%s5 + $0x4] sm:$0xf]
    %v772 = vld [vmem:[%s5 + $0x8] sm:$0xf]
    %v773 = vld [vmem:[%s5 + $0xc] sm:$0xf]
    %v774 = vld [vmem:[%s6] sm:$0x1]
    %v776 = vlaneseq
    %v777 = vshrl.u32 %v776, 7
    %v778 = vsub.s32 0, %v777
    %v779 = vrot.slane %v774, %v778
    %v785 = vunpack.c.l.b16 %v770
    %v786 = vunpack.c.l.b16 %v771
    %v787 = vunpack.c.l.b16 %v772
    %v788 = vunpack.c.l.b16 %v773
    %v789 = vpack.c.b16 %v786, %v785
    %v790 = vpack.c.b16 %v788, %v787
    %v794 = vsel %vm40, %v769, 0
    %796 = vmatprep.subr.bf16.mxu0 0
    %797 = vmatpush1.bf16.msra.mxu0 %v789
    %798 = vmatprep.subr.bf16.mxu0 0
    %799 = vmatpush1.bf16.msra.mxu0 %v790
    %800 = vmatprep.subr.bf16.mxu0 0
    %801 = vmatpush1.bf16.msra.mxu0 0
    %802 = vmatprep.subr.bf16.mxu0 0
    %803 = vmatpush1.bf16.msra.mxu0 0
    %804 = vmatprep.subr.bf16.mxu0 0
    %805 = vmatpush1.bf16.msra.mxu0 0
    %806 = vmatprep.subr.bf16.mxu0 0
    %807 = vmatpush1.bf16.msra.mxu0 0
    %808 = vmatprep.subr.bf16.mxu0 0
    %809 = vmatpush1.bf16.msra.mxu0 0
    %810 = vmatprep.subr.bf16.mxu0 0
    %811 = vmatpush1.bf16.msra.mxu0 0
    %812 = vmatprep.subr.bf16.mxu0 0
    %813 = vmatpush1.bf16.msra.mxu0 0
    %814 = vmatprep.subr.bf16.mxu0 0
    %815 = vmatpush1.bf16.msra.mxu0 0
    %816 = vmatprep.subr.bf16.mxu0 0
    %817 = vmatpush1.bf16.msra.mxu0 0
    %818 = vmatprep.subr.bf16.mxu0 0
    %819 = vmatpush1.bf16.msra.mxu0 0
    %820 = vmatprep.subr.bf16.mxu0 0
    %821 = vmatpush1.bf16.msra.mxu0 0
    %822 = vmatprep.subr.bf16.mxu0 0
    %823 = vmatpush1.bf16.msra.mxu0 0
    %824 = vmatprep.subr.bf16.mxu0 0
    %825 = vmatpush1.bf16.msra.mxu0 0
    %826 = vmatprep.subr.bf16.mxu0 0
    %827 = vmatpush1.bf16.msra.mxu0 0
    %828 = vmatprep.mubr.bf16.mxu0 0
    %829 = vmatmul.mubr.bf16.gmra.mrb[0].mxu0 %v794
    %v830 = vpop.f32.mrb[0].mxu0
    %v831 = vadd.f32 %v779, %v830
    %v832 = vpop.f32.mrb[0].mxu0
    %v833 = vpop.f32.mrb[0].mxu0
    %v834 = vadd.f32 %v779, %v833
    %v835 = vpop.f32.mrb[0].mxu0
    %836 = vdwg.mxu0
    %v837 = vmul.f32 %v831, 0.5
    %v838 = vmul.f32 %v834, 0.5
    %v839 = vmul.f32 %v831, 0.044715
    %v840 = vmul.f32 %v834, 0.044715
    %v841 = vmul.f32 %v839, %v831
    %v842 = vmul.f32 %v840, %v834
    %v843 = vmul.f32 %v841, %v831
    %v844 = vmul.f32 %v842, %v834
    %v845 = vadd.f32 %v831, %v843
    %v846 = vadd.f32 %v834, %v844
    %v847 = vmul.f32 %v845, 0.7978846
    %v848 = vmul.f32 %v846, 0.7978846
    %v849 = vtanh.pop %v847
    %v850 = vtanh.pop %v848
    %v851 = vadd.f32 %v849, 1.0
    %v852 = vadd.f32 %v850, 1.0
    %v853 = vmul.f32 %v837, %v851
    %v854 = vmul.f32 %v838, %v852
    %v855 = vpack.c.bf16 %v854, %v853
    %v856 = vld [vmem:[%s7] sm:$0xf]
    %v857 = vld [vmem:[%s7 + $0x4] sm:$0xf]
    %v858 = vld [vmem:[%s7 + $0x8] sm:$0xf]
    %v859 = vld [vmem:[%s7 + $0xc] sm:$0xf]
    %v860 = vld [vmem:[%s7 + $0x10] sm:$0xf]
    %v861 = vld [vmem:[%s7 + $0x14] sm:$0xf]
    %v862 = vld [vmem:[%s7 + $0x18] sm:$0xf]
    %v863 = vld [vmem:[%s7 + $0x1c] sm:$0xf]
    %v864 = vld [vmem:[%s7 + $0x20] sm:$0xf]
    %v865 = vld [vmem:[%s7 + $0x24] sm:$0xf]
    %v866 = vld [vmem:[%s7 + $0x28] sm:$0xf]
    %v867 = vld [vmem:[%s7 + $0x2c] sm:$0xf]
    %v868 = vld [vmem:[%s7 + $0x30] sm:$0xf]
    %v869 = vld [vmem:[%s7 + $0x34] sm:$0xf]
    %v870 = vld [vmem:[%s7 + $0x38] sm:$0xf]
    %v871 = vld [vmem:[%s7 + $0x3c] sm:$0xf]
    %v888 = vunpack.c.l.b16 %v856
    %v889 = vunpack.c.l.b16 %v857
    %v890 = vunpack.c.l.b16 %v858
    %v891 = vunpack.c.l.b16 %v859
    %v892 = vunpack.c.l.b16 %v860
    %v893 = vunpack.c.l.b16 %v861
    %v894 = vunpack.c.l.b16 %v862
    %v895 = vunpack.c.l.b16 %v863
    %v896 = vunpack.c.l.b16 %v864
    %v897 = vunpack.c.l.b16 %v865
    %v898 = vunpack.c.l.b16 %v866
    %v899 = vunpack.c.l.b16 %v867
    %v900 = vunpack.c.l.b16 %v868
    %v901 = vunpack.c.l.b16 %v869
    %v902 = vunpack.c.l.b16 %v870
    %v903 = vunpack.c.l.b16 %v871
    %v904 = vpack.c.b16 %v889, %v888
    %v905 = vpack.c.b16 %v891, %v890
    %v906 = vpack.c.b16 %v893, %v892
    %v907 = vpack.c.b16 %v895, %v894
    %v908 = vpack.c.b16 %v897, %v896
    %v909 = vpack.c.b16 %v899, %v898
    %v910 = vpack.c.b16 %v901, %v900
    %v911 = vpack.c.b16 %v903, %v902
    %920 = vmatprep.subr.bf16.mxu0 0
    %921 = vmatpush1.bf16.msra.mxu0 %v904
    %922 = vmatprep.subr.bf16.mxu0 0
    %923 = vmatpush1.bf16.msra.mxu0 %v905
    %924 = vmatprep.subr.bf16.mxu0 0
    %925 = vmatpush1.bf16.msra.mxu0 %v906
    %926 = vmatprep.subr.bf16.mxu0 0
    %927 = vmatpush1.bf16.msra.mxu0 %v907
    %928 = vmatprep.subr.bf16.mxu0 0
    %929 = vmatpush1.bf16.msra.mxu0 %v908
    %930 = vmatprep.subr.bf16.mxu0 0
    %931 = vmatpush1.bf16.msra.mxu0 %v909
    %932 = vmatprep.subr.bf16.mxu0 0
    %933 = vmatpush1.bf16.msra.mxu0 %v910
    %934 = vmatprep.subr.bf16.mxu0 0
    %935 = vmatpush1.bf16.msra.mxu0 %v911
    %936 = vmatprep.subr.bf16.mxu0 0
    %937 = vmatpush1.bf16.msra.mxu0 0
    %938 = vmatprep.subr.bf16.mxu0 0
    %939 = vmatpush1.bf16.msra.mxu0 0
    %940 = vmatprep.subr.bf16.mxu0 0
    %941 = vmatpush1.bf16.msra.mxu0 0
    %942 = vmatprep.subr.bf16.mxu0 0
    %943 = vmatpush1.bf16.msra.mxu0 0
    %944 = vmatprep.subr.bf16.mxu0 0
    %945 = vmatpush1.bf16.msra.mxu0 0
    %946 = vmatprep.subr.bf16.mxu0 0
    %947 = vmatpush1.bf16.msra.mxu0 0
    %948 = vmatprep.subr.bf16.mxu0 0
    %949 = vmatpush1.bf16.msra.mxu0 0
    %950 = vmatprep.subr.bf16.mxu0 0
    %951 = vmatpush1.bf16.msra.mxu0 0
    %952 = vmatprep.mubr.bf16.mxu0 0
    %953 = vmatmul.mubr.bf16.gmra.mrb[0].mxu0 %v855
    %v954 = vpop.f32.mrb[0].mxu0
    %v955 = vadd.f32 0.0, %v954
    %v956 = vpop.f32.mrb[0].mxu0
    %v957 = vpop.f32.mrb[0].mxu0
    %v958 = vadd.f32 0.0, %v957
    %v959 = vpop.f32.mrb[0].mxu0
    %960 = vdwg.mxu0
    %v961 = vadd.f32 %v729, %v955
    %v962 = vadd.f32 %v730, %v958
    %v963 = vlaneseq
    %v964 = vshrl.u32 %v963, 7
    %v965 = vsub.s32 5, %v964
    %v966 = vrot.slane %v34, %v965
    %v967 = vadd.f32 %v961, %v966
    %v968 = vadd.f32 %v962, %v966
    %v969 = vsel %vm40, %v967, 0.0
    %970 = vadd.xlane.f32.xlu0 %v969
    %v971 = vpop.xlane.xlu0 %970
    %v972 = vsel %vm40, %v968, 0.0
    %973 = vadd.xlane.f32.xlu0 %v972
    %v974 = vpop.xlane.xlu0 %973
    %v975 = vmul.f32 %v971, %v47
    %v976 = vmul.f32 %v974, %v47
    %v977 = vsub.f32 %v967, %v975
    %v978 = vsub.f32 %v968, %v976
    %v979 = vmul.f32 %v977, %v977
    %v980 = vmul.f32 %v978, %v978
    %v981 = vsel %vm40, %v979, 0.0
    %982 = vadd.xlane.f32.xlu0 %v981
    %v983 = vpop.xlane.xlu0 %982
    %v984 = vsel %vm40, %v980, 0.0
    %985 = vadd.xlane.f32.xlu0 %v984
    %v986 = vpop.xlane.xlu0 %985
    %v987 = vmul.f32 %v983, %v47
    %v988 = vmul.f32 %v986, %v47
    %v989 = vadd.f32 %v987, 1e-05
    %v990 = vadd.f32 %v988, 1e-05
    %v991 = vrsqrt.pop %v989
    %v992 = vrsqrt.pop %v990
    %v993 = vmul.f32 %v977, %v991
    %v994 = vmul.f32 %v978, %v992
    %v995 = vlaneseq
    %v996 = vshrl.u32 %v995, 7
    %v997 = vsub.s32 6, %v996
    %v998 = vrot.slane %v34, %v997
    %v999 = vmul.f32 %v993, %v998
    %v1000 = vmul.f32 %v994, %v998
    %v1001 = vlaneseq
    %v1002 = vshrl.u32 %v1001, 7
    %v1003 = vsub.s32 7, %v1002
    %v1004 = vrot.slane %v34, %v1003
    %v1005 = vadd.f32 %v999, %v1004
    %v1006 = vadd.f32 %v1000, %v1004
    %v1007 = vlaneseq
    %v1008 = vshrl.u32 %v1007, 7
    %v1009 = vsub.s32 0, %v1008
    %v1010 = vrot.slane %v35, %v1009
    %v1011 = vmul.f32 %v1005, %v1010
    %v1012 = vmul.f32 %v1006, %v1010
    %v1013 = vsel %vm40, %v1011, 0.0
    %1014 = vadd.xlane.f32.xlu0 %v1013
    %v1015 = vpop.xlane.xlu0 %1014
    %v1016 = vsel %vm40, %v1012, 0.0
    %1017 = vadd.xlane.f32.xlu0 %v1016
    %v1018 = vpop.xlane.xlu0 %1017
    %v1021 = vlaneseq
    %v1022 = vshrl.u32 %v1021, 7
    %v1023 = vsub.s32 %v153, %v1022
    %v1024 = vrot.slane %v1015, %v1023
    %v1025 = vlaneseq
    %v1026 = vshrl.u32 %v1025, 7
    %v1027 = vsub.s32 %v153, %v1026
    %v1028 = vrot.slane %v1018, %v1027
    %vm1031 = vcmask 57344
    %1032 = vst.msk [vmem:[#allocation3] sm:$0x1] %vm1031, %v1024
    %1033 = vst.msk [vmem:[#allocation3 + $0x1] sm:$0x1] %vm1031, %v1028
    // Predicated region
    $region38: #{tpu_custom_call.1} parent=1 // pred_check
      _
    $region39: #{tpu_custom_call.1} parent=1 // pred_check_branch
      %1035 = sbr.rel (0) target = $region41
    $region40: #{tpu_custom_call.1} parent=1 // pred_region
      %s1037 = ssub.s32 32, 32
      %1038 = vsyncadd [#allocation4], %s1037
      %s1039 = sshll.u32 [#allocation3], 4
      %s1040 = int_to_ptr.vmem [resolvable:$true] %s1039
      %1045 = dma.vmem_to_hbm [thread:$0]  %s1040, 32, %s9, [#allocation4], 16, 16, 1
    $region41: #{tpu_custom_call.1} parent=1 // pred_fallthru
      _
    // Predicated region
    $region42: #{tpu_custom_call.1} parent=1 // pred_check
      _
    $region43: #{tpu_custom_call.1} parent=1 // pred_check_branch
      %1047 = sbr.rel (0) target = $region45
    $region44: #{tpu_custom_call.1} parent=1 // pred_region
      %1048 = dma.done [#allocation4], 32
    $region45: #{tpu_custom_call.1} parent=1 // pred_fallthru
      _
    %1049 = vsyncpa [#allocation4], 1

</llo_original>
